<compile_context>
chip_gen: v7x
topology: tpu7x:2x2x1
jax: 0.10.0
libtpu: 0.0.40
codegen_flags: <defaults>
</compile_context>

<pallas_src>
import functools
import math

import jax
import jax.numpy as jnp
from jax import lax
from jax.experimental import pallas as pl
from jax.experimental.pallas import tpu as pltpu

EPS = 1e-6
MASK_PENALTY = 1e9
# Contract on the last axes of both operands: q @ k^T without an explicit .T
TRANS_B_DIMS = (((1,), (1,)), ((), ()))


def _layernorm(x, a, b, eps=EPS):
    """Torch-reference LayerNorm: unbiased std (ddof=1), eps inside the sqrt."""
    d = x.shape[-1]
    mean = jnp.mean(x, axis=-1, keepdims=True)
    diff = x - mean
    var = jnp.sum(diff * diff, axis=-1, keepdims=True) * (1.0 / (d - 1))
    return a * (diff * lax.rsqrt(var + eps)) + b


def _mha(y, k_all, v_all, bias, wq, bq, wo, bo, *, num_heads, d_k):
    """Multi-head attention for one query tile.

    y:     (TQ, D) f32, already layer-normed query-side input
    k_all: (S, D)  bf16 pre-projected keys   (all heads, lane-concatenated)
    v_all: (S, D)  bf16 pre-projected values
    bias:  (TQ, S) or (1, S) f32 additive mask bias (0 keep / -1e9 masked)
    """
    tq = y.shape[0]
    d_model = num_heads * d_k
    scale = 1.0 / math.sqrt(d_k)

    q = jnp.dot(y.astype(jnp.bfloat16), wq,
                preferred_element_type=jnp.float32) + bq
    q = (q * scale).astype(jnp.bfloat16)

    attn = jnp.zeros((tq, d_model), jnp.float32)
    for h in range(num_heads):                       # static, fully unrolled
        lo = h * d_k
        qh = q[:, lo:lo + d_k]
        kh = k_all[:, lo:lo + d_k]
        vh = v_all[:, lo:lo + d_k]
        s = lax.dot_general(qh, kh, TRANS_B_DIMS,
                            preferred_element_type=jnp.float32)       # (TQ, S)
        s = s + bias                                  # hoisted additive mask
        m = jnp.max(s, axis=-1, keepdims=True)
        e = jnp.exp(s - m)
        p = e * pl.reciprocal(jnp.sum(e, axis=-1, keepdims=True), approx=True)
        ctx = jnp.dot(p.astype(jnp.bfloat16), vh,
                      preferred_element_type=jnp.float32)              # (TQ, dk)
        # accumulate this head's contribution through its slice of W_O
        # (avoids the lane-axis concat of per-head outputs).
        attn = attn + jnp.dot(ctx.astype(jnp.bfloat16), wo[lo:lo + d_k, :],
                              preferred_element_type=jnp.float32)
    return attn + bo


def _decoder_layer_kernel(x_full_ref, xq_ref, mem_ref, tgt_mask_ref, src_mask_ref,
                          ln1a_ref, ln1b_ref, ln2a_ref, ln2b_ref, ln3a_ref, ln3b_ref,
                          wq_ref, bq_ref, wkv_ref, bkv_ref, wo_ref, bo_ref,
                          w1_ref, b1_ref, w2_ref, b2_ref,
                          o_ref,
                          k_self_ref, v_self_ref, k_mem_ref, v_mem_ref,
                          *, num_heads, d_k):
    qi = pl.program_id(1)
    d_model = num_heads * d_k

    # K/V are shared by every query tile of a batch element: project them once
    # (at the first query tile) with a single fused (D, 2D) matmul per source
    # and keep them resident in bf16 VMEM scratch across the 'arbitrary' axis.
    @pl.when(qi == 0)
    def _project_kv():
        wkv = wkv_ref[...]
        bkv = bkv_ref[...]
        # self-attention K/V come from LN1(x) over the full target sequence
        y_full = _layernorm(x_full_ref[0], ln1a_ref[...], ln1b_ref[...])
        kv_s = jnp.dot(y_full.astype(jnp.bfloat16), wkv,
                       preferred_element_type=jnp.float32) + bkv
        k_self_ref[...] = kv_s[:, :d_model].astype(jnp.bfloat16)
        v_self_ref[...] = kv_s[:, d_model:].astype(jnp.bfloat16)
        # cross-attention K/V come straight from the encoder memory (no norm);
        # same projection weights: the reference forward uses self_attn twice.
        kv_m = jnp.dot(mem_ref[0].astype(jnp.bfloat16), wkv,
                       preferred_element_type=jnp.float32) + bkv
        k_mem_ref[...] = kv_m[:, :d_model].astype(jnp.bfloat16)
        v_mem_ref[...] = kv_m[:, d_model:].astype(jnp.bfloat16)

    x_tile = xq_ref[0]                                    # (TQ, D) f32

    # additive mask biases, computed once per tile (outside the head loops)
    tgt_bias = (tgt_mask_ref[0] - 1.0) * MASK_PENALTY     # (TQ, S_tgt)
    src_bias = (src_mask_ref[0] - 1.0) * MASK_PENALTY     # (1, S_src)

    wq = wq_ref[...]
    bq = bq_ref[...]
    wo = wo_ref[...]
    bo = bo_ref[...]

    # --- sublayer 0: pre-norm masked self-attention + residual ---------------
    y1 = _layernorm(x_tile, ln1a_ref[...], ln1b_ref[...])
    a1 = _mha(y1, k_self_ref[...], v_self_ref[...], tgt_bias,
              wq, bq, wo, bo, num_heads=num_heads, d_k=d_k)
    x1 = x_tile + a1

    # --- sublayer 1: pre-norm source attention over memory + residual --------
    y2 = _layernorm(x1, ln2a_ref[...], ln2b_ref[...])
    a2 = _mha(y2, k_mem_ref[...], v_mem_ref[...], src_bias,
              wq, bq, wo, bo, num_heads=num_heads, d_k=d_k)
    x2 = x1 + a2

    # --- sublayer 2: pre-norm position-wise FFN + residual --------------------
    y3 = _layernorm(x2, ln3a_ref[...], ln3b_ref[...])
    hid = jnp.maximum(
        jnp.dot(y3.astype(jnp.bfloat16), w1_ref[...],
                preferred_element_type=jnp.float32) + b1_ref[...], 0.0)
    ffn = jnp.dot(hid.astype(jnp.bfloat16), w2_ref[...],
                  preferred_element_type=jnp.float32) + b2_ref[...]

    o_ref[0] = (x2 + ffn).astype(o_ref.dtype)


def decoder_layer_forward(x, memory, src_mask, tgt_mask, params, num_heads,
                          tile_q=None):
    """DecoderLayer.forward as one fused Pallas call, grid = (batch, q-tiles)."""
    B, S_tgt, D = x.shape
    S_src = memory.shape[1]
    d_k = D // num_heads
    if tile_q is None:
        tile_q = min(S_tgt, 256)
    assert S_tgt % tile_q == 0, "tile_q must divide the target sequence length"
    n_q = S_tgt // tile_q

    w_names = ("ln1_a", "ln1_b", "ln2_a", "ln2_b", "ln3_a", "ln3_b",
               "wq", "bq", "wkv", "bkv", "wo", "bo", "w1", "b1", "w2", "b2")
    weights = [params[n] for n in w_names]
    # TODO(synk): weight blocks are constant across the grid; single-buffering
    # them (pipeline_mode) would halve their VMEM residency on v7x.
    w_specs = [pl.BlockSpec(w.shape, lambda b, q: (0, 0)) for w in weights]

    kernel = functools.partial(_decoder_layer_kernel,
                               num_heads=num_heads, d_k=d_k)
    return pl.pallas_call(
        kernel,
        out_shape=jax.ShapeDtypeStruct((B, S_tgt, D), x.dtype),
        grid=(B, n_q),
        in_specs=[
            pl.BlockSpec((1, S_tgt, D), lambda b, q: (b, 0, 0)),      # full x (K/V source)
            pl.BlockSpec((1, tile_q, D), lambda b, q: (b, q, 0)),     # query tile of x
            pl.BlockSpec((1, S_src, D), lambda b, q: (b, 0, 0)),      # encoder memory
            pl.BlockSpec((1, tile_q, S_tgt), lambda b, q: (b, q, 0)),  # tgt mask rows
            pl.BlockSpec((1, 1, S_src), lambda b, q: (b, 0, 0)),      # src mask
        ] + w_specs,
        out_specs=pl.BlockSpec((1, tile_q, D), lambda b, q: (b, q, 0)),
        scratch_shapes=[
            pltpu.VMEM((S_tgt, D), jnp.bfloat16),   # self-attn K (per batch elem)
            pltpu.VMEM((S_tgt, D), jnp.bfloat16),   # self-attn V
            pltpu.VMEM((S_src, D), jnp.bfloat16),   # cross-attn K (from memory)
            pltpu.VMEM((S_src, D), jnp.bfloat16),   # cross-attn V
        ],
        compiler_params=pltpu.CompilerParams(
            dimension_semantics=("parallel", "arbitrary"),
            vmem_limit_bytes=64 * 1024 * 1024),
    )(x, x, memory, tgt_mask, src_mask, *weights)


def init_params(key, d_model, d_ff):
    """Deterministic synthetic parameters.

    Matmul weights are stored in bf16 (MXU inputs); biases and LayerNorm
    parameters stay in f32.  K and V projections are fused host-side into a
    single (D, 2D) operand so the kernel does one wide MXU pass per source.
    """
    def nxt():
        nonlocal key
        key, sub = jax.random.split(key)
        return sub

    def lin(din, dout):
        w = (0.1 * jax.random.normal(nxt(), (din, dout), jnp.float32)).astype(jnp.bfloat16)
        b = jnp.zeros((1, dout), jnp.float32)
        return w, b

    wq, bq = lin(d_model, d_model)
    wk, bk = lin(d_model, d_model)
    wv, bv = lin(d_model, d_model)
    wo, bo = lin(d_model, d_model)
    w1, b1 = lin(d_model, d_ff)
    w2, b2 = lin(d_ff, d_model)
    ones = lambda: jnp.ones((1, d_model), jnp.float32)
    zeros = lambda: jnp.zeros((1, d_model), jnp.float32)
    return dict(
        ln1_a=ones(), ln1_b=zeros(),
        ln2_a=ones(), ln2_b=zeros(),
        ln3_a=ones(), ln3_b=zeros(),
        wq=wq, bq=bq,
        wkv=jnp.concatenate([wk, wv], axis=1),
        bkv=jnp.concatenate([bk, bv], axis=1),
        wo=wo, bo=bo,
        w1=w1, b1=b1, w2=w2, b2=b2,
    )


if __name__ == "__main__":
    B, S_TGT, S_SRC, D, H, D_FF, TQ = 2, 16, 24, 32, 4, 64, 8

    key = jax.random.PRNGKey(0)
    kx, km, kp = jax.random.split(key, 3)
    x = jax.random.normal(kx, (B, S_TGT, D), jnp.float32)
    memory = jax.random.normal(km, (B, S_SRC, D), jnp.float32)

    # tgt_mask: causal (subsequent-position) mask, shape (B, S_tgt, S_tgt)
    tgt_mask = jnp.broadcast_to(
        jnp.tril(jnp.ones((S_TGT, S_TGT), jnp.float32)), (B, S_TGT, S_TGT))
    # src_mask: padding mask, shape (B, 1, S_src); last two source positions of
    # batch element 1 are padding.
    src_mask = jnp.ones((B, 1, S_SRC), jnp.float32).at[1, 0, S_SRC - 2:].set(0.0)

    params = init_params(kp, D, D_FF)

    out = decoder_layer_forward(x, memory, src_mask, tgt_mask, params,
                                num_heads=H, tile_q=TQ)
    out = jax.block_until_ready(out)
    assert out.shape == (B, S_TGT, D) and out.dtype == jnp.float32
    assert bool(jnp.all(jnp.isfinite(out)))
    print("KERNEL_OK")
</pallas_src>

<mosaic_0001>
module attributes {stable_mosaic.version = 11 : i64} {
  func.func @_decoder_layer_kernel(%arg0: i32, %arg1: i32, %arg2: memref<1x16x32xf32, #tpu.memory_space<vmem>>, %arg3: memref<1x8x32xf32, #tpu.memory_space<vmem>>, %arg4: memref<1x24x32xf32, #tpu.memory_space<vmem>>, %arg5: memref<1x8x16xf32, #tpu.memory_space<vmem>>, %arg6: memref<1x1x24xf32, #tpu.memory_space<vmem>>, %arg7: memref<1x32xf32, #tpu.memory_space<vmem>>, %arg8: memref<1x32xf32, #tpu.memory_space<vmem>>, %arg9: memref<1x32xf32, #tpu.memory_space<vmem>>, %arg10: memref<1x32xf32, #tpu.memory_space<vmem>>, %arg11: memref<1x32xf32, #tpu.memory_space<vmem>>, %arg12: memref<1x32xf32, #tpu.memory_space<vmem>>, %arg13: memref<32x32xbf16, #tpu.memory_space<vmem>>, %arg14: memref<1x32xf32, #tpu.memory_space<vmem>>, %arg15: memref<32x64xbf16, #tpu.memory_space<vmem>>, %arg16: memref<1x64xf32, #tpu.memory_space<vmem>>, %arg17: memref<32x32xbf16, #tpu.memory_space<vmem>>, %arg18: memref<1x32xf32, #tpu.memory_space<vmem>>, %arg19: memref<32x64xbf16, #tpu.memory_space<vmem>>, %arg20: memref<1x64xf32, #tpu.memory_space<vmem>>, %arg21: memref<64x32xbf16, #tpu.memory_space<vmem>>, %arg22: memref<1x32xf32, #tpu.memory_space<vmem>>, %arg23: memref<1x8x32xf32, #tpu.memory_space<vmem>>, %arg24: memref<16x32xbf16, #tpu.memory_space<vmem>>, %arg25: memref<16x32xbf16, #tpu.memory_space<vmem>>, %arg26: memref<24x32xbf16, #tpu.memory_space<vmem>>, %arg27: memref<24x32xbf16, #tpu.memory_space<vmem>>) attributes {dimension_semantics = [#tpu.dimension_semantics<parallel>, #tpu.dimension_semantics<arbitrary>], iteration_bounds = array<i64: 2, 2>, scalar_prefetch = 0 : i64, scratch_operands = 4 : i64, tpu.core_type = #tpu.core_type<tc>, window_params = [{transform_indices = @transform_0, window_bounds = array<i64: 1, 16, 32>}, {transform_indices = @transform_1, window_bounds = array<i64: 1, 8, 32>}, {transform_indices = @transform_2, window_bounds = array<i64: 1, 24, 32>}, {transform_indices = @transform_3, window_bounds = array<i64: 1, 8, 16>}, {transform_indices = @transform_4, window_bounds = array<i64: 1, 1, 24>}, {pipeline_mode = #tpu.pipeline_mode<synchronous>, transform_indices = @transform_5, window_bounds = array<i64: 1, 32>}, {pipeline_mode = #tpu.pipeline_mode<synchronous>, transform_indices = @transform_6, window_bounds = array<i64: 1, 32>}, {pipeline_mode = #tpu.pipeline_mode<synchronous>, transform_indices = @transform_7, window_bounds = array<i64: 1, 32>}, {pipeline_mode = #tpu.pipeline_mode<synchronous>, transform_indices = @transform_8, window_bounds = array<i64: 1, 32>}, {pipeline_mode = #tpu.pipeline_mode<synchronous>, transform_indices = @transform_9, window_bounds = array<i64: 1, 32>}, {pipeline_mode = #tpu.pipeline_mode<synchronous>, transform_indices = @transform_10, window_bounds = array<i64: 1, 32>}, {pipeline_mode = #tpu.pipeline_mode<synchronous>, transform_indices = @transform_11, window_bounds = array<i64: 32, 32>}, {pipeline_mode = #tpu.pipeline_mode<synchronous>, transform_indices = @transform_12, window_bounds = array<i64: 1, 32>}, {pipeline_mode = #tpu.pipeline_mode<synchronous>, transform_indices = @transform_13, window_bounds = array<i64: 32, 64>}, {pipeline_mode = #tpu.pipeline_mode<synchronous>, transform_indices = @transform_14, window_bounds = array<i64: 1, 64>}, {pipeline_mode = #tpu.pipeline_mode<synchronous>, transform_indices = @transform_15, window_bounds = array<i64: 32, 32>}, {pipeline_mode = #tpu.pipeline_mode<synchronous>, transform_indices = @transform_16, window_bounds = array<i64: 1, 32>}, {pipeline_mode = #tpu.pipeline_mode<synchronous>, transform_indices = @transform_17, window_bounds = array<i64: 32, 64>}, {pipeline_mode = #tpu.pipeline_mode<synchronous>, transform_indices = @transform_18, window_bounds = array<i64: 1, 64>}, {pipeline_mode = #tpu.pipeline_mode<synchronous>, transform_indices = @transform_19, window_bounds = array<i64: 64, 32>}, {pipeline_mode = #tpu.pipeline_mode<synchronous>, transform_indices = @transform_20, window_bounds = array<i64: 1, 32>}, {transform_indices = @transform_21, window_bounds = array<i64: 1, 8, 32>}]} {
    %c0_i32 = arith.constant 0 : i32
    %0 = arith.cmpi eq, %arg1, %c0_i32 : i32
    %1 = arith.extui %0 : i1 to i32
    %c0_i32_0 = arith.constant 0 : i32
    %2 = arith.cmpi ne, %1, %c0_i32_0 : i32
    scf.if %2 {
      %c0_115 = arith.constant 0 : index
      %c0_116 = arith.constant 0 : index
      %303 = vector.load %arg15[%c0_115, %c0_116] : memref<32x64xbf16, #tpu.memory_space<vmem>>, vector<32x64xbf16>
      %c0_117 = arith.constant 0 : index
      %c0_118 = arith.constant 0 : index
      %304 = vector.load %arg16[%c0_117, %c0_118] : memref<1x64xf32, #tpu.memory_space<vmem>>, vector<1x64xf32>
      %c0_119 = arith.constant 0 : index
      %c0_120 = arith.constant 0 : index
      %c0_121 = arith.constant 0 : index
      %305 = vector.load %arg2[%c0_119, %c0_120, %c0_121] : memref<1x16x32xf32, #tpu.memory_space<vmem>>, vector<1x16x32xf32>
      %306 = vector.shape_cast %305 : vector<1x16x32xf32> to vector<16x32xf32>
      %c0_122 = arith.constant 0 : index
      %c0_123 = arith.constant 0 : index
      %307 = vector.load %arg7[%c0_122, %c0_123] : memref<1x32xf32, #tpu.memory_space<vmem>>, vector<1x32xf32>
      %c0_124 = arith.constant 0 : index
      %c0_125 = arith.constant 0 : index
      %308 = vector.load %arg8[%c0_124, %c0_125] : memref<1x32xf32, #tpu.memory_space<vmem>>, vector<1x32xf32>
      %cst_126 = arith.constant dense<0.000000e+00> : vector<16xf32>
      %309 = vector.multi_reduction <add>, %306, %cst_126 [1] : vector<16x32xf32> to vector<16xf32>
      %310 = vector.shape_cast %309 : vector<16xf32> to vector<16x1xf32>
      %cst_127 = arith.constant 3.200000e+01 : f32
      %311 = vector.broadcast %cst_127 : f32 to vector<16x1xf32>
      %312 = arith.divf %310, %311 : vector<16x1xf32>
      %313 = vector.broadcast %312 : vector<16x1xf32> to vector<16x32xf32>
      %314 = arith.subf %306, %313 : vector<16x32xf32>
      %315 = arith.mulf %314, %314 : vector<16x32xf32>
      %cst_128 = arith.constant dense<0.000000e+00> : vector<16xf32>
      %316 = vector.multi_reduction <add>, %315, %cst_128 [1] : vector<16x32xf32> to vector<16xf32>
      %317 = vector.shape_cast %316 : vector<16xf32> to vector<16x1xf32>
      %cst_129 = arith.constant 0.0322580636 : f32
      %318 = vector.broadcast %cst_129 : f32 to vector<16x1xf32>
      %319 = arith.mulf %317, %318 : vector<16x1xf32>
      %cst_130 = arith.constant 9.99999997E-7 : f32
      %320 = vector.broadcast %cst_130 : f32 to vector<16x1xf32>
      %321 = arith.addf %319, %320 : vector<16x1xf32>
      %322 = math.rsqrt %321 : vector<16x1xf32>
      %323 = vector.broadcast %322 : vector<16x1xf32> to vector<16x32xf32>
      %324 = arith.mulf %314, %323 : vector<16x32xf32>
      %325 = vector.broadcast %307 : vector<1x32xf32> to vector<16x32xf32>
      %326 = arith.mulf %325, %324 : vector<16x32xf32>
      %327 = vector.broadcast %308 : vector<1x32xf32> to vector<16x32xf32>
      %328 = arith.addf %326, %327 : vector<16x32xf32>
      %329 = arith.truncf %328 : vector<16x32xf32> to vector<16x32xbf16>
      %cst_131 = arith.constant dense<0.000000e+00> : vector<16x64xf32>
      %330 = tpu.matmul %329, %303, %cst_131 {dimension_numbers = #tpu.dot_dimension_numbers<[1], [0], [0], [1], [0, 0, 1, 1], [], []>} : vector<16x32xbf16>, vector<32x64xbf16>, vector<16x64xf32> -> vector<16x64xf32>
      %331 = vector.broadcast %304 : vector<1x64xf32> to vector<16x64xf32>
      %332 = arith.addf %330, %331 : vector<16x64xf32>
      %333 = vector.extract_strided_slice %332 {offsets = [0, 0], sizes = [16, 32], strides = [1, 1]} : vector<16x64xf32> to vector<16x32xf32>
      %334 = arith.truncf %333 : vector<16x32xf32> to vector<16x32xbf16>
      %c0_132 = arith.constant 0 : index
      %c0_133 = arith.constant 0 : index
      %335 = vector.load %arg24[%c0_132, %c0_133] : memref<16x32xbf16, #tpu.memory_space<vmem>>, vector<16x32xbf16>
      tpu.vector_store %arg24[%c0_132, %c0_133], %334 {strides = array<i32>} : memref<16x32xbf16, #tpu.memory_space<vmem>>, vector<16x32xbf16>,
      %336 = vector.extract_strided_slice %332 {offsets = [0, 32], sizes = [16, 32], strides = [1, 1]} : vector<16x64xf32> to vector<16x32xf32>
      %337 = arith.truncf %336 : vector<16x32xf32> to vector<16x32xbf16>
      %c0_134 = arith.constant 0 : index
      %c0_135 = arith.constant 0 : index
      %338 = vector.load %arg25[%c0_134, %c0_135] : memref<16x32xbf16, #tpu.memory_space<vmem>>, vector<16x32xbf16>
      tpu.vector_store %arg25[%c0_134, %c0_135], %337 {strides = array<i32>} : memref<16x32xbf16, #tpu.memory_space<vmem>>, vector<16x32xbf16>,
      %c0_136 = arith.constant 0 : index
      %c0_137 = arith.constant 0 : index
      %c0_138 = arith.constant 0 : index
      %339 = vector.load %arg4[%c0_136, %c0_137, %c0_138] : memref<1x24x32xf32, #tpu.memory_space<vmem>>, vector<1x24x32xf32>
      %340 = vector.shape_cast %339 : vector<1x24x32xf32> to vector<24x32xf32>
      %341 = arith.truncf %340 : vector<24x32xf32> to vector<24x32xbf16>
      %cst_139 = arith.constant dense<0.000000e+00> : vector<24x64xf32>
      %342 = tpu.matmul %341, %303, %cst_139 {dimension_numbers = #tpu.dot_dimension_numbers<[1], [0], [0], [1], [0, 0, 1, 1], [], []>} : vector<24x32xbf16>, vector<32x64xbf16>, vector<24x64xf32> -> vector<24x64xf32>
      %343 = vector.broadcast %304 : vector<1x64xf32> to vector<24x64xf32>
      %344 = arith.addf %342, %343 : vector<24x64xf32>
      %345 = vector.extract_strided_slice %344 {offsets = [0, 0], sizes = [24, 32], strides = [1, 1]} : vector<24x64xf32> to vector<24x32xf32>
      %346 = arith.truncf %345 : vector<24x32xf32> to vector<24x32xbf16>
      %c0_140 = arith.constant 0 : index
      %c0_141 = arith.constant 0 : index
      %347 = vector.load %arg26[%c0_140, %c0_141] : memref<24x32xbf16, #tpu.memory_space<vmem>>, vector<24x32xbf16>
      tpu.vector_store %arg26[%c0_140, %c0_141], %346 {strides = array<i32>} : memref<24x32xbf16, #tpu.memory_space<vmem>>, vector<24x32xbf16>,
      %348 = vector.extract_strided_slice %344 {offsets = [0, 32], sizes = [24, 32], strides = [1, 1]} : vector<24x64xf32> to vector<24x32xf32>
      %349 = arith.truncf %348 : vector<24x32xf32> to vector<24x32xbf16>
      %c0_142 = arith.constant 0 : index
      %c0_143 = arith.constant 0 : index
      %350 = vector.load %arg27[%c0_142, %c0_143] : memref<24x32xbf16, #tpu.memory_space<vmem>>, vector<24x32xbf16>
      tpu.vector_store %arg27[%c0_142, %c0_143], %349 {strides = array<i32>} : memref<24x32xbf16, #tpu.memory_space<vmem>>, vector<24x32xbf16>,
    } else {
    }
    %c0 = arith.constant 0 : index
    %c0_1 = arith.constant 0 : index
    %c0_2 = arith.constant 0 : index
    %3 = vector.load %arg3[%c0, %c0_1, %c0_2] : memref<1x8x32xf32, #tpu.memory_space<vmem>>, vector<1x8x32xf32>
    %4 = vector.shape_cast %3 : vector<1x8x32xf32> to vector<8x32xf32>
    %c0_3 = arith.constant 0 : index
    %c0_4 = arith.constant 0 : index
    %c0_5 = arith.constant 0 : index
    %5 = vector.load %arg5[%c0_3, %c0_4, %c0_5] : memref<1x8x16xf32, #tpu.memory_space<vmem>>, vector<1x8x16xf32>
    %6 = vector.shape_cast %5 : vector<1x8x16xf32> to vector<8x16xf32>
    %cst = arith.constant 1.000000e+00 : f32
    %7 = vector.broadcast %cst : f32 to vector<8x16xf32>
    %8 = arith.subf %6, %7 : vector<8x16xf32>
    %cst_6 = arith.constant 1.000000e+09 : f32
    %9 = vector.broadcast %cst_6 : f32 to vector<8x16xf32>
    %10 = arith.mulf %8, %9 : vector<8x16xf32>
    %c0_7 = arith.constant 0 : index
    %c0_8 = arith.constant 0 : index
    %c0_9 = arith.constant 0 : index
    %11 = vector.load %arg6[%c0_7, %c0_8, %c0_9] : memref<1x1x24xf32, #tpu.memory_space<vmem>>, vector<1x1x24xf32>
    %12 = vector.shape_cast %11 : vector<1x1x24xf32> to vector<1x24xf32>
    %cst_10 = arith.constant 1.000000e+00 : f32
    %13 = vector.broadcast %cst_10 : f32 to vector<1x24xf32>
    %14 = arith.subf %12, %13 : vector<1x24xf32>
    %cst_11 = arith.constant 1.000000e+09 : f32
    %15 = vector.broadcast %cst_11 : f32 to vector<1x24xf32>
    %16 = arith.mulf %14, %15 : vector<1x24xf32>
    %c0_12 = arith.constant 0 : index
    %c0_13 = arith.constant 0 : index
    %17 = vector.load %arg13[%c0_12, %c0_13] : memref<32x32xbf16, #tpu.memory_space<vmem>>, vector<32x32xbf16>
    %c0_14 = arith.constant 0 : index
    %c0_15 = arith.constant 0 : index
    %18 = vector.load %arg14[%c0_14, %c0_15] : memref<1x32xf32, #tpu.memory_space<vmem>>, vector<1x32xf32>
    %c0_16 = arith.constant 0 : index
    %c0_17 = arith.constant 0 : index
    %19 = vector.load %arg17[%c0_16, %c0_17] : memref<32x32xbf16, #tpu.memory_space<vmem>>, vector<32x32xbf16>
    %c0_18 = arith.constant 0 : index
    %c0_19 = arith.constant 0 : index
    %20 = vector.load %arg18[%c0_18, %c0_19] : memref<1x32xf32, #tpu.memory_space<vmem>>, vector<1x32xf32>
    %c0_20 = arith.constant 0 : index
    %c0_21 = arith.constant 0 : index
    %21 = vector.load %arg7[%c0_20, %c0_21] : memref<1x32xf32, #tpu.memory_space<vmem>>, vector<1x32xf32>
    %c0_22 = arith.constant 0 : index
    %c0_23 = arith.constant 0 : index
    %22 = vector.load %arg8[%c0_22, %c0_23] : memref<1x32xf32, #tpu.memory_space<vmem>>, vector<1x32xf32>
    %cst_24 = arith.constant dense<0.000000e+00> : vector<8xf32>
    %23 = vector.multi_reduction <add>, %4, %cst_24 [1] : vector<8x32xf32> to vector<8xf32>
    %24 = vector.shape_cast %23 : vector<8xf32> to vector<8x1xf32>
    %cst_25 = arith.constant 3.200000e+01 : f32
    %25 = vector.broadcast %cst_25 : f32 to vector<8x1xf32>
    %26 = arith.divf %24, %25 : vector<8x1xf32>
    %27 = vector.broadcast %26 : vector<8x1xf32> to vector<8x32xf32>
    %28 = arith.subf %4, %27 : vector<8x32xf32>
    %29 = arith.mulf %28, %28 : vector<8x32xf32>
    %cst_26 = arith.constant dense<0.000000e+00> : vector<8xf32>
    %30 = vector.multi_reduction <add>, %29, %cst_26 [1] : vector<8x32xf32> to vector<8xf32>
    %31 = vector.shape_cast %30 : vector<8xf32> to vector<8x1xf32>
    %cst_27 = arith.constant 0.0322580636 : f32
    %32 = vector.broadcast %cst_27 : f32 to vector<8x1xf32>
    %33 = arith.mulf %31, %32 : vector<8x1xf32>
    %cst_28 = arith.constant 9.99999997E-7 : f32
    %34 = vector.broadcast %cst_28 : f32 to vector<8x1xf32>
    %35 = arith.addf %33, %34 : vector<8x1xf32>
    %36 = math.rsqrt %35 : vector<8x1xf32>
    %37 = vector.broadcast %36 : vector<8x1xf32> to vector<8x32xf32>
    %38 = arith.mulf %28, %37 : vector<8x32xf32>
    %39 = vector.broadcast %21 : vector<1x32xf32> to vector<8x32xf32>
    %40 = arith.mulf %39, %38 : vector<8x32xf32>
    %41 = vector.broadcast %22 : vector<1x32xf32> to vector<8x32xf32>
    %42 = arith.addf %40, %41 : vector<8x32xf32>
    %c0_29 = arith.constant 0 : index
    %c0_30 = arith.constant 0 : index
    %43 = vector.load %arg24[%c0_29, %c0_30] : memref<16x32xbf16, #tpu.memory_space<vmem>>, vector<16x32xbf16>
    %c0_31 = arith.constant 0 : index
    %c0_32 = arith.constant 0 : index
    %44 = vector.load %arg25[%c0_31, %c0_32] : memref<16x32xbf16, #tpu.memory_space<vmem>>, vector<16x32xbf16>
    %45 = arith.truncf %42 : vector<8x32xf32> to vector<8x32xbf16>
    %cst_33 = arith.constant dense<0.000000e+00> : vector<8x32xf32>
    %46 = tpu.matmul %45, %17, %cst_33 {dimension_numbers = #tpu.dot_dimension_numbers<[1], [0], [0], [1], [0, 0, 1, 1], [], []>} : vector<8x32xbf16>, vector<32x32xbf16>, vector<8x32xf32> -> vector<8x32xf32>
    %47 = vector.broadcast %18 : vector<1x32xf32> to vector<8x32xf32>
    %48 = arith.addf %46, %47 : vector<8x32xf32>
    %cst_34 = arith.constant 0.353553385 : f32
    %49 = vector.broadcast %cst_34 : f32 to vector<8x32xf32>
    %50 = arith.mulf %48, %49 : vector<8x32xf32>
    %51 = arith.truncf %50 : vector<8x32xf32> to vector<8x32xbf16>
    %cst_35 = arith.constant 0.000000e+00 : f32
    %52 = vector.broadcast %cst_35 : f32 to vector<8x32xf32>
    %53 = vector.extract_strided_slice %51 {offsets = [0, 0], sizes = [8, 8], strides = [1, 1]} : vector<8x32xbf16> to vector<8x8xbf16>
    %54 = vector.extract_strided_slice %43 {offsets = [0, 0], sizes = [16, 8], strides = [1, 1]} : vector<16x32xbf16> to vector<16x8xbf16>
    %55 = vector.extract_strided_slice %44 {offsets = [0, 0], sizes = [16, 8], strides = [1, 1]} : vector<16x32xbf16> to vector<16x8xbf16>
    %cst_36 = arith.constant dense<0.000000e+00> : vector<8x16xf32>
    %56 = tpu.matmul %53, %54, %cst_36 {dimension_numbers = #tpu.dot_dimension_numbers<[1], [1], [0], [0], [0, 0, 1, 0], [], []>} : vector<8x8xbf16>, vector<16x8xbf16>, vector<8x16xf32> -> vector<8x16xf32>
    %57 = arith.addf %56, %10 : vector<8x16xf32>
    %cst_37 = arith.constant dense<0xFF800000> : vector<8xf32>
    %58 = vector.multi_reduction <maximumf>, %57, %cst_37 [1] : vector<8x16xf32> to vector<8xf32>
    %59 = vector.shape_cast %58 : vector<8xf32> to vector<8x1xf32>
    %60 = vector.broadcast %59 : vector<8x1xf32> to vector<8x16xf32>
    %61 = arith.subf %57, %60 : vector<8x16xf32>
    %62 = math.exp %61 : vector<8x16xf32>
    %cst_38 = arith.constant dense<0.000000e+00> : vector<8xf32>
    %63 = vector.multi_reduction <add>, %62, %cst_38 [1] : vector<8x16xf32> to vector<8xf32>
    %64 = vector.shape_cast %63 : vector<8xf32> to vector<8x1xf32>
    %65 = tpu.reciprocal %64 {approx = true} : vector<8x1xf32> -> vector<8x1xf32>
    %66 = vector.broadcast %65 : vector<8x1xf32> to vector<8x16xf32>
    %67 = arith.mulf %62, %66 : vector<8x16xf32>
    %68 = arith.truncf %67 : vector<8x16xf32> to vector<8x16xbf16>
    %cst_39 = arith.constant dense<0.000000e+00> : vector<8x8xf32>
    %69 = tpu.matmul %68, %55, %cst_39 {dimension_numbers = #tpu.dot_dimension_numbers<[1], [0], [0], [1], [0, 0, 1, 1], [], []>} : vector<8x16xbf16>, vector<16x8xbf16>, vector<8x8xf32> -> vector<8x8xf32>
    %70 = arith.truncf %69 : vector<8x8xf32> to vector<8x8xbf16>
    %71 = vector.extract_strided_slice %19 {offsets = [0, 0], sizes = [8, 32], strides = [1, 1]} : vector<32x32xbf16> to vector<8x32xbf16>
    %cst_40 = arith.constant dense<0.000000e+00> : vector<8x32xf32>
    %72 = tpu.matmul %70, %71, %cst_40 {dimension_numbers = #tpu.dot_dimension_numbers<[1], [0], [0], [1], [0, 0, 1, 1], [], []>} : vector<8x8xbf16>, vector<8x32xbf16>, vector<8x32xf32> -> vector<8x32xf32>
    %73 = arith.addf %52, %72 : vector<8x32xf32>
    %74 = vector.extract_strided_slice %51 {offsets = [0, 8], sizes = [8, 8], strides = [1, 1]} : vector<8x32xbf16> to vector<8x8xbf16>
    %75 = vector.extract_strided_slice %43 {offsets = [0, 8], sizes = [16, 8], strides = [1, 1]} : vector<16x32xbf16> to vector<16x8xbf16>
    %76 = vector.extract_strided_slice %44 {offsets = [0, 8], sizes = [16, 8], strides = [1, 1]} : vector<16x32xbf16> to vector<16x8xbf16>
    %cst_41 = arith.constant dense<0.000000e+00> : vector<8x16xf32>
    %77 = tpu.matmul %74, %75, %cst_41 {dimension_numbers = #tpu.dot_dimension_numbers<[1], [1], [0], [0], [0, 0, 1, 0], [], []>} : vector<8x8xbf16>, vector<16x8xbf16>, vector<8x16xf32> -> vector<8x16xf32>
    %78 = arith.addf %77, %10 : vector<8x16xf32>
    %cst_42 = arith.constant dense<0xFF800000> : vector<8xf32>
    %79 = vector.multi_reduction <maximumf>, %78, %cst_42 [1] : vector<8x16xf32> to vector<8xf32>
    %80 = vector.shape_cast %79 : vector<8xf32> to vector<8x1xf32>
    %81 = vector.broadcast %80 : vector<8x1xf32> to vector<8x16xf32>
    %82 = arith.subf %78, %81 : vector<8x16xf32>
    %83 = math.exp %82 : vector<8x16xf32>
    %cst_43 = arith.constant dense<0.000000e+00> : vector<8xf32>
    %84 = vector.multi_reduction <add>, %83, %cst_43 [1] : vector<8x16xf32> to vector<8xf32>
    %85 = vector.shape_cast %84 : vector<8xf32> to vector<8x1xf32>
    %86 = tpu.reciprocal %85 {approx = true} : vector<8x1xf32> -> vector<8x1xf32>
    %87 = vector.broadcast %86 : vector<8x1xf32> to vector<8x16xf32>
    %88 = arith.mulf %83, %87 : vector<8x16xf32>
    %89 = arith.truncf %88 : vector<8x16xf32> to vector<8x16xbf16>
    %cst_44 = arith.constant dense<0.000000e+00> : vector<8x8xf32>
    %90 = tpu.matmul %89, %76, %cst_44 {dimension_numbers = #tpu.dot_dimension_numbers<[1], [0], [0], [1], [0, 0, 1, 1], [], []>} : vector<8x16xbf16>, vector<16x8xbf16>, vector<8x8xf32> -> vector<8x8xf32>
    %91 = arith.truncf %90 : vector<8x8xf32> to vector<8x8xbf16>
    %92 = vector.extract_strided_slice %19 {offsets = [8, 0], sizes = [8, 32], strides = [1, 1]} : vector<32x32xbf16> to vector<8x32xbf16>
    %cst_45 = arith.constant dense<0.000000e+00> : vector<8x32xf32>
    %93 = tpu.matmul %91, %92, %cst_45 {dimension_numbers = #tpu.dot_dimension_numbers<[1], [0], [0], [1], [0, 0, 1, 1], [], []>} : vector<8x8xbf16>, vector<8x32xbf16>, vector<8x32xf32> -> vector<8x32xf32>
    %94 = arith.addf %73, %93 : vector<8x32xf32>
    %95 = vector.extract_strided_slice %51 {offsets = [0, 16], sizes = [8, 8], strides = [1, 1]} : vector<8x32xbf16> to vector<8x8xbf16>
    %96 = vector.extract_strided_slice %43 {offsets = [0, 16], sizes = [16, 8], strides = [1, 1]} : vector<16x32xbf16> to vector<16x8xbf16>
    %97 = vector.extract_strided_slice %44 {offsets = [0, 16], sizes = [16, 8], strides = [1, 1]} : vector<16x32xbf16> to vector<16x8xbf16>
    %cst_46 = arith.constant dense<0.000000e+00> : vector<8x16xf32>
    %98 = tpu.matmul %95, %96, %cst_46 {dimension_numbers = #tpu.dot_dimension_numbers<[1], [1], [0], [0], [0, 0, 1, 0], [], []>} : vector<8x8xbf16>, vector<16x8xbf16>, vector<8x16xf32> -> vector<8x16xf32>
    %99 = arith.addf %98, %10 : vector<8x16xf32>
    %cst_47 = arith.constant dense<0xFF800000> : vector<8xf32>
    %100 = vector.multi_reduction <maximumf>, %99, %cst_47 [1] : vector<8x16xf32> to vector<8xf32>
    %101 = vector.shape_cast %100 : vector<8xf32> to vector<8x1xf32>
    %102 = vector.broadcast %101 : vector<8x1xf32> to vector<8x16xf32>
    %103 = arith.subf %99, %102 : vector<8x16xf32>
    %104 = math.exp %103 : vector<8x16xf32>
    %cst_48 = arith.constant dense<0.000000e+00> : vector<8xf32>
    %105 = vector.multi_reduction <add>, %104, %cst_48 [1] : vector<8x16xf32> to vector<8xf32>
    %106 = vector.shape_cast %105 : vector<8xf32> to vector<8x1xf32>
    %107 = tpu.reciprocal %106 {approx = true} : vector<8x1xf32> -> vector<8x1xf32>
    %108 = vector.broadcast %107 : vector<8x1xf32> to vector<8x16xf32>
    %109 = arith.mulf %104, %108 : vector<8x16xf32>
    %110 = arith.truncf %109 : vector<8x16xf32> to vector<8x16xbf16>
    %cst_49 = arith.constant dense<0.000000e+00> : vector<8x8xf32>
    %111 = tpu.matmul %110, %97, %cst_49 {dimension_numbers = #tpu.dot_dimension_numbers<[1], [0], [0], [1], [0, 0, 1, 1], [], []>} : vector<8x16xbf16>, vector<16x8xbf16>, vector<8x8xf32> -> vector<8x8xf32>
    %112 = arith.truncf %111 : vector<8x8xf32> to vector<8x8xbf16>
    %113 = vector.extract_strided_slice %19 {offsets = [16, 0], sizes = [8, 32], strides = [1, 1]} : vector<32x32xbf16> to vector<8x32xbf16>
    %cst_50 = arith.constant dense<0.000000e+00> : vector<8x32xf32>
    %114 = tpu.matmul %112, %113, %cst_50 {dimension_numbers = #tpu.dot_dimension_numbers<[1], [0], [0], [1], [0, 0, 1, 1], [], []>} : vector<8x8xbf16>, vector<8x32xbf16>, vector<8x32xf32> -> vector<8x32xf32>
    %115 = arith.addf %94, %114 : vector<8x32xf32>
    %116 = vector.extract_strided_slice %51 {offsets = [0, 24], sizes = [8, 8], strides = [1, 1]} : vector<8x32xbf16> to vector<8x8xbf16>
    %117 = vector.extract_strided_slice %43 {offsets = [0, 24], sizes = [16, 8], strides = [1, 1]} : vector<16x32xbf16> to vector<16x8xbf16>
    %118 = vector.extract_strided_slice %44 {offsets = [0, 24], sizes = [16, 8], strides = [1, 1]} : vector<16x32xbf16> to vector<16x8xbf16>
    %cst_51 = arith.constant dense<0.000000e+00> : vector<8x16xf32>
    %119 = tpu.matmul %116, %117, %cst_51 {dimension_numbers = #tpu.dot_dimension_numbers<[1], [1], [0], [0], [0, 0, 1, 0], [], []>} : vector<8x8xbf16>, vector<16x8xbf16>, vector<8x16xf32> -> vector<8x16xf32>
    %120 = arith.addf %119, %10 : vector<8x16xf32>
    %cst_52 = arith.constant dense<0xFF800000> : vector<8xf32>
    %121 = vector.multi_reduction <maximumf>, %120, %cst_52 [1] : vector<8x16xf32> to vector<8xf32>
    %122 = vector.shape_cast %121 : vector<8xf32> to vector<8x1xf32>
    %123 = vector.broadcast %122 : vector<8x1xf32> to vector<8x16xf32>
    %124 = arith.subf %120, %123 : vector<8x16xf32>
    %125 = math.exp %124 : vector<8x16xf32>
    %cst_53 = arith.constant dense<0.000000e+00> : vector<8xf32>
    %126 = vector.multi_reduction <add>, %125, %cst_53 [1] : vector<8x16xf32> to vector<8xf32>
    %127 = vector.shape_cast %126 : vector<8xf32> to vector<8x1xf32>
    %128 = tpu.reciprocal %127 {approx = true} : vector<8x1xf32> -> vector<8x1xf32>
    %129 = vector.broadcast %128 : vector<8x1xf32> to vector<8x16xf32>
    %130 = arith.mulf %125, %129 : vector<8x16xf32>
    %131 = arith.truncf %130 : vector<8x16xf32> to vector<8x16xbf16>
    %cst_54 = arith.constant dense<0.000000e+00> : vector<8x8xf32>
    %132 = tpu.matmul %131, %118, %cst_54 {dimension_numbers = #tpu.dot_dimension_numbers<[1], [0], [0], [1], [0, 0, 1, 1], [], []>} : vector<8x16xbf16>, vector<16x8xbf16>, vector<8x8xf32> -> vector<8x8xf32>
    %133 = arith.truncf %132 : vector<8x8xf32> to vector<8x8xbf16>
    %134 = vector.extract_strided_slice %19 {offsets = [24, 0], sizes = [8, 32], strides = [1, 1]} : vector<32x32xbf16> to vector<8x32xbf16>
    %cst_55 = arith.constant dense<0.000000e+00> : vector<8x32xf32>
    %135 = tpu.matmul %133, %134, %cst_55 {dimension_numbers = #tpu.dot_dimension_numbers<[1], [0], [0], [1], [0, 0, 1, 1], [], []>} : vector<8x8xbf16>, vector<8x32xbf16>, vector<8x32xf32> -> vector<8x32xf32>
    %136 = arith.addf %115, %135 : vector<8x32xf32>
    %137 = vector.broadcast %20 : vector<1x32xf32> to vector<8x32xf32>
    %138 = arith.addf %136, %137 : vector<8x32xf32>
    %139 = arith.addf %4, %138 : vector<8x32xf32>
    %c0_56 = arith.constant 0 : index
    %c0_57 = arith.constant 0 : index
    %140 = vector.load %arg9[%c0_56, %c0_57] : memref<1x32xf32, #tpu.memory_space<vmem>>, vector<1x32xf32>
    %c0_58 = arith.constant 0 : index
    %c0_59 = arith.constant 0 : index
    %141 = vector.load %arg10[%c0_58, %c0_59] : memref<1x32xf32, #tpu.memory_space<vmem>>, vector<1x32xf32>
    %cst_60 = arith.constant dense<0.000000e+00> : vector<8xf32>
    %142 = vector.multi_reduction <add>, %139, %cst_60 [1] : vector<8x32xf32> to vector<8xf32>
    %143 = vector.shape_cast %142 : vector<8xf32> to vector<8x1xf32>
    %cst_61 = arith.constant 3.200000e+01 : f32
    %144 = vector.broadcast %cst_61 : f32 to vector<8x1xf32>
    %145 = arith.divf %143, %144 : vector<8x1xf32>
    %146 = vector.broadcast %145 : vector<8x1xf32> to vector<8x32xf32>
    %147 = arith.subf %139, %146 : vector<8x32xf32>
    %148 = arith.mulf %147, %147 : vector<8x32xf32>
    %cst_62 = arith.constant dense<0.000000e+00> : vector<8xf32>
    %149 = vector.multi_reduction <add>, %148, %cst_62 [1] : vector<8x32xf32> to vector<8xf32>
    %150 = vector.shape_cast %149 : vector<8xf32> to vector<8x1xf32>
    %cst_63 = arith.constant 0.0322580636 : f32
    %151 = vector.broadcast %cst_63 : f32 to vector<8x1xf32>
    %152 = arith.mulf %150, %151 : vector<8x1xf32>
    %cst_64 = arith.constant 9.99999997E-7 : f32
    %153 = vector.broadcast %cst_64 : f32 to vector<8x1xf32>
    %154 = arith.addf %152, %153 : vector<8x1xf32>
    %155 = math.rsqrt %154 : vector<8x1xf32>
    %156 = vector.broadcast %155 : vector<8x1xf32> to vector<8x32xf32>
    %157 = arith.mulf %147, %156 : vector<8x32xf32>
    %158 = vector.broadcast %140 : vector<1x32xf32> to vector<8x32xf32>
    %159 = arith.mulf %158, %157 : vector<8x32xf32>
    %160 = vector.broadcast %141 : vector<1x32xf32> to vector<8x32xf32>
    %161 = arith.addf %159, %160 : vector<8x32xf32>
    %c0_65 = arith.constant 0 : index
    %c0_66 = arith.constant 0 : index
    %162 = vector.load %arg26[%c0_65, %c0_66] : memref<24x32xbf16, #tpu.memory_space<vmem>>, vector<24x32xbf16>
    %c0_67 = arith.constant 0 : index
    %c0_68 = arith.constant 0 : index
    %163 = vector.load %arg27[%c0_67, %c0_68] : memref<24x32xbf16, #tpu.memory_space<vmem>>, vector<24x32xbf16>
    %164 = arith.truncf %161 : vector<8x32xf32> to vector<8x32xbf16>
    %cst_69 = arith.constant dense<0.000000e+00> : vector<8x32xf32>
    %165 = tpu.matmul %164, %17, %cst_69 {dimension_numbers = #tpu.dot_dimension_numbers<[1], [0], [0], [1], [0, 0, 1, 1], [], []>} : vector<8x32xbf16>, vector<32x32xbf16>, vector<8x32xf32> -> vector<8x32xf32>
    %166 = vector.broadcast %18 : vector<1x32xf32> to vector<8x32xf32>
    %167 = arith.addf %165, %166 : vector<8x32xf32>
    %cst_70 = arith.constant 0.353553385 : f32
    %168 = vector.broadcast %cst_70 : f32 to vector<8x32xf32>
    %169 = arith.mulf %167, %168 : vector<8x32xf32>
    %170 = arith.truncf %169 : vector<8x32xf32> to vector<8x32xbf16>
    %cst_71 = arith.constant 0.000000e+00 : f32
    %171 = vector.broadcast %cst_71 : f32 to vector<8x32xf32>
    %172 = vector.extract_strided_slice %170 {offsets = [0, 0], sizes = [8, 8], strides = [1, 1]} : vector<8x32xbf16> to vector<8x8xbf16>
    %173 = vector.extract_strided_slice %162 {offsets = [0, 0], sizes = [24, 8], strides = [1, 1]} : vector<24x32xbf16> to vector<24x8xbf16>
    %174 = vector.extract_strided_slice %163 {offsets = [0, 0], sizes = [24, 8], strides = [1, 1]} : vector<24x32xbf16> to vector<24x8xbf16>
    %cst_72 = arith.constant dense<0.000000e+00> : vector<8x24xf32>
    %175 = tpu.matmul %172, %173, %cst_72 {dimension_numbers = #tpu.dot_dimension_numbers<[1], [1], [0], [0], [0, 0, 1, 0], [], []>} : vector<8x8xbf16>, vector<24x8xbf16>, vector<8x24xf32> -> vector<8x24xf32>
    %176 = vector.broadcast %16 : vector<1x24xf32> to vector<8x24xf32>
    %177 = arith.addf %175, %176 : vector<8x24xf32>
    %cst_73 = arith.constant dense<0xFF800000> : vector<8xf32>
    %178 = vector.multi_reduction <maximumf>, %177, %cst_73 [1] : vector<8x24xf32> to vector<8xf32>
    %179 = vector.shape_cast %178 : vector<8xf32> to vector<8x1xf32>
    %180 = vector.broadcast %179 : vector<8x1xf32> to vector<8x24xf32>
    %181 = arith.subf %177, %180 : vector<8x24xf32>
    %182 = math.exp %181 : vector<8x24xf32>
    %cst_74 = arith.constant dense<0.000000e+00> : vector<8xf32>
    %183 = vector.multi_reduction <add>, %182, %cst_74 [1] : vector<8x24xf32> to vector<8xf32>
    %184 = vector.shape_cast %183 : vector<8xf32> to vector<8x1xf32>
    %185 = tpu.reciprocal %184 {approx = true} : vector<8x1xf32> -> vector<8x1xf32>
    %186 = vector.broadcast %185 : vector<8x1xf32> to vector<8x24xf32>
    %187 = arith.mulf %182, %186 : vector<8x24xf32>
    %188 = arith.truncf %187 : vector<8x24xf32> to vector<8x24xbf16>
    %cst_75 = arith.constant dense<0.000000e+00> : vector<8x8xf32>
    %189 = tpu.matmul %188, %174, %cst_75 {dimension_numbers = #tpu.dot_dimension_numbers<[1], [0], [0], [1], [0, 0, 1, 1], [], []>} : vector<8x24xbf16>, vector<24x8xbf16>, vector<8x8xf32> -> vector<8x8xf32>
    %190 = arith.truncf %189 : vector<8x8xf32> to vector<8x8xbf16>
    %191 = vector.extract_strided_slice %19 {offsets = [0, 0], sizes = [8, 32], strides = [1, 1]} : vector<32x32xbf16> to vector<8x32xbf16>
    %cst_76 = arith.constant dense<0.000000e+00> : vector<8x32xf32>
    %192 = tpu.matmul %190, %191, %cst_76 {dimension_numbers = #tpu.dot_dimension_numbers<[1], [0], [0], [1], [0, 0, 1, 1], [], []>} : vector<8x8xbf16>, vector<8x32xbf16>, vector<8x32xf32> -> vector<8x32xf32>
    %193 = arith.addf %171, %192 : vector<8x32xf32>
    %194 = vector.extract_strided_slice %170 {offsets = [0, 8], sizes = [8, 8], strides = [1, 1]} : vector<8x32xbf16> to vector<8x8xbf16>
    %195 = vector.extract_strided_slice %162 {offsets = [0, 8], sizes = [24, 8], strides = [1, 1]} : vector<24x32xbf16> to vector<24x8xbf16>
    %196 = vector.extract_strided_slice %163 {offsets = [0, 8], sizes = [24, 8], strides = [1, 1]} : vector<24x32xbf16> to vector<24x8xbf16>
    %cst_77 = arith.constant dense<0.000000e+00> : vector<8x24xf32>
    %197 = tpu.matmul %194, %195, %cst_77 {dimension_numbers = #tpu.dot_dimension_numbers<[1], [1], [0], [0], [0, 0, 1, 0], [], []>} : vector<8x8xbf16>, vector<24x8xbf16>, vector<8x24xf32> -> vector<8x24xf32>
    %198 = vector.broadcast %16 : vector<1x24xf32> to vector<8x24xf32>
    %199 = arith.addf %197, %198 : vector<8x24xf32>
    %cst_78 = arith.constant dense<0xFF800000> : vector<8xf32>
    %200 = vector.multi_reduction <maximumf>, %199, %cst_78 [1] : vector<8x24xf32> to vector<8xf32>
    %201 = vector.shape_cast %200 : vector<8xf32> to vector<8x1xf32>
    %202 = vector.broadcast %201 : vector<8x1xf32> to vector<8x24xf32>
    %203 = arith.subf %199, %202 : vector<8x24xf32>
    %204 = math.exp %203 : vector<8x24xf32>
    %cst_79 = arith.constant dense<0.000000e+00> : vector<8xf32>
    %205 = vector.multi_reduction <add>, %204, %cst_79 [1] : vector<8x24xf32> to vector<8xf32>
    %206 = vector.shape_cast %205 : vector<8xf32> to vector<8x1xf32>
    %207 = tpu.reciprocal %206 {approx = true} : vector<8x1xf32> -> vector<8x1xf32>
    %208 = vector.broadcast %207 : vector<8x1xf32> to vector<8x24xf32>
    %209 = arith.mulf %204, %208 : vector<8x24xf32>
    %210 = arith.truncf %209 : vector<8x24xf32> to vector<8x24xbf16>
    %cst_80 = arith.constant dense<0.000000e+00> : vector<8x8xf32>
    %211 = tpu.matmul %210, %196, %cst_80 {dimension_numbers = #tpu.dot_dimension_numbers<[1], [0], [0], [1], [0, 0, 1, 1], [], []>} : vector<8x24xbf16>, vector<24x8xbf16>, vector<8x8xf32> -> vector<8x8xf32>
    %212 = arith.truncf %211 : vector<8x8xf32> to vector<8x8xbf16>
    %213 = vector.extract_strided_slice %19 {offsets = [8, 0], sizes = [8, 32], strides = [1, 1]} : vector<32x32xbf16> to vector<8x32xbf16>
    %cst_81 = arith.constant dense<0.000000e+00> : vector<8x32xf32>
    %214 = tpu.matmul %212, %213, %cst_81 {dimension_numbers = #tpu.dot_dimension_numbers<[1], [0], [0], [1], [0, 0, 1, 1], [], []>} : vector<8x8xbf16>, vector<8x32xbf16>, vector<8x32xf32> -> vector<8x32xf32>
    %215 = arith.addf %193, %214 : vector<8x32xf32>
    %216 = vector.extract_strided_slice %170 {offsets = [0, 16], sizes = [8, 8], strides = [1, 1]} : vector<8x32xbf16> to vector<8x8xbf16>
    %217 = vector.extract_strided_slice %162 {offsets = [0, 16], sizes = [24, 8], strides = [1, 1]} : vector<24x32xbf16> to vector<24x8xbf16>
    %218 = vector.extract_strided_slice %163 {offsets = [0, 16], sizes = [24, 8], strides = [1, 1]} : vector<24x32xbf16> to vector<24x8xbf16>
    %cst_82 = arith.constant dense<0.000000e+00> : vector<8x24xf32>
    %219 = tpu.matmul %216, %217, %cst_82 {dimension_numbers = #tpu.dot_dimension_numbers<[1], [1], [0], [0], [0, 0, 1, 0], [], []>} : vector<8x8xbf16>, vector<24x8xbf16>, vector<8x24xf32> -> vector<8x24xf32>
    %220 = vector.broadcast %16 : vector<1x24xf32> to vector<8x24xf32>
    %221 = arith.addf %219, %220 : vector<8x24xf32>
    %cst_83 = arith.constant dense<0xFF800000> : vector<8xf32>
    %222 = vector.multi_reduction <maximumf>, %221, %cst_83 [1] : vector<8x24xf32> to vector<8xf32>
    %223 = vector.shape_cast %222 : vector<8xf32> to vector<8x1xf32>
    %224 = vector.broadcast %223 : vector<8x1xf32> to vector<8x24xf32>
    %225 = arith.subf %221, %224 : vector<8x24xf32>
    %226 = math.exp %225 : vector<8x24xf32>
    %cst_84 = arith.constant dense<0.000000e+00> : vector<8xf32>
    %227 = vector.multi_reduction <add>, %226, %cst_84 [1] : vector<8x24xf32> to vector<8xf32>
    %228 = vector.shape_cast %227 : vector<8xf32> to vector<8x1xf32>
    %229 = tpu.reciprocal %228 {approx = true} : vector<8x1xf32> -> vector<8x1xf32>
    %230 = vector.broadcast %229 : vector<8x1xf32> to vector<8x24xf32>
    %231 = arith.mulf %226, %230 : vector<8x24xf32>
    %232 = arith.truncf %231 : vector<8x24xf32> to vector<8x24xbf16>
    %cst_85 = arith.constant dense<0.000000e+00> : vector<8x8xf32>
    %233 = tpu.matmul %232, %218, %cst_85 {dimension_numbers = #tpu.dot_dimension_numbers<[1], [0], [0], [1], [0, 0, 1, 1], [], []>} : vector<8x24xbf16>, vector<24x8xbf16>, vector<8x8xf32> -> vector<8x8xf32>
    %234 = arith.truncf %233 : vector<8x8xf32> to vector<8x8xbf16>
    %235 = vector.extract_strided_slice %19 {offsets = [16, 0], sizes = [8, 32], strides = [1, 1]} : vector<32x32xbf16> to vector<8x32xbf16>
    %cst_86 = arith.constant dense<0.000000e+00> : vector<8x32xf32>
    %236 = tpu.matmul %234, %235, %cst_86 {dimension_numbers = #tpu.dot_dimension_numbers<[1], [0], [0], [1], [0, 0, 1, 1], [], []>} : vector<8x8xbf16>, vector<8x32xbf16>, vector<8x32xf32> -> vector<8x32xf32>
    %237 = arith.addf %215, %236 : vector<8x32xf32>
    %238 = vector.extract_strided_slice %170 {offsets = [0, 24], sizes = [8, 8], strides = [1, 1]} : vector<8x32xbf16> to vector<8x8xbf16>
    %239 = vector.extract_strided_slice %162 {offsets = [0, 24], sizes = [24, 8], strides = [1, 1]} : vector<24x32xbf16> to vector<24x8xbf16>
    %240 = vector.extract_strided_slice %163 {offsets = [0, 24], sizes = [24, 8], strides = [1, 1]} : vector<24x32xbf16> to vector<24x8xbf16>
    %cst_87 = arith.constant dense<0.000000e+00> : vector<8x24xf32>
    %241 = tpu.matmul %238, %239, %cst_87 {dimension_numbers = #tpu.dot_dimension_numbers<[1], [1], [0], [0], [0, 0, 1, 0], [], []>} : vector<8x8xbf16>, vector<24x8xbf16>, vector<8x24xf32> -> vector<8x24xf32>
    %242 = vector.broadcast %16 : vector<1x24xf32> to vector<8x24xf32>
    %243 = arith.addf %241, %242 : vector<8x24xf32>
    %cst_88 = arith.constant dense<0xFF800000> : vector<8xf32>
    %244 = vector.multi_reduction <maximumf>, %243, %cst_88 [1] : vector<8x24xf32> to vector<8xf32>
    %245 = vector.shape_cast %244 : vector<8xf32> to vector<8x1xf32>
    %246 = vector.broadcast %245 : vector<8x1xf32> to vector<8x24xf32>
    %247 = arith.subf %243, %246 : vector<8x24xf32>
    %248 = math.exp %247 : vector<8x24xf32>
    %cst_89 = arith.constant dense<0.000000e+00> : vector<8xf32>
    %249 = vector.multi_reduction <add>, %248, %cst_89 [1] : vector<8x24xf32> to vector<8xf32>
    %250 = vector.shape_cast %249 : vector<8xf32> to vector<8x1xf32>
    %251 = tpu.reciprocal %250 {approx = true} : vector<8x1xf32> -> vector<8x1xf32>
    %252 = vector.broadcast %251 : vector<8x1xf32> to vector<8x24xf32>
    %253 = arith.mulf %248, %252 : vector<8x24xf32>
    %254 = arith.truncf %253 : vector<8x24xf32> to vector<8x24xbf16>
    %cst_90 = arith.constant dense<0.000000e+00> : vector<8x8xf32>
    %255 = tpu.matmul %254, %240, %cst_90 {dimension_numbers = #tpu.dot_dimension_numbers<[1], [0], [0], [1], [0, 0, 1, 1], [], []>} : vector<8x24xbf16>, vector<24x8xbf16>, vector<8x8xf32> -> vector<8x8xf32>
    %256 = arith.truncf %255 : vector<8x8xf32> to vector<8x8xbf16>
    %257 = vector.extract_strided_slice %19 {offsets = [24, 0], sizes = [8, 32], strides = [1, 1]} : vector<32x32xbf16> to vector<8x32xbf16>
    %cst_91 = arith.constant dense<0.000000e+00> : vector<8x32xf32>
    %258 = tpu.matmul %256, %257, %cst_91 {dimension_numbers = #tpu.dot_dimension_numbers<[1], [0], [0], [1], [0, 0, 1, 1], [], []>} : vector<8x8xbf16>, vector<8x32xbf16>, vector<8x32xf32> -> vector<8x32xf32>
    %259 = arith.addf %237, %258 : vector<8x32xf32>
    %260 = vector.broadcast %20 : vector<1x32xf32> to vector<8x32xf32>
    %261 = arith.addf %259, %260 : vector<8x32xf32>
    %262 = arith.addf %139, %261 : vector<8x32xf32>
    %c0_92 = arith.constant 0 : index
    %c0_93 = arith.constant 0 : index
    %263 = vector.load %arg11[%c0_92, %c0_93] : memref<1x32xf32, #tpu.memory_space<vmem>>, vector<1x32xf32>
    %c0_94 = arith.constant 0 : index
    %c0_95 = arith.constant 0 : index
    %264 = vector.load %arg12[%c0_94, %c0_95] : memref<1x32xf32, #tpu.memory_space<vmem>>, vector<1x32xf32>
    %cst_96 = arith.constant dense<0.000000e+00> : vector<8xf32>
    %265 = vector.multi_reduction <add>, %262, %cst_96 [1] : vector<8x32xf32> to vector<8xf32>
    %266 = vector.shape_cast %265 : vector<8xf32> to vector<8x1xf32>
    %cst_97 = arith.constant 3.200000e+01 : f32
    %267 = vector.broadcast %cst_97 : f32 to vector<8x1xf32>
    %268 = arith.divf %266, %267 : vector<8x1xf32>
    %269 = vector.broadcast %268 : vector<8x1xf32> to vector<8x32xf32>
    %270 = arith.subf %262, %269 : vector<8x32xf32>
    %271 = arith.mulf %270, %270 : vector<8x32xf32>
    %cst_98 = arith.constant dense<0.000000e+00> : vector<8xf32>
    %272 = vector.multi_reduction <add>, %271, %cst_98 [1] : vector<8x32xf32> to vector<8xf32>
    %273 = vector.shape_cast %272 : vector<8xf32> to vector<8x1xf32>
    %cst_99 = arith.constant 0.0322580636 : f32
    %274 = vector.broadcast %cst_99 : f32 to vector<8x1xf32>
    %275 = arith.mulf %273, %274 : vector<8x1xf32>
    %cst_100 = arith.constant 9.99999997E-7 : f32
    %276 = vector.broadcast %cst_100 : f32 to vector<8x1xf32>
    %277 = arith.addf %275, %276 : vector<8x1xf32>
    %278 = math.rsqrt %277 : vector<8x1xf32>
    %279 = vector.broadcast %278 : vector<8x1xf32> to vector<8x32xf32>
    %280 = arith.mulf %270, %279 : vector<8x32xf32>
    %281 = vector.broadcast %263 : vector<1x32xf32> to vector<8x32xf32>
    %282 = arith.mulf %281, %280 : vector<8x32xf32>
    %283 = vector.broadcast %264 : vector<1x32xf32> to vector<8x32xf32>
    %284 = arith.addf %282, %283 : vector<8x32xf32>
    %285 = arith.truncf %284 : vector<8x32xf32> to vector<8x32xbf16>
    %c0_101 = arith.constant 0 : index
    %c0_102 = arith.constant 0 : index
    %286 = vector.load %arg19[%c0_101, %c0_102] : memref<32x64xbf16, #tpu.memory_space<vmem>>, vector<32x64xbf16>
    %cst_103 = arith.constant dense<0.000000e+00> : vector<8x64xf32>
    %287 = tpu.matmul %285, %286, %cst_103 {dimension_numbers = #tpu.dot_dimension_numbers<[1], [0], [0], [1], [0, 0, 1, 1], [], []>} : vector<8x32xbf16>, vector<32x64xbf16>, vector<8x64xf32> -> vector<8x64xf32>
    %c0_104 = arith.constant 0 : index
    %c0_105 = arith.constant 0 : index
    %288 = vector.load %arg20[%c0_104, %c0_105] : memref<1x64xf32, #tpu.memory_space<vmem>>, vector<1x64xf32>
    %289 = vector.broadcast %288 : vector<1x64xf32> to vector<8x64xf32>
    %290 = arith.addf %287, %289 : vector<8x64xf32>
    %cst_106 = arith.constant 0.000000e+00 : f32
    %291 = vector.broadcast %cst_106 : f32 to vector<8x64xf32>
    %292 = arith.maximumf %290, %291 : vector<8x64xf32>
    %293 = arith.truncf %292 : vector<8x64xf32> to vector<8x64xbf16>
    %c0_107 = arith.constant 0 : index
    %c0_108 = arith.constant 0 : index
    %294 = vector.load %arg21[%c0_107, %c0_108] : memref<64x32xbf16, #tpu.memory_space<vmem>>, vector<64x32xbf16>
    %cst_109 = arith.constant dense<0.000000e+00> : vector<8x32xf32>
    %295 = tpu.matmul %293, %294, %cst_109 {dimension_numbers = #tpu.dot_dimension_numbers<[1], [0], [0], [1], [0, 0, 1, 1], [], []>} : vector<8x64xbf16>, vector<64x32xbf16>, vector<8x32xf32> -> vector<8x32xf32>
    %c0_110 = arith.constant 0 : index
    %c0_111 = arith.constant 0 : index
    %296 = vector.load %arg22[%c0_110, %c0_111] : memref<1x32xf32, #tpu.memory_space<vmem>>, vector<1x32xf32>
    %297 = vector.broadcast %296 : vector<1x32xf32> to vector<8x32xf32>
    %298 = arith.addf %295, %297 : vector<8x32xf32>
    %299 = arith.addf %262, %298 : vector<8x32xf32>
    %c0_112 = arith.constant 0 : index
    %c0_113 = arith.constant 0 : index
    %c0_114 = arith.constant 0 : index
    %300 = vector.load %arg23[%c0_112, %c0_113, %c0_114] : memref<1x8x32xf32, #tpu.memory_space<vmem>>, vector<1x8x32xf32>
    %301 = vector.shape_cast %300 : vector<1x8x32xf32> to vector<8x32xf32>
    %302 = vector.shape_cast %299 : vector<8x32xf32> to vector<1x8x32xf32>
    tpu.vector_store %arg23[%c0_112, %c0_113, %c0_114], %302 {strides = array<i32>} : memref<1x8x32xf32, #tpu.memory_space<vmem>>, vector<1x8x32xf32>,
    return
  }
  func.func @transform_0(%arg0: i32, %arg1: i32) -> (i32, i32, i32) {
    %c0_i32 = arith.constant 0 : i32
    %c0_i32_0 = arith.constant 0 : i32
    %c0_i32_1 = arith.constant 0 : i32
    return %arg0, %c0_i32, %c0_i32_0 : i32, i32, i32
  }
  func.func @transform_1(%arg0: i32, %arg1: i32) -> (i32, i32, i32) {
    %c0_i32 = arith.constant 0 : i32
    %c0_i32_0 = arith.constant 0 : i32
    return %arg0, %arg1, %c0_i32 : i32, i32, i32
  }
  func.func @transform_2(%arg0: i32, %arg1: i32) -> (i32, i32, i32) {
    %c0_i32 = arith.constant 0 : i32
    %c0_i32_0 = arith.constant 0 : i32
    %c0_i32_1 = arith.constant 0 : i32
    return %arg0, %c0_i32, %c0_i32_0 : i32, i32, i32
  }
  func.func @transform_3(%arg0: i32, %arg1: i32) -> (i32, i32, i32) {
    %c0_i32 = arith.constant 0 : i32
    %c0_i32_0 = arith.constant 0 : i32
    return %arg0, %arg1, %c0_i32 : i32, i32, i32
  }
  func.func @transform_4(%arg0: i32, %arg1: i32) -> (i32, i32, i32) {
    %c0_i32 = arith.constant 0 : i32
    %c0_i32_0 = arith.constant 0 : i32
    %c0_i32_1 = arith.constant 0 : i32
    return %arg0, %c0_i32, %c0_i32_0 : i32, i32, i32
  }
  func.func @transform_5(%arg0: i32, %arg1: i32) -> (i32, i32) {
    %c0_i32 = arith.constant 0 : i32
    %c0_i32_0 = arith.constant 0 : i32
    %c0_i32_1 = arith.constant 0 : i32
    return %c0_i32, %c0_i32_0 : i32, i32
  }
  func.func @transform_6(%arg0: i32, %arg1: i32) -> (i32, i32) {
    %c0_i32 = arith.constant 0 : i32
    %c0_i32_0 = arith.constant 0 : i32
    %c0_i32_1 = arith.constant 0 : i32
    return %c0_i32, %c0_i32_0 : i32, i32
  }
  func.func @transform_7(%arg0: i32, %arg1: i32) -> (i32, i32) {
    %c0_i32 = arith.constant 0 : i32
    %c0_i32_0 = arith.constant 0 : i32
    %c0_i32_1 = arith.constant 0 : i32
    return %c0_i32, %c0_i32_0 : i32, i32
  }
  func.func @transform_8(%arg0: i32, %arg1: i32) -> (i32, i32) {
    %c0_i32 = arith.constant 0 : i32
    %c0_i32_0 = arith.constant 0 : i32
    %c0_i32_1 = arith.constant 0 : i32
    return %c0_i32, %c0_i32_0 : i32, i32
  }
  func.func @transform_9(%arg0: i32, %arg1: i32) -> (i32, i32) {
    %c0_i32 = arith.constant 0 : i32
    %c0_i32_0 = arith.constant 0 : i32
    %c0_i32_1 = arith.constant 0 : i32
    return %c0_i32, %c0_i32_0 : i32, i32
  }
  func.func @transform_10(%arg0: i32, %arg1: i32) -> (i32, i32) {
    %c0_i32 = arith.constant 0 : i32
    %c0_i32_0 = arith.constant 0 : i32
    %c0_i32_1 = arith.constant 0 : i32
    return %c0_i32, %c0_i32_0 : i32, i32
  }
  func.func @transform_11(%arg0: i32, %arg1: i32) -> (i32, i32) {
    %c0_i32 = arith.constant 0 : i32
    %c0_i32_0 = arith.constant 0 : i32
    %c0_i32_1 = arith.constant 0 : i32
    return %c0_i32, %c0_i32_0 : i32, i32
  }
  func.func @transform_12(%arg0: i32, %arg1: i32) -> (i32, i32) {
    %c0_i32 = arith.constant 0 : i32
    %c0_i32_0 = arith.constant 0 : i32
    %c0_i32_1 = arith.constant 0 : i32
    return %c0_i32, %c0_i32_0 : i32, i32
  }
  func.func @transform_13(%arg0: i32, %arg1: i32) -> (i32, i32) {
    %c0_i32 = arith.constant 0 : i32
    %c0_i32_0 = arith.constant 0 : i32
    %c0_i32_1 = arith.constant 0 : i32
    return %c0_i32, %c0_i32_0 : i32, i32
  }
  func.func @transform_14(%arg0: i32, %arg1: i32) -> (i32, i32) {
    %c0_i32 = arith.constant 0 : i32
    %c0_i32_0 = arith.constant 0 : i32
    %c0_i32_1 = arith.constant 0 : i32
    return %c0_i32, %c0_i32_0 : i32, i32
  }
  func.func @transform_15(%arg0: i32, %arg1: i32) -> (i32, i32) {
    %c0_i32 = arith.constant 0 : i32
    %c0_i32_0 = arith.constant 0 : i32
    %c0_i32_1 = arith.constant 0 : i32
    return %c0_i32, %c0_i32_0 : i32, i32
  }
  func.func @transform_16(%arg0: i32, %arg1: i32) -> (i32, i32) {
    %c0_i32 = arith.constant 0 : i32
    %c0_i32_0 = arith.constant 0 : i32
    %c0_i32_1 = arith.constant 0 : i32
    return %c0_i32, %c0_i32_0 : i32, i32
  }
  func.func @transform_17(%arg0: i32, %arg1: i32) -> (i32, i32) {
    %c0_i32 = arith.constant 0 : i32
    %c0_i32_0 = arith.constant 0 : i32
    %c0_i32_1 = arith.constant 0 : i32
    return %c0_i32, %c0_i32_0 : i32, i32
  }
  func.func @transform_18(%arg0: i32, %arg1: i32) -> (i32, i32) {
    %c0_i32 = arith.constant 0 : i32
    %c0_i32_0 = arith.constant 0 : i32
    %c0_i32_1 = arith.constant 0 : i32
    return %c0_i32, %c0_i32_0 : i32, i32
  }
  func.func @transform_19(%arg0: i32, %arg1: i32) -> (i32, i32) {
    %c0_i32 = arith.constant 0 : i32
    %c0_i32_0 = arith.constant 0 : i32
    %c0_i32_1 = arith.constant 0 : i32
    return %c0_i32, %c0_i32_0 : i32, i32
  }
  func.func @transform_20(%arg0: i32, %arg1: i32) -> (i32, i32) {
    %c0_i32 = arith.constant 0 : i32
    %c0_i32_0 = arith.constant 0 : i32
    %c0_i32_1 = arith.constant 0 : i32
    return %c0_i32, %c0_i32_0 : i32, i32
  }
  func.func @transform_21(%arg0: i32, %arg1: i32) -> (i32, i32, i32) {
    %c0_i32 = arith.constant 0 : i32
    %c0_i32_0 = arith.constant 0 : i32
    return %arg0, %arg1, %c0_i32 : i32, i32, i32
  }
}

</mosaic_0001>

<llo_original>
// kernel: tpu_custom_call.1
$region0: #{tpu_custom_call.1}
  #allocation0 [shape = 'u32[]', space=smem, size = 0x4, offset = 0x4, fixed_abs, tag = 'smem constant byte address 0x4 - core index']
  #allocation1 [shape = 'u32[144,128]{1,0:T(1,128)}', space=vmem, size = 0x12000, scoped, tag = 'internal scratch']
  #allocation2 [shape = 'bf16[16,32]{1,0:T(16,128)(2,1)}', space=vmem, size = 0x1000, scoped, tag = 'scratch operand']
  #allocation3 [shape = 'bf16[16,32]{1,0:T(16,128)(2,1)}', space=vmem, size = 0x1000, scoped, tag = 'scratch operand']
  #allocation4 [shape = 'bf16[24,32]{1,0:T(8,128)(2,1)}', space=vmem, size = 0x1800, scoped, tag = 'scratch operand']
  #allocation5 [shape = 'bf16[24,32]{1,0:T(8,128)(2,1)}', space=vmem, size = 0x1800, scoped, tag = 'scratch operand']
  %s0 = inlined_call_operand.hbm [shape: f32[2,16,32], index: 0, kind: input, shape index: {}]
  %s1 = inlined_call_operand.hbm [shape: f32[2,16,32], index: 1, kind: input, shape index: {}]
  %s2 = inlined_call_operand.hbm [shape: f32[2,24,32], index: 2, kind: input, shape index: {}]
  %s3 = inlined_call_operand.hbm [shape: f32[2,16,16], index: 3, kind: input, shape index: {}]
  %s4 = inlined_call_operand.hbm [shape: f32[2,1,24], index: 4, kind: input, shape index: {}]
  %s5 = inlined_call_operand.hbm [shape: f32[1,32], index: 5, kind: input, shape index: {}]
  %s6 = inlined_call_operand.hbm [shape: f32[1,32], index: 6, kind: input, shape index: {}]
  %s7 = inlined_call_operand.hbm [shape: f32[1,32], index: 7, kind: input, shape index: {}]
  %s8 = inlined_call_operand.hbm [shape: f32[1,32], index: 8, kind: input, shape index: {}]
  %s9 = inlined_call_operand.hbm [shape: f32[1,32], index: 9, kind: input, shape index: {}]
  %s10 = inlined_call_operand.hbm [shape: f32[1,32], index: 10, kind: input, shape index: {}]
  %s11 = inlined_call_operand.hbm [shape: bf16[32,32], index: 11, kind: input, shape index: {}]
  %s12 = inlined_call_operand.hbm [shape: f32[1,32], index: 12, kind: input, shape index: {}]
  %s13 = inlined_call_operand.hbm [shape: bf16[32,64], index: 13, kind: input, shape index: {}]
  %s14 = inlined_call_operand.hbm [shape: f32[1,64], index: 14, kind: input, shape index: {}]
  %s15 = inlined_call_operand.hbm [shape: bf16[32,32], index: 15, kind: input, shape index: {}]
  %s16 = inlined_call_operand.hbm [shape: f32[1,32], index: 16, kind: input, shape index: {}]
  %s17 = inlined_call_operand.hbm [shape: bf16[32,64], index: 17, kind: input, shape index: {}]
  %s18 = inlined_call_operand.hbm [shape: f32[1,64], index: 18, kind: input, shape index: {}]
  %s19 = inlined_call_operand.hbm [shape: bf16[64,32], index: 19, kind: input, shape index: {}]
  %s20 = inlined_call_operand.hbm [shape: f32[1,32], index: 20, kind: input, shape index: {}]
  %s21 = inlined_call_operand.hbm [shape: f32[2,16,32], index: 21, kind: output, shape index: {}]
  %s22 = sld [smem:[#allocation0]]
  $region205: #{tpu_custom_call.1} parent=0
    _
  %s24 = ssub.s32 1, %s22
  %s25 = scalar_select 0, %s24, %s22
  $region1: #{tpu_custom_call.1} parent=0
    #allocation6 [shape = 'u8[16384]{0}', space=vmem, size = 0x4000, scoped, tag = 'input window, operand 0']
    #allocation7 [shape = 's32[2]{0}', space=sflag, size = 0x8, scoped, tag = 'scoped memory for tpu_custom_call.1']
    #allocation8 [shape = 's32[2]{0}', space=sflag, size = 0x8, scoped, tag = 'scoped memory for tpu_custom_call.1']
    #allocation9 [shape = 'u8[8192]{0}', space=vmem, size = 0x2000, scoped, tag = 'input window, operand 1']
    #allocation10 [shape = 's32[2]{0}', space=sflag, size = 0x8, scoped, tag = 'scoped memory for tpu_custom_call.1']
    #allocation11 [shape = 'u8[24576]{0}', space=vmem, size = 0x6000, scoped, tag = 'input window, operand 2']
    #allocation12 [shape = 'u8[8192]{0}', space=vmem, size = 0x2000, scoped, tag = 'input window, operand 3']
    #allocation13 [shape = 's32[2]{0}', space=sflag, size = 0x8, scoped, tag = 'scoped memory for tpu_custom_call.1']
    #allocation14 [shape = 'u8[1024]{0}', space=vmem, size = 0x400, scoped, tag = 'input window, operand 4']
    #allocation15 [shape = 'u8[512]{0}', space=vmem, size = 0x400, scoped, tag = 'input window, operand 5, single buffered']
    #allocation16 [shape = 's32[1]{0}', space=sflag, size = 0x4, scoped, tag = 'scoped memory for tpu_custom_call.1']
    #allocation17 [shape = 'u8[512]{0}', space=vmem, size = 0x400, scoped, tag = 'input window, operand 6, single buffered']
    #allocation18 [shape = 'u8[512]{0}', space=vmem, size = 0x400, scoped, tag = 'input window, operand 7, single buffered']
    #allocation19 [shape = 's32[1]{0}', space=sflag, size = 0x4, scoped, tag = 'scoped memory for tpu_custom_call.1']
    #allocation20 [shape = 'u8[512]{0}', space=vmem, size = 0x400, scoped, tag = 'input window, operand 8, single buffered']
    #allocation21 [shape = 'u8[512]{0}', space=vmem, size = 0x400, scoped, tag = 'input window, operand 9, single buffered']
    #allocation22 [shape = 's32[1]{0}', space=sflag, size = 0x4, scoped, tag = 'scoped memory for tpu_custom_call.1']
    #allocation23 [shape = 'u8[512]{0}', space=vmem, size = 0x400, scoped, tag = 'input window, operand 10, single buffered']
    #allocation24 [shape = 'u8[8192]{0}', space=vmem, size = 0x2000, scoped, tag = 'input window, operand 11, single buffered']
    #allocation25 [shape = 's32[1]{0}', space=sflag, size = 0x4, scoped, tag = 'scoped memory for tpu_custom_call.1']
    #allocation26 [shape = 'u8[512]{0}', space=vmem, size = 0x400, scoped, tag = 'input window, operand 12, single buffered']
    #allocation27 [shape = 'u8[8192]{0}', space=vmem, size = 0x2000, scoped, tag = 'input window, operand 13, single buffered']
    #allocation28 [shape = 's32[1]{0}', space=sflag, size = 0x4, scoped, tag = 'scoped memory for tpu_custom_call.1']
    #allocation29 [shape = 'u8[512]{0}', space=vmem, size = 0x400, scoped, tag = 'input window, operand 14, single buffered']
    #allocation30 [shape = 'u8[8192]{0}', space=vmem, size = 0x2000, scoped, tag = 'input window, operand 15, single buffered']
    #allocation31 [shape = 's32[1]{0}', space=sflag, size = 0x4, scoped, tag = 'scoped memory for tpu_custom_call.1']
    #allocation32 [shape = 'u8[512]{0}', space=vmem, size = 0x400, scoped, tag = 'input window, operand 16, single buffered']
    #allocation33 [shape = 'u8[8192]{0}', space=vmem, size = 0x2000, scoped, tag = 'input window, operand 17, single buffered']
    #allocation34 [shape = 's32[1]{0}', space=sflag, size = 0x4, scoped, tag = 'scoped memory for tpu_custom_call.1']
    #allocation35 [shape = 'u8[512]{0}', space=vmem, size = 0x400, scoped, tag = 'input window, operand 18, single buffered']
    #allocation36 [shape = 'u8[16384]{0}', space=vmem, size = 0x4000, scoped, tag = 'input window, operand 19, single buffered']
    #allocation37 [shape = 's32[1]{0}', space=sflag, size = 0x4, scoped, tag = 'scoped memory for tpu_custom_call.1']
    #allocation38 [shape = 'u8[512]{0}', space=vmem, size = 0x400, scoped, tag = 'input window, operand 20, single buffered']
    #allocation39 [shape = 'u8[8192]{0}', space=vmem, size = 0x2000, scoped, tag = 'output window, operand 0']
    %26 = vsyncpa [#allocation7], 0
    %s27 = scalar_lea.sflag [#allocation7], 1
    %28 = vsyncpa %s27, 0
    %29 = vsyncpa [#allocation10], 0
    %s30 = scalar_lea.sflag [#allocation10], 1
    %31 = vsyncpa %s30, 0
    %32 = vsyncpa [#allocation13], 0
    %s33 = scalar_lea.sflag [#allocation13], 1
    %34 = vsyncpa %s33, 0
    %35 = vsyncpa [#allocation16], 0
    %36 = vsyncpa [#allocation19], 0
    %37 = vsyncpa [#allocation22], 0
    %38 = vsyncpa [#allocation25], 0
    %39 = vsyncpa [#allocation28], 0
    %40 = vsyncpa [#allocation31], 0
    %41 = vsyncpa [#allocation34], 0
    %42 = vsyncpa [#allocation37], 0
    %43 = vsyncpa [#allocation8], 0
    %s44 = scalar_lea.sflag [#allocation8], 1
    %45 = vsyncpa %s44, 0
    loop: start=0, step=1, limit=6
    $region2: #{tpu_custom_call.1} parent=1 // loop_pre_header
      _
    $region3: #{tpu_custom_call.1} parent=1 // loop_header
      %s47 = sphi 0, %s51
      %p48 = scmp.ge.s32.totalorder %s47, 6
      %s54 = sphi 0, %s66
      %s55 = sphi 0, %s62
      %s56 = sphi 0, %s54
      %s57 = sphi 0, %s55
      %s58 = sphi 0, %s56
      %s59 = sphi 0, %s57
      %s69 = sphi 0, %s71
      %s72 = sphi 0, %s69
      %s73 = sphi 0, %s72
      %s89 = sphi 0, %s73
      %s97 = sphi 0, %s99
      %s100 = sphi 0, %s97
      %s101 = sphi 0, %s100
      %s117 = sphi 0, %s101
      %s123 = sphi 0, %s125
      %s126 = sphi 0, %s123
      %s127 = sphi 0, %s126
      %s143 = sphi 0, %s127
      %s151 = sphi 0, %s153
      %s154 = sphi 0, %s151
      %s155 = sphi 0, %s154
      %s171 = sphi 0, %s155
      %s177 = sphi 0, %s179
      %s180 = sphi 0, %s177
      %s181 = sphi 0, %s180
      %s197 = sphi 0, %s181
      %s201 = sphi 0, %s201
      %s203 = sphi 0, %s201
      %s204 = sphi 0, %s203
      %s218 = sphi 0, %s204
      %s222 = sphi 0, %s222
      %s224 = sphi 0, %s222
      %s225 = sphi 0, %s224
      %s239 = sphi 0, %s225
      %s243 = sphi 0, %s243
      %s245 = sphi 0, %s243
      %s246 = sphi 0, %s245
      %s260 = sphi 0, %s246
      %s264 = sphi 0, %s264
      %s266 = sphi 0, %s264
      %s267 = sphi 0, %s266
      %s281 = sphi 0, %s267
      %s285 = sphi 0, %s285
      %s287 = sphi 0, %s285
      %s288 = sphi 0, %s287
      %s302 = sphi 0, %s288
      %s306 = sphi 0, %s306
      %s308 = sphi 0, %s306
      %s309 = sphi 0, %s308
      %s323 = sphi 0, %s309
      %s327 = sphi 0, %s327
      %s329 = sphi 0, %s327
      %s330 = sphi 0, %s329
      %s344 = sphi 0, %s330
      %s348 = sphi 0, %s348
      %s350 = sphi 0, %s348
      %s351 = sphi 0, %s350
      %s365 = sphi 0, %s351
      %s369 = sphi 0, %s369
      %s371 = sphi 0, %s369
      %s372 = sphi 0, %s371
      %s386 = sphi 0, %s372
      %s390 = sphi 0, %s390
      %s392 = sphi 0, %s390
      %s393 = sphi 0, %s392
      %s407 = sphi 0, %s393
      %s411 = sphi 0, %s411
      %s413 = sphi 0, %s411
      %s414 = sphi 0, %s413
      %s428 = sphi 0, %s414
      %s432 = sphi 0, %s432
      %s434 = sphi 0, %s432
      %s435 = sphi 0, %s434
      %s449 = sphi 0, %s435
      %s453 = sphi 0, %s453
      %s455 = sphi 0, %s453
      %s456 = sphi 0, %s455
      %s470 = sphi 0, %s456
      %s474 = sphi 0, %s474
      %s476 = sphi 0, %s474
      %s477 = sphi 0, %s476
      %s491 = sphi 0, %s477
      %s495 = sphi 0, %s495
      %s497 = sphi 0, %s495
      %s498 = sphi 0, %s497
      %s512 = sphi 0, %s498
      %s516 = sphi 0, %s516
      %s518 = sphi 0, %s516
      %s519 = sphi 0, %s518
      %s533 = sphi 0, %s519
      %s541 = sphi 0, %s543
      %s544 = sphi 0, %s541
      %s545 = sphi 0, %s544
      %s561 = sphi 0, %s545
    $region4: #{tpu_custom_call.1} parent=1 // loop_header_branch
      %50 = sbr.rel (%p48) target = $region8
    $region5: #{tpu_custom_call.1} parent=1 // loop_body
      %s52 = ssub.s32 %s47, 1
      %s53 = ssub.s32 %s47, 2
      %s60 = sadd.s32 1, %s55
      %p61 = scmp.ge.s32.totalorder %s60, 2
      %s62 = scalar_select %p61, 0, %s60
      %s63 = sadd.s32 1, %s54
      %s64 = scalar_select %p61, %s63, %s54
      %p65 = scmp.ge.s32.totalorder %s64, 2
      %s66 = scalar_select %p65, 0, %s64
      %s67 = ssub.s32 %s54, %s66
      %p68 = scmp.eq.s32.totalorder %s67, 0
      %s70 = sadd.s32 %s69, 1
      %s71 = scalar_select %p68, %s69, %s70
      %p74 = pneg %p68
      %p75 = scmp.eq.s32.totalorder %s47, 3
      %p76 = por %p74, %p75
      %p77 = scmp.ne.s32.totalorder %s69, %s72
      %p78 = scmp.eq.s32.totalorder %s47, 0
      %p79 = por %p77, %p78
      %p80 = scmp.ne.s32.totalorder %s69, %s72
      %p81 = scmp.eq.s32.totalorder %s52, 3
      %p82 = por %p80, %p81
      %p83 = scmp.ne.s32.totalorder %s72, %s73
      %p84 = scmp.eq.s32.totalorder %s52, 0
      %p85 = por %p83, %p84
      %p86 = scmp.ne.s32.totalorder %s72, %s73
      %p87 = scmp.eq.s32.totalorder %s53, 3
      %p88 = por %p86, %p87
      %p90 = scmp.ne.s32.totalorder %s73, %s89
      %p91 = scmp.eq.s32.totalorder %s53, 0
      %p92 = por %p90, %p91
      %s93 = ssub.s32 %s54, %s66
      %s94 = ssub.s32 %s55, %s62
      %s95 = sor.u32 %s93, %s94
      %p96 = scmp.eq.s32.totalorder %s95, 0
      %s98 = sadd.s32 %s97, 1
      %s99 = scalar_select %p96, %s97, %s98
      %p102 = pneg %p96
      %p103 = scmp.eq.s32.totalorder %s47, 3
      %p104 = por %p102, %p103
      %p105 = scmp.ne.s32.totalorder %s97, %s100
      %p106 = scmp.eq.s32.totalorder %s47, 0
      %p107 = por %p105, %p106
      %p108 = scmp.ne.s32.totalorder %s97, %s100
      %p109 = scmp.eq.s32.totalorder %s52, 3
      %p110 = por %p108, %p109
      %p111 = scmp.ne.s32.totalorder %s100, %s101
      %p112 = scmp.eq.s32.totalorder %s52, 0
      %p113 = por %p111, %p112
      %p114 = scmp.ne.s32.totalorder %s100, %s101
      %p115 = scmp.eq.s32.totalorder %s53, 3
      %p116 = por %p114, %p115
      %p118 = scmp.ne.s32.totalorder %s101, %s117
      %p119 = scmp.eq.s32.totalorder %s53, 0
      %p120 = por %p118, %p119
      %s121 = ssub.s32 %s54, %s66
      %p122 = scmp.eq.s32.totalorder %s121, 0
      %s124 = sadd.s32 %s123, 1
      %s125 = scalar_select %p122, %s123, %s124
      %p128 = pneg %p122
      %p129 = scmp.eq.s32.totalorder %s47, 3
      %p130 = por %p128, %p129
      %p131 = scmp.ne.s32.totalorder %s123, %s126
      %p132 = scmp.eq.s32.totalorder %s47, 0
      %p133 = por %p131, %p132
      %p134 = scmp.ne.s32.totalorder %s123, %s126
      %p135 = scmp.eq.s32.totalorder %s52, 3
      %p136 = por %p134, %p135
      %p137 = scmp.ne.s32.totalorder %s126, %s127
      %p138 = scmp.eq.s32.totalorder %s52, 0
      %p139 = por %p137, %p138
      %p140 = scmp.ne.s32.totalorder %s126, %s127
      %p141 = scmp.eq.s32.totalorder %s53, 3
      %p142 = por %p140, %p141
      %p144 = scmp.ne.s32.totalorder %s127, %s143
      %p145 = scmp.eq.s32.totalorder %s53, 0
      %p146 = por %p144, %p145
      %s147 = ssub.s32 %s54, %s66
      %s148 = ssub.s32 %s55, %s62
      %s149 = sor.u32 %s147, %s148
      %p150 = scmp.eq.s32.totalorder %s149, 0
      %s152 = sadd.s32 %s151, 1
      %s153 = scalar_select %p150, %s151, %s152
      %p156 = pneg %p150
      %p157 = scmp.eq.s32.totalorder %s47, 3
      %p158 = por %p156, %p157
      %p159 = scmp.ne.s32.totalorder %s151, %s154
      %p160 = scmp.eq.s32.totalorder %s47, 0
      %p161 = por %p159, %p160
      %p162 = scmp.ne.s32.totalorder %s151, %s154
      %p163 = scmp.eq.s32.totalorder %s52, 3
      %p164 = por %p162, %p163
      %p165 = scmp.ne.s32.totalorder %s154, %s155
      %p166 = scmp.eq.s32.totalorder %s52, 0
      %p167 = por %p165, %p166
      %p168 = scmp.ne.s32.totalorder %s154, %s155
      %p169 = scmp.eq.s32.totalorder %s53, 3
      %p170 = por %p168, %p169
      %p172 = scmp.ne.s32.totalorder %s155, %s171
      %p173 = scmp.eq.s32.totalorder %s53, 0
      %p174 = por %p172, %p173
      %s175 = ssub.s32 %s54, %s66
      %p176 = scmp.eq.s32.totalorder %s175, 0
      %s178 = sadd.s32 %s177, 1
      %s179 = scalar_select %p176, %s177, %s178
      %p182 = pneg %p176
      %p183 = scmp.eq.s32.totalorder %s47, 3
      %p184 = por %p182, %p183
      %p185 = scmp.ne.s32.totalorder %s177, %s180
      %p186 = scmp.eq.s32.totalorder %s47, 0
      %p187 = por %p185, %p186
      %p188 = scmp.ne.s32.totalorder %s177, %s180
      %p189 = scmp.eq.s32.totalorder %s52, 3
      %p190 = por %p188, %p189
      %p191 = scmp.ne.s32.totalorder %s180, %s181
      %p192 = scmp.eq.s32.totalorder %s52, 0
      %p193 = por %p191, %p192
      %p194 = scmp.ne.s32.totalorder %s180, %s181
      %p195 = scmp.eq.s32.totalorder %s53, 3
      %p196 = por %p194, %p195
      %p198 = scmp.ne.s32.totalorder %s181, %s197
      %p199 = scmp.eq.s32.totalorder %s53, 0
      %p200 = por %p198, %p199
      %s202 = sadd.s32 %s201, 1
      %p205 = scmp.eq.s32.totalorder %s47, 3
      %p206 = scmp.ne.s32.totalorder %s201, %s203
      %p207 = scmp.eq.s32.totalorder %s47, 0
      %p208 = por %p206, %p207
      %p209 = scmp.ne.s32.totalorder %s201, %s203
      %p210 = scmp.eq.s32.totalorder %s52, 3
      %p211 = por %p209, %p210
      %p212 = scmp.ne.s32.totalorder %s203, %s204
      %p213 = scmp.eq.s32.totalorder %s52, 0
      %p214 = por %p212, %p213
      %p215 = scmp.ne.s32.totalorder %s203, %s204
      %p216 = scmp.eq.s32.totalorder %s53, 3
      %p217 = por %p215, %p216
      %p219 = scmp.ne.s32.totalorder %s204, %s218
      %p220 = scmp.eq.s32.totalorder %s53, 0
      %p221 = por %p219, %p220
      %s223 = sadd.s32 %s222, 1
      %p226 = scmp.eq.s32.totalorder %s47, 3
      %p227 = scmp.ne.s32.totalorder %s222, %s224
      %p228 = scmp.eq.s32.totalorder %s47, 0
      %p229 = por %p227, %p228
      %p230 = scmp.ne.s32.totalorder %s222, %s224
      %p231 = scmp.eq.s32.totalorder %s52, 3
      %p232 = por %p230, %p231
      %p233 = scmp.ne.s32.totalorder %s224, %s225
      %p234 = scmp.eq.s32.totalorder %s52, 0
      %p235 = por %p233, %p234
      %p236 = scmp.ne.s32.totalorder %s224, %s225
      %p237 = scmp.eq.s32.totalorder %s53, 3
      %p238 = por %p236, %p237
      %p240 = scmp.ne.s32.totalorder %s225, %s239
      %p241 = scmp.eq.s32.totalorder %s53, 0
      %p242 = por %p240, %p241
      %s244 = sadd.s32 %s243, 1
      %p247 = scmp.eq.s32.totalorder %s47, 3
      %p248 = scmp.ne.s32.totalorder %s243, %s245
      %p249 = scmp.eq.s32.totalorder %s47, 0
      %p250 = por %p248, %p249
      %p251 = scmp.ne.s32.totalorder %s243, %s245
      %p252 = scmp.eq.s32.totalorder %s52, 3
      %p253 = por %p251, %p252
      %p254 = scmp.ne.s32.totalorder %s245, %s246
      %p255 = scmp.eq.s32.totalorder %s52, 0
      %p256 = por %p254, %p255
      %p257 = scmp.ne.s32.totalorder %s245, %s246
      %p258 = scmp.eq.s32.totalorder %s53, 3
      %p259 = por %p257, %p258
      %p261 = scmp.ne.s32.totalorder %s246, %s260
      %p262 = scmp.eq.s32.totalorder %s53, 0
      %p263 = por %p261, %p262
      %s265 = sadd.s32 %s264, 1
      %p268 = scmp.eq.s32.totalorder %s47, 3
      %p269 = scmp.ne.s32.totalorder %s264, %s266
      %p270 = scmp.eq.s32.totalorder %s47, 0
      %p271 = por %p269, %p270
      %p272 = scmp.ne.s32.totalorder %s264, %s266
      %p273 = scmp.eq.s32.totalorder %s52, 3
      %p274 = por %p272, %p273
      %p275 = scmp.ne.s32.totalorder %s266, %s267
      %p276 = scmp.eq.s32.totalorder %s52, 0
      %p277 = por %p275, %p276
      %p278 = scmp.ne.s32.totalorder %s266, %s267
      %p279 = scmp.eq.s32.totalorder %s53, 3
      %p280 = por %p278, %p279
      %p282 = scmp.ne.s32.totalorder %s267, %s281
      %p283 = scmp.eq.s32.totalorder %s53, 0
      %p284 = por %p282, %p283
      %s286 = sadd.s32 %s285, 1
      %p289 = scmp.eq.s32.totalorder %s47, 3
      %p290 = scmp.ne.s32.totalorder %s285, %s287
      %p291 = scmp.eq.s32.totalorder %s47, 0
      %p292 = por %p290, %p291
      %p293 = scmp.ne.s32.totalorder %s285, %s287
      %p294 = scmp.eq.s32.totalorder %s52, 3
      %p295 = por %p293, %p294
      %p296 = scmp.ne.s32.totalorder %s287, %s288
      %p297 = scmp.eq.s32.totalorder %s52, 0
      %p298 = por %p296, %p297
      %p299 = scmp.ne.s32.totalorder %s287, %s288
      %p300 = scmp.eq.s32.totalorder %s53, 3
      %p301 = por %p299, %p300
      %p303 = scmp.ne.s32.totalorder %s288, %s302
      %p304 = scmp.eq.s32.totalorder %s53, 0
      %p305 = por %p303, %p304
      %s307 = sadd.s32 %s306, 1
      %p310 = scmp.eq.s32.totalorder %s47, 3
      %p311 = scmp.ne.s32.totalorder %s306, %s308
      %p312 = scmp.eq.s32.totalorder %s47, 0
      %p313 = por %p311, %p312
      %p314 = scmp.ne.s32.totalorder %s306, %s308
      %p315 = scmp.eq.s32.totalorder %s52, 3
      %p316 = por %p314, %p315
      %p317 = scmp.ne.s32.totalorder %s308, %s309
      %p318 = scmp.eq.s32.totalorder %s52, 0
      %p319 = por %p317, %p318
      %p320 = scmp.ne.s32.totalorder %s308, %s309
      %p321 = scmp.eq.s32.totalorder %s53, 3
      %p322 = por %p320, %p321
      %p324 = scmp.ne.s32.totalorder %s309, %s323
      %p325 = scmp.eq.s32.totalorder %s53, 0
      %p326 = por %p324, %p325
      %s328 = sadd.s32 %s327, 1
      %p331 = scmp.eq.s32.totalorder %s47, 3
      %p332 = scmp.ne.s32.totalorder %s327, %s329
      %p333 = scmp.eq.s32.totalorder %s47, 0
      %p334 = por %p332, %p333
      %p335 = scmp.ne.s32.totalorder %s327, %s329
      %p336 = scmp.eq.s32.totalorder %s52, 3
      %p337 = por %p335, %p336
      %p338 = scmp.ne.s32.totalorder %s329, %s330
      %p339 = scmp.eq.s32.totalorder %s52, 0
      %p340 = por %p338, %p339
      %p341 = scmp.ne.s32.totalorder %s329, %s330
      %p342 = scmp.eq.s32.totalorder %s53, 3
      %p343 = por %p341, %p342
      %p345 = scmp.ne.s32.totalorder %s330, %s344
      %p346 = scmp.eq.s32.totalorder %s53, 0
      %p347 = por %p345, %p346
      %s349 = sadd.s32 %s348, 1
      %p352 = scmp.eq.s32.totalorder %s47, 3
      %p353 = scmp.ne.s32.totalorder %s348, %s350
      %p354 = scmp.eq.s32.totalorder %s47, 0
      %p355 = por %p353, %p354
      %p356 = scmp.ne.s32.totalorder %s348, %s350
      %p357 = scmp.eq.s32.totalorder %s52, 3
      %p358 = por %p356, %p357
      %p359 = scmp.ne.s32.totalorder %s350, %s351
      %p360 = scmp.eq.s32.totalorder %s52, 0
      %p361 = por %p359, %p360
      %p362 = scmp.ne.s32.totalorder %s350, %s351
      %p363 = scmp.eq.s32.totalorder %s53, 3
      %p364 = por %p362, %p363
      %p366 = scmp.ne.s32.totalorder %s351, %s365
      %p367 = scmp.eq.s32.totalorder %s53, 0
      %p368 = por %p366, %p367
      %s370 = sadd.s32 %s369, 1
      %p373 = scmp.eq.s32.totalorder %s47, 3
      %p374 = scmp.ne.s32.totalorder %s369, %s371
      %p375 = scmp.eq.s32.totalorder %s47, 0
      %p376 = por %p374, %p375
      %p377 = scmp.ne.s32.totalorder %s369, %s371
      %p378 = scmp.eq.s32.totalorder %s52, 3
      %p379 = por %p377, %p378
      %p380 = scmp.ne.s32.totalorder %s371, %s372
      %p381 = scmp.eq.s32.totalorder %s52, 0
      %p382 = por %p380, %p381
      %p383 = scmp.ne.s32.totalorder %s371, %s372
      %p384 = scmp.eq.s32.totalorder %s53, 3
      %p385 = por %p383, %p384
      %p387 = scmp.ne.s32.totalorder %s372, %s386
      %p388 = scmp.eq.s32.totalorder %s53, 0
      %p389 = por %p387, %p388
      %s391 = sadd.s32 %s390, 1
      %p394 = scmp.eq.s32.totalorder %s47, 3
      %p395 = scmp.ne.s32.totalorder %s390, %s392
      %p396 = scmp.eq.s32.totalorder %s47, 0
      %p397 = por %p395, %p396
      %p398 = scmp.ne.s32.totalorder %s390, %s392
      %p399 = scmp.eq.s32.totalorder %s52, 3
      %p400 = por %p398, %p399
      %p401 = scmp.ne.s32.totalorder %s392, %s393
      %p402 = scmp.eq.s32.totalorder %s52, 0
      %p403 = por %p401, %p402
      %p404 = scmp.ne.s32.totalorder %s392, %s393
      %p405 = scmp.eq.s32.totalorder %s53, 3
      %p406 = por %p404, %p405
      %p408 = scmp.ne.s32.totalorder %s393, %s407
      %p409 = scmp.eq.s32.totalorder %s53, 0
      %p410 = por %p408, %p409
      %s412 = sadd.s32 %s411, 1
      %p415 = scmp.eq.s32.totalorder %s47, 3
      %p416 = scmp.ne.s32.totalorder %s411, %s413
      %p417 = scmp.eq.s32.totalorder %s47, 0
      %p418 = por %p416, %p417
      %p419 = scmp.ne.s32.totalorder %s411, %s413
      %p420 = scmp.eq.s32.totalorder %s52, 3
      %p421 = por %p419, %p420
      %p422 = scmp.ne.s32.totalorder %s413, %s414
      %p423 = scmp.eq.s32.totalorder %s52, 0
      %p424 = por %p422, %p423
      %p425 = scmp.ne.s32.totalorder %s413, %s414
      %p426 = scmp.eq.s32.totalorder %s53, 3
      %p427 = por %p425, %p426
      %p429 = scmp.ne.s32.totalorder %s414, %s428
      %p430 = scmp.eq.s32.totalorder %s53, 0
      %p431 = por %p429, %p430
      %s433 = sadd.s32 %s432, 1
      %p436 = scmp.eq.s32.totalorder %s47, 3
      %p437 = scmp.ne.s32.totalorder %s432, %s434
      %p438 = scmp.eq.s32.totalorder %s47, 0
      %p439 = por %p437, %p438
      %p440 = scmp.ne.s32.totalorder %s432, %s434
      %p441 = scmp.eq.s32.totalorder %s52, 3
      %p442 = por %p440, %p441
      %p443 = scmp.ne.s32.totalorder %s434, %s435
      %p444 = scmp.eq.s32.totalorder %s52, 0
      %p445 = por %p443, %p444
      %p446 = scmp.ne.s32.totalorder %s434, %s435
      %p447 = scmp.eq.s32.totalorder %s53, 3
      %p448 = por %p446, %p447
      %p450 = scmp.ne.s32.totalorder %s435, %s449
      %p451 = scmp.eq.s32.totalorder %s53, 0
      %p452 = por %p450, %p451
      %s454 = sadd.s32 %s453, 1
      %p457 = scmp.eq.s32.totalorder %s47, 3
      %p458 = scmp.ne.s32.totalorder %s453, %s455
      %p459 = scmp.eq.s32.totalorder %s47, 0
      %p460 = por %p458, %p459
      %p461 = scmp.ne.s32.totalorder %s453, %s455
      %p462 = scmp.eq.s32.totalorder %s52, 3
      %p463 = por %p461, %p462
      %p464 = scmp.ne.s32.totalorder %s455, %s456
      %p465 = scmp.eq.s32.totalorder %s52, 0
      %p466 = por %p464, %p465
      %p467 = scmp.ne.s32.totalorder %s455, %s456
      %p468 = scmp.eq.s32.totalorder %s53, 3
      %p469 = por %p467, %p468
      %p471 = scmp.ne.s32.totalorder %s456, %s470
      %p472 = scmp.eq.s32.totalorder %s53, 0
      %p473 = por %p471, %p472
      %s475 = sadd.s32 %s474, 1
      %p478 = scmp.eq.s32.totalorder %s47, 3
      %p479 = scmp.ne.s32.totalorder %s474, %s476
      %p480 = scmp.eq.s32.totalorder %s47, 0
      %p481 = por %p479, %p480
      %p482 = scmp.ne.s32.totalorder %s474, %s476
      %p483 = scmp.eq.s32.totalorder %s52, 3
      %p484 = por %p482, %p483
      %p485 = scmp.ne.s32.totalorder %s476, %s477
      %p486 = scmp.eq.s32.totalorder %s52, 0
      %p487 = por %p485, %p486
      %p488 = scmp.ne.s32.totalorder %s476, %s477
      %p489 = scmp.eq.s32.totalorder %s53, 3
      %p490 = por %p488, %p489
      %p492 = scmp.ne.s32.totalorder %s477, %s491
      %p493 = scmp.eq.s32.totalorder %s53, 0
      %p494 = por %p492, %p493
      %s496 = sadd.s32 %s495, 1
      %p499 = scmp.eq.s32.totalorder %s47, 3
      %p500 = scmp.ne.s32.totalorder %s495, %s497
      %p501 = scmp.eq.s32.totalorder %s47, 0
      %p502 = por %p500, %p501
      %p503 = scmp.ne.s32.totalorder %s495, %s497
      %p504 = scmp.eq.s32.totalorder %s52, 3
      %p505 = por %p503, %p504
      %p506 = scmp.ne.s32.totalorder %s497, %s498
      %p507 = scmp.eq.s32.totalorder %s52, 0
      %p508 = por %p506, %p507
      %p509 = scmp.ne.s32.totalorder %s497, %s498
      %p510 = scmp.eq.s32.totalorder %s53, 3
      %p511 = por %p509, %p510
      %p513 = scmp.ne.s32.totalorder %s498, %s512
      %p514 = scmp.eq.s32.totalorder %s53, 0
      %p515 = por %p513, %p514
      %s517 = sadd.s32 %s516, 1
      %p520 = scmp.eq.s32.totalorder %s47, 3
      %p521 = scmp.ne.s32.totalorder %s516, %s518
      %p522 = scmp.eq.s32.totalorder %s47, 0
      %p523 = por %p521, %p522
      %p524 = scmp.ne.s32.totalorder %s516, %s518
      %p525 = scmp.eq.s32.totalorder %s52, 3
      %p526 = por %p524, %p525
      %p527 = scmp.ne.s32.totalorder %s518, %s519
      %p528 = scmp.eq.s32.totalorder %s52, 0
      %p529 = por %p527, %p528
      %p530 = scmp.ne.s32.totalorder %s518, %s519
      %p531 = scmp.eq.s32.totalorder %s53, 3
      %p532 = por %p530, %p531
      %p534 = scmp.ne.s32.totalorder %s519, %s533
      %p535 = scmp.eq.s32.totalorder %s53, 0
      %p536 = por %p534, %p535
      %s537 = ssub.s32 %s54, %s66
      %s538 = ssub.s32 %s55, %s62
      %s539 = sor.u32 %s537, %s538
      %p540 = scmp.eq.s32.totalorder %s539, 0
      %s542 = sadd.s32 %s541, 1
      %s543 = scalar_select %p540, %s541, %s542
      %p546 = pneg %p540
      %p547 = scmp.eq.s32.totalorder %s47, 3
      %p548 = por %p546, %p547
      %p549 = scmp.ne.s32.totalorder %s541, %s544
      %p550 = scmp.eq.s32.totalorder %s47, 0
      %p551 = por %p549, %p550
      %p552 = scmp.ne.s32.totalorder %s541, %s544
      %p553 = scmp.eq.s32.totalorder %s52, 3
      %p554 = por %p552, %p553
      %p555 = scmp.ne.s32.totalorder %s544, %s545
      %p556 = scmp.eq.s32.totalorder %s52, 0
      %p557 = por %p555, %p556
      %p558 = scmp.ne.s32.totalorder %s544, %s545
      %p559 = scmp.eq.s32.totalorder %s53, 3
      %p560 = por %p558, %p559
      %p562 = scmp.ne.s32.totalorder %s545, %s561
      %p563 = scmp.eq.s32.totalorder %s53, 0
      %p564 = por %p562, %p563
      %p565 = scmp.le.s32.totalorder 1, %s47
      %p566 = scmp.lt.s32.totalorder %s47, 5
      %p567 = pnand %p565, %p566
      %p568 = pneg %p567
      // Predicated region
      $region9: #{tpu_custom_call.1} parent=5 // pred_check
        _
      $region10: #{tpu_custom_call.1} parent=5 // pred_check_branch
        %570 = sbr.rel (%p567) target = $region12
      $region11: #{tpu_custom_call.1} parent=5 // pred_region
        %s571 = ssub.s32 %s47, 1
        // Predicated region
        $region13: #{tpu_custom_call.1} parent=11 // pred_check
          %p572 = pneg %p214
        $region14: #{tpu_custom_call.1} parent=11 // pred_check_branch
          %574 = sbr.rel (%p572) target = $region16
        $region15: #{tpu_custom_call.1} parent=11 // pred_region
          %s576 = ssub.s32 16, 16
          %577 = vsyncadd [#allocation16], %s576
          %s579 = sshll.u32 [#allocation15], 4
          %s580 = int_to_ptr.vmem [resolvable:$true] %s579
          %582 = dma.hbm_to_vmem [thread:$0]  %s5, 16, %s580, [#allocation16]
        $region16: #{tpu_custom_call.1} parent=11 // pred_fallthru
          _
        // Predicated region
        $region17: #{tpu_custom_call.1} parent=11 // pred_check
          %p583 = pneg %p235
        $region18: #{tpu_custom_call.1} parent=11 // pred_check_branch
          %585 = sbr.rel (%p583) target = $region20
        $region19: #{tpu_custom_call.1} parent=11 // pred_region
          %s587 = ssub.s32 16, 16
          %588 = vsyncadd [#allocation16], %s587
          %s590 = sshll.u32 [#allocation17], 4
          %s591 = int_to_ptr.vmem [resolvable:$true] %s590
          %593 = dma.hbm_to_vmem [thread:$0]  %s6, 16, %s591, [#allocation16]
        $region20: #{tpu_custom_call.1} parent=11 // pred_fallthru
          _
        // Predicated region
        $region21: #{tpu_custom_call.1} parent=11 // pred_check
          %p594 = pneg %p256
        $region22: #{tpu_custom_call.1} parent=11 // pred_check_branch
          %596 = sbr.rel (%p594) target = $region24
        $region23: #{tpu_custom_call.1} parent=11 // pred_region
          %s598 = ssub.s32 16, 16
          %599 = vsyncadd [#allocation19], %s598
          %s601 = sshll.u32 [#allocation18], 4
          %s602 = int_to_ptr.vmem [resolvable:$true] %s601
          %604 = dma.hbm_to_vmem [thread:$0]  %s7, 16, %s602, [#allocation19]
        $region24: #{tpu_custom_call.1} parent=11 // pred_fallthru
          _
        // Predicated region
        $region25: #{tpu_custom_call.1} parent=11 // pred_check
          %p605 = pneg %p277
        $region26: #{tpu_custom_call.1} parent=11 // pred_check_branch
          %607 = sbr.rel (%p605) target = $region28
        $region27: #{tpu_custom_call.1} parent=11 // pred_region
          %s609 = ssub.s32 16, 16
          %610 = vsyncadd [#allocation19], %s609
          %s612 = sshll.u32 [#allocation20], 4
          %s613 = int_to_ptr.vmem [resolvable:$true] %s612
          %615 = dma.hbm_to_vmem [thread:$0]  %s8, 16, %s613, [#allocation19]
        $region28: #{tpu_custom_call.1} parent=11 // pred_fallthru
          _
        // Predicated region
        $region29: #{tpu_custom_call.1} parent=11 // pred_check
          %p616 = pneg %p298
        $region30: #{tpu_custom_call.1} parent=11 // pred_check_branch
          %618 = sbr.rel (%p616) target = $region32
        $region31: #{tpu_custom_call.1} parent=11 // pred_region
          %s620 = ssub.s32 16, 16
          %621 = vsyncadd [#allocation22], %s620
          %s623 = sshll.u32 [#allocation21], 4
          %s624 = int_to_ptr.vmem [resolvable:$true] %s623
          %626 = dma.hbm_to_vmem [thread:$0]  %s9, 16, %s624, [#allocation22]
        $region32: #{tpu_custom_call.1} parent=11 // pred_fallthru
          _
        // Predicated region
        $region33: #{tpu_custom_call.1} parent=11 // pred_check
          %p627 = pneg %p319
        $region34: #{tpu_custom_call.1} parent=11 // pred_check_branch
          %629 = sbr.rel (%p627) target = $region36
        $region35: #{tpu_custom_call.1} parent=11 // pred_region
          %s631 = ssub.s32 16, 16
          %632 = vsyncadd [#allocation22], %s631
          %s634 = sshll.u32 [#allocation23], 4
          %s635 = int_to_ptr.vmem [resolvable:$true] %s634
          %637 = dma.hbm_to_vmem [thread:$0]  %s10, 16, %s635, [#allocation22]
        $region36: #{tpu_custom_call.1} parent=11 // pred_fallthru
          _
        // Predicated region
        $region37: #{tpu_custom_call.1} parent=11 // pred_check
          %p638 = pneg %p340
        $region38: #{tpu_custom_call.1} parent=11 // pred_check_branch
          %640 = sbr.rel (%p638) target = $region40
        $region39: #{tpu_custom_call.1} parent=11 // pred_region
          %s642 = ssub.s32 256, 256
          %643 = vsyncadd [#allocation25], %s642
          %s644 = sshll.u32 [#allocation24], 4
          %s645 = int_to_ptr.vmem [resolvable:$true] %s644
          %650 = dma.hbm_to_vmem [thread:$0]  %s11, 256, %s645, [#allocation25], 64, 64, 4
        $region40: #{tpu_custom_call.1} parent=11 // pred_fallthru
          _
        // Predicated region
        $region41: #{tpu_custom_call.1} parent=11 // pred_check
          %p651 = pneg %p361
        $region42: #{tpu_custom_call.1} parent=11 // pred_check_branch
          %653 = sbr.rel (%p651) target = $region44
        $region43: #{tpu_custom_call.1} parent=11 // pred_region
          %s655 = ssub.s32 16, 16
          %656 = vsyncadd [#allocation25], %s655
          %s658 = sshll.u32 [#allocation26], 4
          %s659 = int_to_ptr.vmem [resolvable:$true] %s658
          %661 = dma.hbm_to_vmem [thread:$0]  %s12, 16, %s659, [#allocation25]
        $region44: #{tpu_custom_call.1} parent=11 // pred_fallthru
          _
        // Predicated region
        $region45: #{tpu_custom_call.1} parent=11 // pred_check
          %p662 = pneg %p382
        $region46: #{tpu_custom_call.1} parent=11 // pred_check_branch
          %664 = sbr.rel (%p662) target = $region48
        $region47: #{tpu_custom_call.1} parent=11 // pred_region
          %s666 = ssub.s32 256, 256
          %667 = vsyncadd [#allocation28], %s666
          %s668 = sshll.u32 [#allocation27], 4
          %s669 = int_to_ptr.vmem [resolvable:$true] %s668
          %674 = dma.hbm_to_vmem [thread:$0]  %s13, 256, %s669, [#allocation28], 64, 64, 4
        $region48: #{tpu_custom_call.1} parent=11 // pred_fallthru
          _
        // Predicated region
        $region49: #{tpu_custom_call.1} parent=11 // pred_check
          %p675 = pneg %p403
        $region50: #{tpu_custom_call.1} parent=11 // pred_check_branch
          %677 = sbr.rel (%p675) target = $region52
        $region51: #{tpu_custom_call.1} parent=11 // pred_region
          %s679 = ssub.s32 16, 16
          %680 = vsyncadd [#allocation28], %s679
          %s682 = sshll.u32 [#allocation29], 4
          %s683 = int_to_ptr.vmem [resolvable:$true] %s682
          %685 = dma.hbm_to_vmem [thread:$0]  %s14, 16, %s683, [#allocation28]
        $region52: #{tpu_custom_call.1} parent=11 // pred_fallthru
          _
        // Predicated region
        $region53: #{tpu_custom_call.1} parent=11 // pred_check
          %p686 = pneg %p424
        $region54: #{tpu_custom_call.1} parent=11 // pred_check_branch
          %688 = sbr.rel (%p686) target = $region56
        $region55: #{tpu_custom_call.1} parent=11 // pred_region
          %s690 = ssub.s32 256, 256
          %691 = vsyncadd [#allocation31], %s690
          %s692 = sshll.u32 [#allocation30], 4
          %s693 = int_to_ptr.vmem [resolvable:$true] %s692
          %698 = dma.hbm_to_vmem [thread:$0]  %s15, 256, %s693, [#allocation31], 64, 64, 4
        $region56: #{tpu_custom_call.1} parent=11 // pred_fallthru
          _
        // Predicated region
        $region57: #{tpu_custom_call.1} parent=11 // pred_check
          %p699 = pneg %p445
        $region58: #{tpu_custom_call.1} parent=11 // pred_check_branch
          %701 = sbr.rel (%p699) target = $region60
        $region59: #{tpu_custom_call.1} parent=11 // pred_region
          %s703 = ssub.s32 16, 16
          %704 = vsyncadd [#allocation31], %s703
          %s706 = sshll.u32 [#allocation32], 4
          %s707 = int_to_ptr.vmem [resolvable:$true] %s706
          %709 = dma.hbm_to_vmem [thread:$0]  %s16, 16, %s707, [#allocation31]
        $region60: #{tpu_custom_call.1} parent=11 // pred_fallthru
          _
        // Predicated region
        $region61: #{tpu_custom_call.1} parent=11 // pred_check
          %p710 = pneg %p466
        $region62: #{tpu_custom_call.1} parent=11 // pred_check_branch
          %712 = sbr.rel (%p710) target = $region64
        $region63: #{tpu_custom_call.1} parent=11 // pred_region
          %s714 = ssub.s32 256, 256
          %715 = vsyncadd [#allocation34], %s714
          %s716 = sshll.u32 [#allocation33], 4
          %s717 = int_to_ptr.vmem [resolvable:$true] %s716
          %722 = dma.hbm_to_vmem [thread:$0]  %s17, 256, %s717, [#allocation34], 64, 64, 4
        $region64: #{tpu_custom_call.1} parent=11 // pred_fallthru
          _
        // Predicated region
        $region65: #{tpu_custom_call.1} parent=11 // pred_check
          %p723 = pneg %p487
        $region66: #{tpu_custom_call.1} parent=11 // pred_check_branch
          %725 = sbr.rel (%p723) target = $region68
        $region67: #{tpu_custom_call.1} parent=11 // pred_region
          %s727 = ssub.s32 16, 16
          %728 = vsyncadd [#allocation34], %s727
          %s730 = sshll.u32 [#allocation35], 4
          %s731 = int_to_ptr.vmem [resolvable:$true] %s730
          %733 = dma.hbm_to_vmem [thread:$0]  %s18, 16, %s731, [#allocation34]
        $region68: #{tpu_custom_call.1} parent=11 // pred_fallthru
          _
        // Predicated region
        $region69: #{tpu_custom_call.1} parent=11 // pred_check
          %p734 = pneg %p508
        $region70: #{tpu_custom_call.1} parent=11 // pred_check_branch
          %736 = sbr.rel (%p734) target = $region72
        $region71: #{tpu_custom_call.1} parent=11 // pred_region
          %s738 = ssub.s32 512, 512
          %739 = vsyncadd [#allocation37], %s738
          %s740 = sshll.u32 [#allocation36], 4
          %s741 = int_to_ptr.vmem [resolvable:$true] %s740
          %746 = dma.hbm_to_vmem [thread:$0]  %s19, 512, %s741, [#allocation37], 64, 64, 4
        $region72: #{tpu_custom_call.1} parent=11 // pred_fallthru
          _
        // Predicated region
        $region73: #{tpu_custom_call.1} parent=11 // pred_check
          %p747 = pneg %p529
        $region74: #{tpu_custom_call.1} parent=11 // pred_check_branch
          %749 = sbr.rel (%p747) target = $region76
        $region75: #{tpu_custom_call.1} parent=11 // pred_region
          %s751 = ssub.s32 16, 16
          %752 = vsyncadd [#allocation37], %s751
          %s754 = sshll.u32 [#allocation38], 4
          %s755 = int_to_ptr.vmem [resolvable:$true] %s754
          %757 = dma.hbm_to_vmem [thread:$0]  %s20, 16, %s755, [#allocation37]
        $region76: #{tpu_custom_call.1} parent=11 // pred_fallthru
          _
      $region12: #{tpu_custom_call.1} parent=5 // pred_fallthru
        _
      %p758 = scmp.lt.s32.totalorder %s47, 4
      // Predicated region
      $region77: #{tpu_custom_call.1} parent=5 // pred_check
        %p759 = pneg %p758
      $region78: #{tpu_custom_call.1} parent=5 // pred_check_branch
        %761 = sbr.rel (%p759) target = $region80
      $region79: #{tpu_custom_call.1} parent=5 // pred_region
        // Predicated region
        $region81: #{tpu_custom_call.1} parent=79 // pred_check
          %p762 = pneg %p79
        $region82: #{tpu_custom_call.1} parent=79 // pred_check_branch
          %764 = sbr.rel (%p762) target = $region84
        $region83: #{tpu_custom_call.1} parent=79 // pred_region
          %s765 = sand.u32 %s69, 1
          %s766 = scalar_lea.sflag [#allocation7], %s765
          %s767 = sand.u32 %s69, 1
          %s768 = smul.addr %s767, 16
          %s769 = scalar_lea.vmem [#allocation6], %s768
          %s771 = ssub.s32 256, 256
          %772 = vsyncadd %s766, %s771
          %s773 = smul.addr %s54, 2
          %s774 = smul.addr %s773, 128
          %s775 = scalar_lea.hbm %s0, %s774
          %s776 = sshll.u32 %s769, 4
          %s777 = int_to_ptr.vmem [resolvable:$true] %s776
          %782 = dma.hbm_to_vmem [thread:$0]  %s775, 256, %s777, %s766, 128, 128, 8
        $region84: #{tpu_custom_call.1} parent=79 // pred_fallthru
          _
        // Predicated region
        $region85: #{tpu_custom_call.1} parent=79 // pred_check
          %p783 = pneg %p107
        $region86: #{tpu_custom_call.1} parent=79 // pred_check_branch
          %785 = sbr.rel (%p783) target = $region88
        $region87: #{tpu_custom_call.1} parent=79 // pred_region
          %s786 = sand.u32 %s47, 1
          %s787 = scalar_lea.sflag [#allocation10], %s786
          %s788 = sand.u32 %s97, 1
          %s789 = smul.addr %s788, 8
          %s790 = scalar_lea.vmem [#allocation9], %s789
          %s792 = ssub.s32 128, 128
          %793 = vsyncadd %s787, %s792
          %s794 = smul.addr %s54, 2
          %s795 = sadd.s32 %s55, %s794
          %s796 = smul.addr %s795, 128
          %s797 = scalar_lea.hbm %s1, %s796
          %s799 = sshll.u32 %s790, 4
          %s800 = int_to_ptr.vmem [resolvable:$true] %s799
          %802 = dma.hbm_to_vmem [thread:$0]  %s797, 128, %s800, %s787
        $region88: #{tpu_custom_call.1} parent=79 // pred_fallthru
          _
        // Predicated region
        $region89: #{tpu_custom_call.1} parent=79 // pred_check
          %p803 = pneg %p133
        $region90: #{tpu_custom_call.1} parent=79 // pred_check_branch
          %805 = sbr.rel (%p803) target = $region92
        $region91: #{tpu_custom_call.1} parent=79 // pred_region
          %s806 = sand.u32 %s47, 1
          %s807 = scalar_lea.sflag [#allocation10], %s806
          %s808 = sand.u32 %s123, 1
          %s809 = smul.addr %s808, 24
          %s810 = scalar_lea.vmem [#allocation11], %s809
          %s812 = ssub.s32 384, 384
          %813 = vsyncadd %s807, %s812
          %s814 = smul.addr %s54, 3
          %s815 = smul.addr %s814, 128
          %s816 = scalar_lea.hbm %s2, %s815
          %s817 = sshll.u32 %s810, 4
          %s818 = int_to_ptr.vmem [resolvable:$true] %s817
          %823 = dma.hbm_to_vmem [thread:$0]  %s816, 384, %s818, %s807, 128, 128, 8
        $region92: #{tpu_custom_call.1} parent=79 // pred_fallthru
          _
        // Predicated region
        $region93: #{tpu_custom_call.1} parent=79 // pred_check
          %p824 = pneg %p161
        $region94: #{tpu_custom_call.1} parent=79 // pred_check_branch
          %826 = sbr.rel (%p824) target = $region96
        $region95: #{tpu_custom_call.1} parent=79 // pred_region
          %s827 = sand.u32 %s47, 1
          %s828 = scalar_lea.sflag [#allocation13], %s827
          %s829 = sand.u32 %s151, 1
          %s830 = smul.addr %s829, 8
          %s831 = scalar_lea.vmem [#allocation12], %s830
          %s833 = ssub.s32 128, 128
          %834 = vsyncadd %s828, %s833
          %s835 = smul.addr %s54, 2
          %s836 = sadd.s32 %s55, %s835
          %s837 = smul.addr %s836, 128
          %s838 = scalar_lea.hbm %s3, %s837
          %s840 = sshll.u32 %s831, 4
          %s841 = int_to_ptr.vmem [resolvable:$true] %s840
          %843 = dma.hbm_to_vmem [thread:$0]  %s838, 128, %s841, %s828
        $region96: #{tpu_custom_call.1} parent=79 // pred_fallthru
          _
        // Predicated region
        $region97: #{tpu_custom_call.1} parent=79 // pred_check
          %p844 = pneg %p187
        $region98: #{tpu_custom_call.1} parent=79 // pred_check_branch
          %846 = sbr.rel (%p844) target = $region100
        $region99: #{tpu_custom_call.1} parent=79 // pred_region
          %s847 = sand.u32 %s47, 1
          %s848 = scalar_lea.sflag [#allocation13], %s847
          %s849 = sand.u32 %s177, 1
          %s850 = scalar_lea.vmem [#allocation14], %s849
          %s852 = ssub.s32 16, 16
          %853 = vsyncadd %s848, %s852
          %s854 = smul.addr %s54, 16
          %s855 = scalar_lea.hbm %s4, %s854
          %s857 = sshll.u32 %s850, 4
          %s858 = int_to_ptr.vmem [resolvable:$true] %s857
          %860 = dma.hbm_to_vmem [thread:$0]  %s855, 16, %s858, %s848
        $region100: #{tpu_custom_call.1} parent=79 // pred_fallthru
          _
      $region80: #{tpu_custom_call.1} parent=5 // pred_fallthru
        _
      %p861 = scmp.le.s32.totalorder 1, %s47
      %p862 = scmp.lt.s32.totalorder %s47, 5
      %p863 = pnand %p861, %p862
      %p864 = pneg %p863
      // Predicated region
      $region101: #{tpu_custom_call.1} parent=5 // pred_check
        _
      $region102: #{tpu_custom_call.1} parent=5 // pred_check_branch
        %866 = sbr.rel (%p863) target = $region104
      $region103: #{tpu_custom_call.1} parent=5 // pred_region
        %s867 = ssub.s32 %s47, 1
        %s868 = sand.u32 %s72, 1
        %s869 = scalar_lea.sflag [#allocation7], %s868
        %s870 = sand.u32 %s72, 1
        %s871 = smul.addr %s870, 16
        %s872 = scalar_lea.vmem [#allocation6], %s871
        // Predicated region
        $region105: #{tpu_custom_call.1} parent=103 // pred_check
          %p873 = pneg %p85
        $region106: #{tpu_custom_call.1} parent=103 // pred_check_branch
          %875 = sbr.rel (%p873) target = $region108
        $region107: #{tpu_custom_call.1} parent=103 // pred_region
          %876 = dma.done %s869, 256
        $region108: #{tpu_custom_call.1} parent=103 // pred_fallthru
          _
        %s877 = sand.u32 %s52, 1
        %s878 = scalar_lea.sflag [#allocation10], %s877
        %s879 = sand.u32 %s100, 1
        %s880 = smul.addr %s879, 8
        %s881 = scalar_lea.vmem [#allocation9], %s880
        // Predicated region
        $region109: #{tpu_custom_call.1} parent=103 // pred_check
          %p882 = pneg %p113
        $region110: #{tpu_custom_call.1} parent=103 // pred_check_branch
          %884 = sbr.rel (%p882) target = $region112
        $region111: #{tpu_custom_call.1} parent=103 // pred_region
          %885 = dma.done %s878, 128
        $region112: #{tpu_custom_call.1} parent=103 // pred_fallthru
          _
        %s886 = sand.u32 %s52, 1
        %s887 = scalar_lea.sflag [#allocation10], %s886
        %s888 = sand.u32 %s126, 1
        %s889 = smul.addr %s888, 24
        %s890 = scalar_lea.vmem [#allocation11], %s889
        // Predicated region
        $region113: #{tpu_custom_call.1} parent=103 // pred_check
          %p891 = pneg %p139
        $region114: #{tpu_custom_call.1} parent=103 // pred_check_branch
          %893 = sbr.rel (%p891) target = $region116
        $region115: #{tpu_custom_call.1} parent=103 // pred_region
          %894 = dma.done %s887, 384
        $region116: #{tpu_custom_call.1} parent=103 // pred_fallthru
          _
        %s895 = sand.u32 %s52, 1
        %s896 = scalar_lea.sflag [#allocation13], %s895
        %s897 = sand.u32 %s154, 1
        %s898 = smul.addr %s897, 8
        %s899 = scalar_lea.vmem [#allocation12], %s898
        // Predicated region
        $region117: #{tpu_custom_call.1} parent=103 // pred_check
          %p900 = pneg %p167
        $region118: #{tpu_custom_call.1} parent=103 // pred_check_branch
          %902 = sbr.rel (%p900) target = $region120
        $region119: #{tpu_custom_call.1} parent=103 // pred_region
          %903 = dma.done %s896, 128
        $region120: #{tpu_custom_call.1} parent=103 // pred_fallthru
          _
        %s904 = sand.u32 %s52, 1
        %s905 = scalar_lea.sflag [#allocation13], %s904
        %s906 = sand.u32 %s180, 1
        %s907 = scalar_lea.vmem [#allocation14], %s906
        // Predicated region
        $region121: #{tpu_custom_call.1} parent=103 // pred_check
          %p908 = pneg %p193
        $region122: #{tpu_custom_call.1} parent=103 // pred_check_branch
          %910 = sbr.rel (%p908) target = $region124
        $region123: #{tpu_custom_call.1} parent=103 // pred_region
          %911 = dma.done %s905, 16
        $region124: #{tpu_custom_call.1} parent=103 // pred_fallthru
          _
        // Predicated region
        $region125: #{tpu_custom_call.1} parent=103 // pred_check
          %p912 = pneg %p214
        $region126: #{tpu_custom_call.1} parent=103 // pred_check_branch
          %914 = sbr.rel (%p912) target = $region128
        $region127: #{tpu_custom_call.1} parent=103 // pred_region
          %915 = dma.done [#allocation16], 16
        $region128: #{tpu_custom_call.1} parent=103 // pred_fallthru
          _
        // Predicated region
        $region129: #{tpu_custom_call.1} parent=103 // pred_check
          %p916 = pneg %p235
        $region130: #{tpu_custom_call.1} parent=103 // pred_check_branch
          %918 = sbr.rel (%p916) target = $region132
        $region131: #{tpu_custom_call.1} parent=103 // pred_region
          %919 = dma.done [#allocation16], 16
        $region132: #{tpu_custom_call.1} parent=103 // pred_fallthru
          _
        // Predicated region
        $region133: #{tpu_custom_call.1} parent=103 // pred_check
          %p920 = pneg %p256
        $region134: #{tpu_custom_call.1} parent=103 // pred_check_branch
          %922 = sbr.rel (%p920) target = $region136
        $region135: #{tpu_custom_call.1} parent=103 // pred_region
          %923 = dma.done [#allocation19], 16
        $region136: #{tpu_custom_call.1} parent=103 // pred_fallthru
          _
        // Predicated region
        $region137: #{tpu_custom_call.1} parent=103 // pred_check
          %p924 = pneg %p277
        $region138: #{tpu_custom_call.1} parent=103 // pred_check_branch
          %926 = sbr.rel (%p924) target = $region140
        $region139: #{tpu_custom_call.1} parent=103 // pred_region
          %927 = dma.done [#allocation19], 16
        $region140: #{tpu_custom_call.1} parent=103 // pred_fallthru
          _
        // Predicated region
        $region141: #{tpu_custom_call.1} parent=103 // pred_check
          %p928 = pneg %p298
        $region142: #{tpu_custom_call.1} parent=103 // pred_check_branch
          %930 = sbr.rel (%p928) target = $region144
        $region143: #{tpu_custom_call.1} parent=103 // pred_region
          %931 = dma.done [#allocation22], 16
        $region144: #{tpu_custom_call.1} parent=103 // pred_fallthru
          _
        // Predicated region
        $region145: #{tpu_custom_call.1} parent=103 // pred_check
          %p932 = pneg %p319
        $region146: #{tpu_custom_call.1} parent=103 // pred_check_branch
          %934 = sbr.rel (%p932) target = $region148
        $region147: #{tpu_custom_call.1} parent=103 // pred_region
          %935 = dma.done [#allocation22], 16
        $region148: #{tpu_custom_call.1} parent=103 // pred_fallthru
          _
        // Predicated region
        $region149: #{tpu_custom_call.1} parent=103 // pred_check
          %p936 = pneg %p340
        $region150: #{tpu_custom_call.1} parent=103 // pred_check_branch
          %938 = sbr.rel (%p936) target = $region152
        $region151: #{tpu_custom_call.1} parent=103 // pred_region
          %939 = dma.done [#allocation25], 256
        $region152: #{tpu_custom_call.1} parent=103 // pred_fallthru
          _
        // Predicated region
        $region153: #{tpu_custom_call.1} parent=103 // pred_check
          %p940 = pneg %p361
        $region154: #{tpu_custom_call.1} parent=103 // pred_check_branch
          %942 = sbr.rel (%p940) target = $region156
        $region155: #{tpu_custom_call.1} parent=103 // pred_region
          %943 = dma.done [#allocation25], 16
        $region156: #{tpu_custom_call.1} parent=103 // pred_fallthru
          _
        // Predicated region
        $region157: #{tpu_custom_call.1} parent=103 // pred_check
          %p944 = pneg %p382
        $region158: #{tpu_custom_call.1} parent=103 // pred_check_branch
          %946 = sbr.rel (%p944) target = $region160
        $region159: #{tpu_custom_call.1} parent=103 // pred_region
          %947 = dma.done [#allocation28], 256
        $region160: #{tpu_custom_call.1} parent=103 // pred_fallthru
          _
        // Predicated region
        $region161: #{tpu_custom_call.1} parent=103 // pred_check
          %p948 = pneg %p403
        $region162: #{tpu_custom_call.1} parent=103 // pred_check_branch
          %950 = sbr.rel (%p948) target = $region164
        $region163: #{tpu_custom_call.1} parent=103 // pred_region
          %951 = dma.done [#allocation28], 16
        $region164: #{tpu_custom_call.1} parent=103 // pred_fallthru
          _
        // Predicated region
        $region165: #{tpu_custom_call.1} parent=103 // pred_check
          %p952 = pneg %p424
        $region166: #{tpu_custom_call.1} parent=103 // pred_check_branch
          %954 = sbr.rel (%p952) target = $region168
        $region167: #{tpu_custom_call.1} parent=103 // pred_region
          %955 = dma.done [#allocation31], 256
        $region168: #{tpu_custom_call.1} parent=103 // pred_fallthru
          _
        // Predicated region
        $region169: #{tpu_custom_call.1} parent=103 // pred_check
          %p956 = pneg %p445
        $region170: #{tpu_custom_call.1} parent=103 // pred_check_branch
          %958 = sbr.rel (%p956) target = $region172
        $region171: #{tpu_custom_call.1} parent=103 // pred_region
          %959 = dma.done [#allocation31], 16
        $region172: #{tpu_custom_call.1} parent=103 // pred_fallthru
          _
        // Predicated region
        $region173: #{tpu_custom_call.1} parent=103 // pred_check
          %p960 = pneg %p466
        $region174: #{tpu_custom_call.1} parent=103 // pred_check_branch
          %962 = sbr.rel (%p960) target = $region176
        $region175: #{tpu_custom_call.1} parent=103 // pred_region
          %963 = dma.done [#allocation34], 256
        $region176: #{tpu_custom_call.1} parent=103 // pred_fallthru
          _
        // Predicated region
        $region177: #{tpu_custom_call.1} parent=103 // pred_check
          %p964 = pneg %p487
        $region178: #{tpu_custom_call.1} parent=103 // pred_check_branch
          %966 = sbr.rel (%p964) target = $region180
        $region179: #{tpu_custom_call.1} parent=103 // pred_region
          %967 = dma.done [#allocation34], 16
        $region180: #{tpu_custom_call.1} parent=103 // pred_fallthru
          _
        // Predicated region
        $region181: #{tpu_custom_call.1} parent=103 // pred_check
          %p968 = pneg %p508
        $region182: #{tpu_custom_call.1} parent=103 // pred_check_branch
          %970 = sbr.rel (%p968) target = $region184
        $region183: #{tpu_custom_call.1} parent=103 // pred_region
          %971 = dma.done [#allocation37], 512
        $region184: #{tpu_custom_call.1} parent=103 // pred_fallthru
          _
        // Predicated region
        $region185: #{tpu_custom_call.1} parent=103 // pred_check
          %p972 = pneg %p529
        $region186: #{tpu_custom_call.1} parent=103 // pred_check_branch
          %974 = sbr.rel (%p972) target = $region188
        $region187: #{tpu_custom_call.1} parent=103 // pred_region
          %975 = dma.done [#allocation37], 16
        $region188: #{tpu_custom_call.1} parent=103 // pred_fallthru
          _
        %s976 = sand.u32 %s72, 1
        %s977 = scalar_lea.sflag [#allocation7], %s976
        %s978 = sand.u32 %s72, 1
        %s979 = smul.addr %s978, 16
        %s980 = scalar_lea.vmem [#allocation6], %s979
        %p981 = pneg %p85
        %p982 = pneg %p82
        %s983 = sand.u32 %s52, 1
        %s984 = scalar_lea.sflag [#allocation10], %s983
        %s985 = sand.u32 %s100, 1
        %s986 = smul.addr %s985, 8
        %s987 = scalar_lea.vmem [#allocation9], %s986
        %p988 = pneg %p113
        %p989 = pneg %p110
        %s990 = sand.u32 %s52, 1
        %s991 = scalar_lea.sflag [#allocation10], %s990
        %s992 = sand.u32 %s126, 1
        %s993 = smul.addr %s992, 24
        %s994 = scalar_lea.vmem [#allocation11], %s993
        %p995 = pneg %p139
        %p996 = pneg %p136
        %s997 = sand.u32 %s52, 1
        %s998 = scalar_lea.sflag [#allocation13], %s997
        %s999 = sand.u32 %s154, 1
        %s1000 = smul.addr %s999, 8
        %s1001 = scalar_lea.vmem [#allocation12], %s1000
        %p1002 = pneg %p167
        %p1003 = pneg %p164
        %s1004 = sand.u32 %s52, 1
        %s1005 = scalar_lea.sflag [#allocation13], %s1004
        %s1006 = sand.u32 %s180, 1
        %s1007 = scalar_lea.vmem [#allocation14], %s1006
        %p1008 = pneg %p193
        %p1009 = pneg %p190
        %p1010 = pneg %p214
        %p1011 = pneg %p211
        %p1012 = pneg %p235
        %p1013 = pneg %p232
        %p1014 = pneg %p256
        %p1015 = pneg %p253
        %p1016 = pneg %p277
        %p1017 = pneg %p274
        %p1018 = pneg %p298
        %p1019 = pneg %p295
        %p1020 = pneg %p319
        %p1021 = pneg %p316
        %p1022 = pneg %p340
        %p1023 = pneg %p337
        %p1024 = pneg %p361
        %p1025 = pneg %p358
        %p1026 = pneg %p382
        %p1027 = pneg %p379
        %p1028 = pneg %p403
        %p1029 = pneg %p400
        %p1030 = pneg %p424
        %p1031 = pneg %p421
        %p1032 = pneg %p445
        %p1033 = pneg %p442
        %p1034 = pneg %p466
        %p1035 = pneg %p463
        %p1036 = pneg %p487
        %p1037 = pneg %p484
        %p1038 = pneg %p508
        %p1039 = pneg %p505
        %p1040 = pneg %p529
        %p1041 = pneg %p526
        %p1042 = pneg %p557
        %p1043 = pneg %p554
        %s1044 = sand.u32 %s544, 1
        %s1045 = scalar_lea.sflag [#allocation8], %s1044
        %s1046 = sand.u32 %s544, 1
        %s1047 = smul.addr %s1046, 8
        %s1048 = scalar_lea.vmem [#allocation39], %s1047
        %p1050 = scmp.eq.s32.totalorder %s57, 0
        // Predicated region
        $region189: #{tpu_custom_call.1} parent=103 // pred_check
          %p1051 = pneg %p1050
        $region190: #{tpu_custom_call.1} parent=103 // pred_check_branch
          %1053 = sbr.rel (%p1051) target = $region192
        $region191: #{tpu_custom_call.1} parent=103 // pred_region
          %v1054 = vld [vmem:[#allocation27] sm:$0xf]
          %v1055 = vld [vmem:[#allocation27 + $0x4] sm:$0xf]
          %v1056 = vld [vmem:[#allocation27 + $0x8] sm:$0xf]
          %v1057 = vld [vmem:[#allocation27 + $0xc] sm:$0xf]
          %v1058 = vld [vmem:[#allocation29] sm:$0x1]
          %v1059 = vld [vmem:[%s872] sm:$0xff]
          %v1060 = vld [vmem:[%s872 + $0x8] sm:$0xff]
          %v1061 = vld [vmem:[#allocation15] sm:$0x1]
          %v1062 = vld [vmem:[#allocation17] sm:$0x1]
          %vm1063 = vcmask 261120
          %v1064 = vsel %vm1063, %v1059, 0.0
          %1065 = vadd.xlane.f32.xlu0 %v1064
          %v1066 = vpop.xlane.xlu0 %1065
          %v1067 = vsel %vm1063, %v1060, 0.0
          %1068 = vadd.xlane.f32.xlu0 %v1067
          %v1069 = vpop.xlane.xlu0 %1068
          %v1070 = vrcp.pop 32.0
          %v1071 = vmul.f32 %v1066, %v1070
          %v1072 = vmul.f32 %v1069, %v1070
          %v1073 = vsub.f32 %v1059, %v1071
          %v1074 = vsub.f32 %v1060, %v1072
          %v1075 = vmul.f32 %v1073, %v1073
          %v1076 = vmul.f32 %v1074, %v1074
          %v1077 = vsel %vm1063, %v1075, 0.0
          %1078 = vadd.xlane.f32.xlu0 %v1077
          %v1079 = vpop.xlane.xlu0 %1078
          %v1080 = vsel %vm1063, %v1076, 0.0
          %1081 = vadd.xlane.f32.xlu0 %v1080
          %v1082 = vpop.xlane.xlu0 %1081
          %v1083 = vmul.f32 %v1079, 0.032258064
          %v1084 = vmul.f32 %v1082, 0.032258064
          %v1085 = vadd.f32 %v1083, 1e-06
          %v1086 = vadd.f32 %v1084, 1e-06
          %v1087 = vrsqrt.pop %v1085
          %v1088 = vrsqrt.pop %v1086
          %v1089 = vmul.f32 %v1073, %v1087
          %v1090 = vmul.f32 %v1074, %v1088
          %v1092 = vlaneseq
          %v1093 = vshrl.u32 %v1092, 7
          %v1094 = vsub.s32 0, %v1093
          %v1095 = vrot.slane %v1061, %v1094
          %v1097 = vmul.f32 %v1095, %v1089
          %v1098 = vmul.f32 %v1095, %v1090
          %v1100 = vlaneseq
          %v1101 = vshrl.u32 %v1100, 7
          %v1102 = vsub.s32 0, %v1101
          %v1103 = vrot.slane %v1062, %v1102
          %v1105 = vadd.f32 %v1097, %v1103
          %v1106 = vadd.f32 %v1098, %v1103
          %v1107 = vpack.c.bf16 %v1106, %v1105
          %v1109 = vlaneseq
          %v1110 = vshrl.u32 %v1109, 7
          %v1111 = vsub.s32 0, %v1110
          %v1112 = vrot.slane %v1058, %v1111
          %v1118 = vunpack.c.l.b16 %v1054
          %v1119 = vunpack.c.l.b16 %v1055
          %v1120 = vunpack.c.l.b16 %v1056
          %v1121 = vunpack.c.l.b16 %v1057
          %v1122 = vpack.c.b16 %v1119, %v1118
          %v1123 = vpack.c.b16 %v1121, %v1120
          %v1127 = vsel %vm1063, %v1107, 0
          %1129 = vmatprep.subr.bf16.mxu0 0
          %1130 = vmatpush1.bf16.msra.mxu0 %v1122
          %1131 = vmatprep.subr.bf16.mxu0 0
          %1132 = vmatpush1.bf16.msra.mxu0 %v1123
          %1133 = vmatprep.subr.bf16.mxu0 0
          %1134 = vmatpush1.bf16.msra.mxu0 0
          %1135 = vmatprep.subr.bf16.mxu0 0
          %1136 = vmatpush1.bf16.msra.mxu0 0
          %1137 = vmatprep.subr.bf16.mxu0 0
          %1138 = vmatpush1.bf16.msra.mxu0 0
          %1139 = vmatprep.subr.bf16.mxu0 0
          %1140 = vmatpush1.bf16.msra.mxu0 0
          %1141 = vmatprep.subr.bf16.mxu0 0
          %1142 = vmatpush1.bf16.msra.mxu0 0
          %1143 = vmatprep.subr.bf16.mxu0 0
          %1144 = vmatpush1.bf16.msra.mxu0 0
          %1145 = vmatprep.subr.bf16.mxu0 0
          %1146 = vmatpush1.bf16.msra.mxu0 0
          %1147 = vmatprep.subr.bf16.mxu0 0
          %1148 = vmatpush1.bf16.msra.mxu0 0
          %1149 = vmatprep.subr.bf16.mxu0 0
          %1150 = vmatpush1.bf16.msra.mxu0 0
          %1151 = vmatprep.subr.bf16.mxu0 0
          %1152 = vmatpush1.bf16.msra.mxu0 0
          %1153 = vmatprep.subr.bf16.mxu0 0
          %1154 = vmatpush1.bf16.msra.mxu0 0
          %1155 = vmatprep.subr.bf16.mxu0 0
          %1156 = vmatpush1.bf16.msra.mxu0 0
          %1157 = vmatprep.subr.bf16.mxu0 0
          %1158 = vmatpush1.bf16.msra.mxu0 0
          %1159 = vmatprep.subr.bf16.mxu0 0
          %1160 = vmatpush1.bf16.msra.mxu0 0
          %1161 = vmatprep.mubr.bf16.mxu0 0
          %1162 = vmatmul.mubr.bf16.gmra.mrb[0].mxu0 %v1127
          %v1163 = vpop.f32.mrb[0].mxu0
          %v1164 = vadd.f32 %v1112, %v1163
          %v1165 = vpop.f32.mrb[0].mxu0
          %v1166 = vpop.f32.mrb[0].mxu0
          %v1167 = vadd.f32 %v1112, %v1166
          %v1168 = vpop.f32.mrb[0].mxu0
          %1169 = vdwg.mxu0
          %v1170 = vpack.c.bf16 %v1167, %v1164
          %1171 = vst.msk [vmem:[#allocation2] sm:$0xff] %vm1063, %v1170
          %1173 = vrot.lane.b32.xlu0 %v1170, 96
          %v1174 = vpop.permute.xlu0 %1173
          %1176 = vst.msk [vmem:[#allocation3] sm:$0xff] %vm1063, %v1174
          %v1177 = vld [vmem:[%s890] sm:$0xff]
          %v1178 = vld [vmem:[%s890 + $0x8] sm:$0xff]
          %v1179 = vld [vmem:[%s890 + $0x10] sm:$0xff]
          %v1180 = vpack.c.bf16 %v1178, %v1177
          %v1181 = vpack.c.bf16 %v1179, %v1179
          %v1183 = vsel %vm1063, %v1180, 0
          %v1186 = vsel %vm1063, %v1181, 0
          %1188 = vmatprep.subr.bf16.mxu0 0
          %1189 = vmatpush1.bf16.msra.mxu0 %v1122
          %1190 = vmatprep.subr.bf16.mxu0 0
          %1191 = vmatpush1.bf16.msra.mxu0 %v1123
          %1192 = vmatprep.subr.bf16.mxu0 0
          %1193 = vmatpush1.bf16.msra.mxu0 0
          %1194 = vmatprep.subr.bf16.mxu0 0
          %1195 = vmatpush1.bf16.msra.mxu0 0
          %1196 = vmatprep.subr.bf16.mxu0 0
          %1197 = vmatpush1.bf16.msra.mxu0 0
          %1198 = vmatprep.subr.bf16.mxu0 0
          %1199 = vmatpush1.bf16.msra.mxu0 0
          %1200 = vmatprep.subr.bf16.mxu0 0
          %1201 = vmatpush1.bf16.msra.mxu0 0
          %1202 = vmatprep.subr.bf16.mxu0 0
          %1203 = vmatpush1.bf16.msra.mxu0 0
          %1204 = vmatprep.subr.bf16.mxu0 0
          %1205 = vmatpush1.bf16.msra.mxu0 0
          %1206 = vmatprep.subr.bf16.mxu0 0
          %1207 = vmatpush1.bf16.msra.mxu0 0
          %1208 = vmatprep.subr.bf16.mxu0 0
          %1209 = vmatpush1.bf16.msra.mxu0 0
          %1210 = vmatprep.subr.bf16.mxu0 0
          %1211 = vmatpush1.bf16.msra.mxu0 0
          %1212 = vmatprep.subr.bf16.mxu0 0
          %1213 = vmatpush1.bf16.msra.mxu0 0
          %1214 = vmatprep.subr.bf16.mxu0 0
          %1215 = vmatpush1.bf16.msra.mxu0 0
          %1216 = vmatprep.subr.bf16.mxu0 0
          %1217 = vmatpush1.bf16.msra.mxu0 0
          %1218 = vmatprep.subr.bf16.mxu0 0
          %1219 = vmatpush1.bf16.msra.mxu0 0
          %1220 = vmatprep.mubr.bf16.mxu0 0
          %1221 = vmatmul.mubr.bf16.gmra.mrb[0].mxu0 %v1183
          %v1222 = vpop.f32.mrb[0].mxu0
          %v1223 = vadd.f32 %v1112, %v1222
          %v1224 = vpop.f32.mrb[0].mxu0
          %v1225 = vpop.f32.mrb[0].mxu0
          %v1226 = vadd.f32 %v1112, %v1225
          %v1227 = vpop.f32.mrb[0].mxu0
          %1228 = vmatprep.mubr.bf16.mxu0 0
          %1229 = vmatmul.mubr.bf16.gmra.mrb[0].mxu0 %v1186
          %v1230 = vpop.f32.mrb[0].mxu0
          %v1231 = vadd.f32 %v1112, %v1230
          %v1232 = vpop.f32.mrb[0].mxu0
          %v1233 = vpop.f32.mrb[0].mxu0
          %v1234 = vpop.f32.mrb[0].mxu0
          %1235 = vdwg.mxu0
          %v1236 = vpack.c.bf16 %v1226, %v1223
          %v1237 = vpack.c.bf16 %v1231, %v1231
          %v1240 = vunpack.c.l.b16 %v1236
          %v1241 = vunpack.c.h.b16 %v1236
          %v1242 = vunpack.c.l.b16 %v1237
          %v1243 = vpack.c.b16 %v1240, %v1240
          %v1244 = vpack.c.b16 %v1241, %v1241
          %v1245 = vpack.c.b16 %v1242, %v1242
          %vm1249 = vcmask 257024
          %1250 = vst.msk [vmem:[#allocation4] sm:$0xf] %vm1249, %v1243
          %1251 = vst.msk [vmem:[#allocation4 + $0x4] sm:$0xf] %vm1249, %v1244
          %1252 = vst.msk [vmem:[#allocation4 + $0x8] sm:$0xf] %vm1249, %v1245
          %1253 = vrot.lane.b32.xlu0 %v1243, 96
          %v1254 = vpop.permute.xlu0 %1253
          %1255 = vrot.lane.b32.xlu0 %v1244, 96
          %v1256 = vpop.permute.xlu0 %1255
          %1257 = vrot.lane.b32.xlu0 %v1245, 96
          %v1258 = vpop.permute.xlu0 %1257
          %1262 = vst.msk [vmem:[#allocation5] sm:$0xf] %vm1249, %v1254
          %1263 = vst.msk [vmem:[#allocation5 + $0x4] sm:$0xf] %vm1249, %v1256
          %1264 = vst.msk [vmem:[#allocation5 + $0x8] sm:$0xf] %vm1249, %v1258
        $region192: #{tpu_custom_call.1} parent=103 // pred_fallthru
          _
        %v1265 = vld [vmem:[%s881] sm:$0xff]
        %v1266 = vld [vmem:[%s899] sm:$0xff]
        %v1267 = vsub.f32 %v1266, 1.0
        %v1268 = vmul.f32 %v1267, 1e+09
        %v1269 = vld [vmem:[%s907] sm:$0x1]
        %v1270 = vsub.f32 %v1269, 1.0
        %v1271 = vmul.f32 %v1270, 1e+09
        %v1272 = vld [vmem:[#allocation24] sm:$0xf]
        %v1273 = vld [vmem:[#allocation24 + $0x4] sm:$0xf]
        %v1274 = vld [vmem:[#allocation24 + $0x8] sm:$0xf]
        %v1275 = vld [vmem:[#allocation24 + $0xc] sm:$0xf]
        %v1276 = vld [vmem:[#allocation26] sm:$0x1]
        %v1277 = vld [vmem:[#allocation30] sm:$0xf]
        %v1278 = vld [vmem:[#allocation30 + $0x4] sm:$0xf]
        %v1279 = vld [vmem:[#allocation30 + $0x8] sm:$0xf]
        %v1280 = vld [vmem:[#allocation30 + $0xc] sm:$0xf]
        %v1281 = vld [vmem:[#allocation32] sm:$0x1]
        %v1282 = vld [vmem:[#allocation15] sm:$0x1]
        %v1283 = vld [vmem:[#allocation17] sm:$0x1]
        %vm1284 = vcmask 261120
        %v1285 = vsel %vm1284, %v1265, 0.0
        %1286 = vadd.xlane.f32.xlu0 %v1285
        %v1287 = vpop.xlane.xlu0 %1286
        %v1288 = vrcp.pop 32.0
        %v1289 = vmul.f32 %v1287, %v1288
        %v1290 = vsub.f32 %v1265, %v1289
        %v1291 = vmul.f32 %v1290, %v1290
        %v1292 = vsel %vm1284, %v1291, 0.0
        %1293 = vadd.xlane.f32.xlu0 %v1292
        %v1294 = vpop.xlane.xlu0 %1293
        %v1295 = vmul.f32 %v1294, 0.032258064
        %v1296 = vadd.f32 %v1295, 1e-06
        %v1297 = vrsqrt.pop %v1296
        %v1298 = vmul.f32 %v1290, %v1297
        %v1300 = vlaneseq
        %v1301 = vshrl.u32 %v1300, 7
        %v1302 = vsub.s32 0, %v1301
        %v1303 = vrot.slane %v1282, %v1302
        %v1305 = vmul.f32 %v1303, %v1298
        %v1307 = vlaneseq
        %v1308 = vshrl.u32 %v1307, 7
        %v1309 = vsub.s32 0, %v1308
        %v1310 = vrot.slane %v1283, %v1309
        %v1312 = vadd.f32 %v1305, %v1310
        %v1313 = vld [vmem:[#allocation2] sm:$0xff]
        %v1314 = vld [vmem:[#allocation3] sm:$0xff]
        %v1315 = vpack.c.bf16 %v1312, %v1312
        %v1317 = vlaneseq
        %v1318 = vshrl.u32 %v1317, 7
        %v1319 = vsub.s32 0, %v1318
        %v1320 = vrot.slane %v1276, %v1319
        %v1326 = vunpack.c.l.b16 %v1272
        %v1327 = vunpack.c.l.b16 %v1273
        %v1328 = vunpack.c.l.b16 %v1274
        %v1329 = vunpack.c.l.b16 %v1275
        %v1330 = vpack.c.b16 %v1327, %v1326
        %v1331 = vpack.c.b16 %v1329, %v1328
        %v1335 = vsel %vm1284, %v1315, 0
        %1337 = vmatprep.subr.bf16.mxu0 0
        %1338 = vmatpush1.bf16.msra.mxu0 %v1330
        %1339 = vmatprep.subr.bf16.mxu0 0
        %1340 = vmatpush1.bf16.msra.mxu0 %v1331
        %1341 = vmatprep.subr.bf16.mxu0 0
        %1342 = vmatpush1.bf16.msra.mxu0 0
        %1343 = vmatprep.subr.bf16.mxu0 0
        %1344 = vmatpush1.bf16.msra.mxu0 0
        %1345 = vmatprep.subr.bf16.mxu0 0
        %1346 = vmatpush1.bf16.msra.mxu0 0
        %1347 = vmatprep.subr.bf16.mxu0 0
        %1348 = vmatpush1.bf16.msra.mxu0 0
        %1349 = vmatprep.subr.bf16.mxu0 0
        %1350 = vmatpush1.bf16.msra.mxu0 0
        %1351 = vmatprep.subr.bf16.mxu0 0
        %1352 = vmatpush1.bf16.msra.mxu0 0
        %1353 = vmatprep.subr.bf16.mxu0 0
        %1354 = vmatpush1.bf16.msra.mxu0 0
        %1355 = vmatprep.subr.bf16.mxu0 0
        %1356 = vmatpush1.bf16.msra.mxu0 0
        %1357 = vmatprep.subr.bf16.mxu0 0
        %1358 = vmatpush1.bf16.msra.mxu0 0
        %1359 = vmatprep.subr.bf16.mxu0 0
        %1360 = vmatpush1.bf16.msra.mxu0 0
        %1361 = vmatprep.subr.bf16.mxu0 0
        %1362 = vmatpush1.bf16.msra.mxu0 0
        %1363 = vmatprep.subr.bf16.mxu0 0
        %1364 = vmatpush1.bf16.msra.mxu0 0
        %1365 = vmatprep.subr.bf16.mxu0 0
        %1366 = vmatpush1.bf16.msra.mxu0 0
        %1367 = vmatprep.subr.bf16.mxu0 0
        %1368 = vmatpush1.bf16.msra.mxu0 0
        %1369 = vmatprep.mubr.bf16.mxu0 0
        %1370 = vmatmul.mubr.bf16.gmra.mrb[0].mxu0 %v1335
        %v1371 = vpop.f32.mrb[0].mxu0
        %v1372 = vadd.f32 %v1320, %v1371
        %v1373 = vpop.f32.mrb[0].mxu0
        %v1374 = vpop.f32.mrb[0].mxu0
        %v1375 = vpop.f32.mrb[0].mxu0
        %1376 = vdwg.mxu0
        %v1377 = vmul.f32 %v1372, 0.35355338
        %v1378 = vpack.c.bf16 %v1377, %v1377
        %vm1379 = vcmask 64512
        %v1381 = vsel %vm1379, %v1378, 0
        %v1384 = vsel %vm1379, %v1313, 0
        %1386 = vmatprep.subr.bf16.mxu0 0
        %1387 = vmatpush1.bf16.xpose.msra.mxu0 %v1384
        %1388 = vmatprep.subr.bf16.mxu0 0
        %1389 = vmatpush1.bf16.xpose.msra.mxu0 0
        %1390 = vmatprep.subr.bf16.mxu0 0
        %1391 = vmatpush1.bf16.xpose.msra.mxu0 0
        %1392 = vmatprep.subr.bf16.mxu0 0
        %1393 = vmatpush1.bf16.xpose.msra.mxu0 0
        %1394 = vmatprep.subr.bf16.mxu0 0
        %1395 = vmatpush1.bf16.xpose.msra.mxu0 0
        %1396 = vmatprep.subr.bf16.mxu0 0
        %1397 = vmatpush1.bf16.xpose.msra.mxu0 0
        %1398 = vmatprep.subr.bf16.mxu0 0
        %1399 = vmatpush1.bf16.xpose.msra.mxu0 0
        %1400 = vmatprep.subr.bf16.mxu0 0
        %1401 = vmatpush1.bf16.xpose.msra.mxu0 0
        %1402 = vmatprep.subr.bf16.mxu0 0
        %1403 = vmatpush1.bf16.xpose.msra.mxu0 0
        %1404 = vmatprep.subr.bf16.mxu0 0
        %1405 = vmatpush1.bf16.xpose.msra.mxu0 0
        %1406 = vmatprep.subr.bf16.mxu0 0
        %1407 = vmatpush1.bf16.xpose.msra.mxu0 0
        %1408 = vmatprep.subr.bf16.mxu0 0
        %1409 = vmatpush1.bf16.xpose.msra.mxu0 0
        %1410 = vmatprep.subr.bf16.mxu0 0
        %1411 = vmatpush1.bf16.xpose.msra.mxu0 0
        %1412 = vmatprep.subr.bf16.mxu0 0
        %1413 = vmatpush1.bf16.xpose.msra.mxu0 0
        %1414 = vmatprep.subr.bf16.mxu0 0
        %1415 = vmatpush1.bf16.xpose.msra.mxu0 0
        %1416 = vmatprep.subr.bf16.mxu0 0
        %1417 = vmatpush1.bf16.xpose.msra.mxu0 0
        %1418 = vmatprep.mubr.bf16.mxu0 0
        %1419 = vmatmul.mubr.bf16.gmra.mrb[0].mxu0 %v1381
        %v1420 = vpop.f32.mrb[0].mxu0
        %v1421 = vadd.f32 %v1268, %v1420
        %v1422 = vpop.f32.mrb[0].mxu0
        %v1423 = vpop.f32.mrb[0].mxu0
        %v1424 = vpop.f32.mrb[0].mxu0
        %1425 = vdwg.mxu0
        %vm1426 = vcmask 130048
        %v1427 = vsel %vm1426, %v1421, -inf
        %1428 = vmax.xlane.f32.xlu0 %v1427
        %v1429 = vpop.xlane.xlu0 %1428
        %v1430 = vsub.f32 %v1421, %v1429
        %v1431 = vmul.f32 %v1430, 1.442695
        %v1432 = vpow.pop %v1431
        %v1433 = vsel %vm1426, %v1432, 0.0
        %1434 = vadd.xlane.f32.xlu0 %v1433
        %v1435 = vpop.xlane.xlu0 %1434
        %v1436 = vrcp.pop %v1435
        %v1437 = vmul.f32 %v1432, %v1436
        %v1438 = vpack.c.bf16 %v1437, %v1437
        %v1440 = vsel %vm1426, %v1438, 0
        %1442 = vmatprep.subr.bf16.mxu0 0
        %1443 = vmatpush1.bf16.msra.mxu0 %v1314
        %1444 = vmatprep.subr.bf16.mxu0 0
        %1445 = vmatpush1.bf16.msra.mxu0 0
        %1446 = vmatprep.subr.bf16.mxu0 0
        %1447 = vmatpush1.bf16.msra.mxu0 0
        %1448 = vmatprep.subr.bf16.mxu0 0
        %1449 = vmatpush1.bf16.msra.mxu0 0
        %1450 = vmatprep.subr.bf16.mxu0 0
        %1451 = vmatpush1.bf16.msra.mxu0 0
        %1452 = vmatprep.subr.bf16.mxu0 0
        %1453 = vmatpush1.bf16.msra.mxu0 0
        %1454 = vmatprep.subr.bf16.mxu0 0
        %1455 = vmatpush1.bf16.msra.mxu0 0
        %1456 = vmatprep.subr.bf16.mxu0 0
        %1457 = vmatpush1.bf16.msra.mxu0 0
        %1458 = vmatprep.subr.bf16.mxu0 0
        %1459 = vmatpush1.bf16.msra.mxu0 0
        %1460 = vmatprep.subr.bf16.mxu0 0
        %1461 = vmatpush1.bf16.msra.mxu0 0
        %1462 = vmatprep.subr.bf16.mxu0 0
        %1463 = vmatpush1.bf16.msra.mxu0 0
        %1464 = vmatprep.subr.bf16.mxu0 0
        %1465 = vmatpush1.bf16.msra.mxu0 0
        %1466 = vmatprep.subr.bf16.mxu0 0
        %1467 = vmatpush1.bf16.msra.mxu0 0
        %1468 = vmatprep.subr.bf16.mxu0 0
        %1469 = vmatpush1.bf16.msra.mxu0 0
        %1470 = vmatprep.subr.bf16.mxu0 0
        %1471 = vmatpush1.bf16.msra.mxu0 0
        %1472 = vmatprep.subr.bf16.mxu0 0
        %1473 = vmatpush1.bf16.msra.mxu0 0
        %1474 = vmatprep.mubr.bf16.mxu0 0
        %1475 = vmatmul.mubr.bf16.gmra.mrb[0].mxu0 %v1440
        %v1476 = vpop.f32.mrb[0].mxu0
        %v1477 = vadd.f32 0.0, %v1476
        %v1478 = vpop.f32.mrb[0].mxu0
        %v1479 = vpop.f32.mrb[0].mxu0
        %v1480 = vpop.f32.mrb[0].mxu0
        %1481 = vdwg.mxu0
        %v1482 = vpack.c.bf16 %v1477, %v1477
        %1484 = vrot.lane.b32.xlu0 %v1378, 120
        %v1485 = vpop.permute.xlu0 %1484
        %1487 = vrot.lane.b32.xlu0 %v1313, 120
        %v1488 = vpop.permute.xlu0 %1487
        %v1490 = vsel %vm1379, %v1485, 0
        %v1493 = vsel %vm1379, %v1488, 0
        %1495 = vmatprep.subr.bf16.mxu0 0
        %1496 = vmatpush1.bf16.xpose.msra.mxu0 %v1493
        %1497 = vmatprep.subr.bf16.mxu0 0
        %1498 = vmatpush1.bf16.xpose.msra.mxu0 0
        %1499 = vmatprep.subr.bf16.mxu0 0
        %1500 = vmatpush1.bf16.xpose.msra.mxu0 0
        %1501 = vmatprep.subr.bf16.mxu0 0
        %1502 = vmatpush1.bf16.xpose.msra.mxu0 0
        %1503 = vmatprep.subr.bf16.mxu0 0
        %1504 = vmatpush1.bf16.xpose.msra.mxu0 0
        %1505 = vmatprep.subr.bf16.mxu0 0
        %1506 = vmatpush1.bf16.xpose.msra.mxu0 0
        %1507 = vmatprep.subr.bf16.mxu0 0
        %1508 = vmatpush1.bf16.xpose.msra.mxu0 0
        %1509 = vmatprep.subr.bf16.mxu0 0
        %1510 = vmatpush1.bf16.xpose.msra.mxu0 0
        %1511 = vmatprep.subr.bf16.mxu0 0
        %1512 = vmatpush1.bf16.xpose.msra.mxu0 0
        %1513 = vmatprep.subr.bf16.mxu0 0
        %1514 = vmatpush1.bf16.xpose.msra.mxu0 0
        %1515 = vmatprep.subr.bf16.mxu0 0
        %1516 = vmatpush1.bf16.xpose.msra.mxu0 0
        %1517 = vmatprep.subr.bf16.mxu0 0
        %1518 = vmatpush1.bf16.xpose.msra.mxu0 0
        %1519 = vmatprep.subr.bf16.mxu0 0
        %1520 = vmatpush1.bf16.xpose.msra.mxu0 0
        %1521 = vmatprep.subr.bf16.mxu0 0
        %1522 = vmatpush1.bf16.xpose.msra.mxu0 0
        %1523 = vmatprep.subr.bf16.mxu0 0
        %1524 = vmatpush1.bf16.xpose.msra.mxu0 0
        %1525 = vmatprep.subr.bf16.mxu0 0
        %1526 = vmatpush1.bf16.xpose.msra.mxu0 0
        %1527 = vmatprep.mubr.bf16.mxu0 0
        %1528 = vmatmul.mubr.bf16.gmra.mrb[0].mxu0 %v1490
        %v1529 = vpop.f32.mrb[0].mxu0
        %v1530 = vadd.f32 %v1268, %v1529
        %v1531 = vpop.f32.mrb[0].mxu0
        %v1532 = vpop.f32.mrb[0].mxu0
        %v1533 = vpop.f32.mrb[0].mxu0
        %1534 = vdwg.mxu0
        %v1535 = vsel %vm1426, %v1530, -inf
        %1536 = vmax.xlane.f32.xlu0 %v1535
        %v1537 = vpop.xlane.xlu0 %1536
        %v1538 = vsub.f32 %v1530, %v1537
        %v1539 = vmul.f32 %v1538, 1.442695
        %v1540 = vpow.pop %v1539
        %v1541 = vsel %vm1426, %v1540, 0.0
        %1542 = vadd.xlane.f32.xlu0 %v1541
        %v1543 = vpop.xlane.xlu0 %1542
        %v1544 = vrcp.pop %v1543
        %v1545 = vmul.f32 %v1540, %v1544
        %v1546 = vpack.c.bf16 %v1545, %v1545
        %1548 = vrot.lane.b32.xlu0 %v1314, 120
        %v1549 = vpop.permute.xlu0 %1548
        %v1552 = vsel %vm1426, %v1546, 0
        %1554 = vmatprep.subr.bf16.mxu0 0
        %1555 = vmatpush1.bf16.msra.mxu0 %v1549
        %1556 = vmatprep.subr.bf16.mxu0 0
        %1557 = vmatpush1.bf16.msra.mxu0 0
        %1558 = vmatprep.subr.bf16.mxu0 0
        %1559 = vmatpush1.bf16.msra.mxu0 0
        %1560 = vmatprep.subr.bf16.mxu0 0
        %1561 = vmatpush1.bf16.msra.mxu0 0
        %1562 = vmatprep.subr.bf16.mxu0 0
        %1563 = vmatpush1.bf16.msra.mxu0 0
        %1564 = vmatprep.subr.bf16.mxu0 0
        %1565 = vmatpush1.bf16.msra.mxu0 0
        %1566 = vmatprep.subr.bf16.mxu0 0
        %1567 = vmatpush1.bf16.msra.mxu0 0
        %1568 = vmatprep.subr.bf16.mxu0 0
        %1569 = vmatpush1.bf16.msra.mxu0 0
        %1570 = vmatprep.subr.bf16.mxu0 0
        %1571 = vmatpush1.bf16.msra.mxu0 0
        %1572 = vmatprep.subr.bf16.mxu0 0
        %1573 = vmatpush1.bf16.msra.mxu0 0
        %1574 = vmatprep.subr.bf16.mxu0 0
        %1575 = vmatpush1.bf16.msra.mxu0 0
        %1576 = vmatprep.subr.bf16.mxu0 0
        %1577 = vmatpush1.bf16.msra.mxu0 0
        %1578 = vmatprep.subr.bf16.mxu0 0
        %1579 = vmatpush1.bf16.msra.mxu0 0
        %1580 = vmatprep.subr.bf16.mxu0 0
        %1581 = vmatpush1.bf16.msra.mxu0 0
        %1582 = vmatprep.subr.bf16.mxu0 0
        %1583 = vmatpush1.bf16.msra.mxu0 0
        %1584 = vmatprep.subr.bf16.mxu0 0
        %1585 = vmatpush1.bf16.msra.mxu0 0
        %1586 = vmatprep.mubr.bf16.mxu0 0
        %1587 = vmatmul.mubr.bf16.gmra.mrb[0].mxu0 %v1552
        %v1588 = vpop.f32.mrb[0].mxu0
        %v1589 = vadd.f32 0.0, %v1588
        %v1590 = vpop.f32.mrb[0].mxu0
        %v1591 = vpop.f32.mrb[0].mxu0
        %v1592 = vpop.f32.mrb[0].mxu0
        %1593 = vdwg.mxu0
        %v1594 = vpack.c.bf16 %v1589, %v1589
        %v1596 = vsel %vm1379, %v1594, 0
        %vm1598 = vcmask 1043456
        %v1600 = vsel %vm1598, %v1278, 0
        %1602 = vmatprep.subr.bf16.mxu0 0
        %1603 = vmatpush1.bf16.msra.mxu0 %v1600
        %1604 = vmatprep.subr.bf16.mxu0 0
        %1605 = vmatpush1.bf16.msra.mxu0 0
        %1606 = vmatprep.subr.bf16.mxu0 0
        %1607 = vmatpush1.bf16.msra.mxu0 0
        %1608 = vmatprep.subr.bf16.mxu0 0
        %1609 = vmatpush1.bf16.msra.mxu0 0
        %1610 = vmatprep.subr.bf16.mxu0 0
        %1611 = vmatpush1.bf16.msra.mxu0 0
        %1612 = vmatprep.subr.bf16.mxu0 0
        %1613 = vmatpush1.bf16.msra.mxu0 0
        %1614 = vmatprep.subr.bf16.mxu0 0
        %1615 = vmatpush1.bf16.msra.mxu0 0
        %1616 = vmatprep.subr.bf16.mxu0 0
        %1617 = vmatpush1.bf16.msra.mxu0 0
        %1618 = vmatprep.subr.bf16.mxu0 0
        %1619 = vmatpush1.bf16.msra.mxu0 0
        %1620 = vmatprep.subr.bf16.mxu0 0
        %1621 = vmatpush1.bf16.msra.mxu0 0
        %1622 = vmatprep.subr.bf16.mxu0 0
        %1623 = vmatpush1.bf16.msra.mxu0 0
        %1624 = vmatprep.subr.bf16.mxu0 0
        %1625 = vmatpush1.bf16.msra.mxu0 0
        %1626 = vmatprep.subr.bf16.mxu0 0
        %1627 = vmatpush1.bf16.msra.mxu0 0
        %1628 = vmatprep.subr.bf16.mxu0 0
        %1629 = vmatpush1.bf16.msra.mxu0 0
        %1630 = vmatprep.subr.bf16.mxu0 0
        %1631 = vmatpush1.bf16.msra.mxu0 0
        %1632 = vmatprep.subr.bf16.mxu0 0
        %1633 = vmatpush1.bf16.msra.mxu0 0
        %1634 = vmatprep.mubr.bf16.mxu0 0
        %1635 = vmatmul.mubr.bf16.gmra.mrb[0].mxu0 %v1596
        %v1636 = vpop.f32.mrb[0].mxu0
        %v1637 = vadd.f32 0.0, %v1636
        %v1638 = vpop.f32.mrb[0].mxu0
        %v1639 = vpop.f32.mrb[0].mxu0
        %v1640 = vpop.f32.mrb[0].mxu0
        %1641 = vdwg.mxu0
        %v1643 = vsel %vm1379, %v1482, 0
        %v1646 = vsel %vm1598, %v1277, 0
        %1648 = vmatprep.subr.bf16.mxu0 0
        %1649 = vmatpush1.bf16.msra.mxu0 %v1646
        %1650 = vmatprep.subr.bf16.mxu0 0
        %1651 = vmatpush1.bf16.msra.mxu0 0
        %1652 = vmatprep.subr.bf16.mxu0 0
        %1653 = vmatpush1.bf16.msra.mxu0 0
        %1654 = vmatprep.subr.bf16.mxu0 0
        %1655 = vmatpush1.bf16.msra.mxu0 0
        %1656 = vmatprep.subr.bf16.mxu0 0
        %1657 = vmatpush1.bf16.msra.mxu0 0
        %1658 = vmatprep.subr.bf16.mxu0 0
        %1659 = vmatpush1.bf16.msra.mxu0 0
        %1660 = vmatprep.subr.bf16.mxu0 0
        %1661 = vmatpush1.bf16.msra.mxu0 0
        %1662 = vmatprep.subr.bf16.mxu0 0
        %1663 = vmatpush1.bf16.msra.mxu0 0
        %1664 = vmatprep.subr.bf16.mxu0 0
        %1665 = vmatpush1.bf16.msra.mxu0 0
        %1666 = vmatprep.subr.bf16.mxu0 0
        %1667 = vmatpush1.bf16.msra.mxu0 0
        %1668 = vmatprep.subr.bf16.mxu0 0
        %1669 = vmatpush1.bf16.msra.mxu0 0
        %1670 = vmatprep.subr.bf16.mxu0 0
        %1671 = vmatpush1.bf16.msra.mxu0 0
        %1672 = vmatprep.subr.bf16.mxu0 0
        %1673 = vmatpush1.bf16.msra.mxu0 0
        %1674 = vmatprep.subr.bf16.mxu0 0
        %1675 = vmatpush1.bf16.msra.mxu0 0
        %1676 = vmatprep.subr.bf16.mxu0 0
        %1677 = vmatpush1.bf16.msra.mxu0 0
        %1678 = vmatprep.subr.bf16.mxu0 0
        %1679 = vmatpush1.bf16.msra.mxu0 0
        %1680 = vmatprep.mubr.bf16.mxu0 0
        %1681 = vmatmul.mubr.bf16.gmra.mrb[0].mxu0 %v1643
        %v1682 = vpop.f32.mrb[0].mxu0
        %v1683 = vadd.f32 %v1637, %v1682
        %v1684 = vpop.f32.mrb[0].mxu0
        %v1685 = vpop.f32.mrb[0].mxu0
        %v1686 = vpop.f32.mrb[0].mxu0
        %1687 = vdwg.mxu0
        %1688 = vrot.lane.b32.xlu0 %v1378, 112
        %v1689 = vpop.permute.xlu0 %1688
        %1690 = vrot.lane.b32.xlu0 %v1313, 112
        %v1691 = vpop.permute.xlu0 %1690
        %v1693 = vsel %vm1379, %v1689, 0
        %v1696 = vsel %vm1379, %v1691, 0
        %1698 = vmatprep.subr.bf16.mxu0 0
        %1699 = vmatpush1.bf16.xpose.msra.mxu0 %v1696
        %1700 = vmatprep.subr.bf16.mxu0 0
        %1701 = vmatpush1.bf16.xpose.msra.mxu0 0
        %1702 = vmatprep.subr.bf16.mxu0 0
        %1703 = vmatpush1.bf16.xpose.msra.mxu0 0
        %1704 = vmatprep.subr.bf16.mxu0 0
        %1705 = vmatpush1.bf16.xpose.msra.mxu0 0
        %1706 = vmatprep.subr.bf16.mxu0 0
        %1707 = vmatpush1.bf16.xpose.msra.mxu0 0
        %1708 = vmatprep.subr.bf16.mxu0 0
        %1709 = vmatpush1.bf16.xpose.msra.mxu0 0
        %1710 = vmatprep.subr.bf16.mxu0 0
        %1711 = vmatpush1.bf16.xpose.msra.mxu0 0
        %1712 = vmatprep.subr.bf16.mxu0 0
        %1713 = vmatpush1.bf16.xpose.msra.mxu0 0
        %1714 = vmatprep.subr.bf16.mxu0 0
        %1715 = vmatpush1.bf16.xpose.msra.mxu0 0
        %1716 = vmatprep.subr.bf16.mxu0 0
        %1717 = vmatpush1.bf16.xpose.msra.mxu0 0
        %1718 = vmatprep.subr.bf16.mxu0 0
        %1719 = vmatpush1.bf16.xpose.msra.mxu0 0
        %1720 = vmatprep.subr.bf16.mxu0 0
        %1721 = vmatpush1.bf16.xpose.msra.mxu0 0
        %1722 = vmatprep.subr.bf16.mxu0 0
        %1723 = vmatpush1.bf16.xpose.msra.mxu0 0
        %1724 = vmatprep.subr.bf16.mxu0 0
        %1725 = vmatpush1.bf16.xpose.msra.mxu0 0
        %1726 = vmatprep.subr.bf16.mxu0 0
        %1727 = vmatpush1.bf16.xpose.msra.mxu0 0
        %1728 = vmatprep.subr.bf16.mxu0 0
        %1729 = vmatpush1.bf16.xpose.msra.mxu0 0
        %1730 = vmatprep.mubr.bf16.mxu0 0
        %1731 = vmatmul.mubr.bf16.gmra.mrb[0].mxu0 %v1693
        %v1732 = vpop.f32.mrb[0].mxu0
        %v1733 = vadd.f32 %v1268, %v1732
        %v1734 = vpop.f32.mrb[0].mxu0
        %v1735 = vpop.f32.mrb[0].mxu0
        %v1736 = vpop.f32.mrb[0].mxu0
        %1737 = vdwg.mxu0
        %v1738 = vsel %vm1426, %v1733, -inf
        %1739 = vmax.xlane.f32.xlu0 %v1738
        %v1740 = vpop.xlane.xlu0 %1739
        %v1741 = vsub.f32 %v1733, %v1740
        %v1742 = vmul.f32 %v1741, 1.442695
        %v1743 = vpow.pop %v1742
        %v1744 = vsel %vm1426, %v1743, 0.0
        %1745 = vadd.xlane.f32.xlu0 %v1744
        %v1746 = vpop.xlane.xlu0 %1745
        %v1747 = vrcp.pop %v1746
        %v1748 = vmul.f32 %v1743, %v1747
        %v1749 = vpack.c.bf16 %v1748, %v1748
        %1750 = vrot.lane.b32.xlu0 %v1314, 112
        %v1751 = vpop.permute.xlu0 %1750
        %v1754 = vsel %vm1426, %v1749, 0
        %1756 = vmatprep.subr.bf16.mxu0 0
        %1757 = vmatpush1.bf16.msra.mxu0 %v1751
        %1758 = vmatprep.subr.bf16.mxu0 0
        %1759 = vmatpush1.bf16.msra.mxu0 0
        %1760 = vmatprep.subr.bf16.mxu0 0
        %1761 = vmatpush1.bf16.msra.mxu0 0
        %1762 = vmatprep.subr.bf16.mxu0 0
        %1763 = vmatpush1.bf16.msra.mxu0 0
        %1764 = vmatprep.subr.bf16.mxu0 0
        %1765 = vmatpush1.bf16.msra.mxu0 0
        %1766 = vmatprep.subr.bf16.mxu0 0
        %1767 = vmatpush1.bf16.msra.mxu0 0
        %1768 = vmatprep.subr.bf16.mxu0 0
        %1769 = vmatpush1.bf16.msra.mxu0 0
        %1770 = vmatprep.subr.bf16.mxu0 0
        %1771 = vmatpush1.bf16.msra.mxu0 0
        %1772 = vmatprep.subr.bf16.mxu0 0
        %1773 = vmatpush1.bf16.msra.mxu0 0
        %1774 = vmatprep.subr.bf16.mxu0 0
        %1775 = vmatpush1.bf16.msra.mxu0 0
        %1776 = vmatprep.subr.bf16.mxu0 0
        %1777 = vmatpush1.bf16.msra.mxu0 0
        %1778 = vmatprep.subr.bf16.mxu0 0
        %1779 = vmatpush1.bf16.msra.mxu0 0
        %1780 = vmatprep.subr.bf16.mxu0 0
        %1781 = vmatpush1.bf16.msra.mxu0 0
        %1782 = vmatprep.subr.bf16.mxu0 0
        %1783 = vmatpush1.bf16.msra.mxu0 0
        %1784 = vmatprep.subr.bf16.mxu0 0
        %1785 = vmatpush1.bf16.msra.mxu0 0
        %1786 = vmatprep.subr.bf16.mxu0 0
        %1787 = vmatpush1.bf16.msra.mxu0 0
        %1788 = vmatprep.mubr.bf16.mxu0 0
        %1789 = vmatmul.mubr.bf16.gmra.mrb[0].mxu0 %v1754
        %v1790 = vpop.f32.mrb[0].mxu0
        %v1791 = vadd.f32 0.0, %v1790
        %v1792 = vpop.f32.mrb[0].mxu0
        %v1793 = vpop.f32.mrb[0].mxu0
        %v1794 = vpop.f32.mrb[0].mxu0
        %1795 = vdwg.mxu0
        %v1796 = vpack.c.bf16 %v1791, %v1791
        %v1798 = vsel %vm1379, %v1796, 0
        %v1801 = vsel %vm1598, %v1279, 0
        %1803 = vmatprep.subr.bf16.mxu0 0
        %1804 = vmatpush1.bf16.msra.mxu0 %v1801
        %1805 = vmatprep.subr.bf16.mxu0 0
        %1806 = vmatpush1.bf16.msra.mxu0 0
        %1807 = vmatprep.subr.bf16.mxu0 0
        %1808 = vmatpush1.bf16.msra.mxu0 0
        %1809 = vmatprep.subr.bf16.mxu0 0
        %1810 = vmatpush1.bf16.msra.mxu0 0
        %1811 = vmatprep.subr.bf16.mxu0 0
        %1812 = vmatpush1.bf16.msra.mxu0 0
        %1813 = vmatprep.subr.bf16.mxu0 0
        %1814 = vmatpush1.bf16.msra.mxu0 0
        %1815 = vmatprep.subr.bf16.mxu0 0
        %1816 = vmatpush1.bf16.msra.mxu0 0
        %1817 = vmatprep.subr.bf16.mxu0 0
        %1818 = vmatpush1.bf16.msra.mxu0 0
        %1819 = vmatprep.subr.bf16.mxu0 0
        %1820 = vmatpush1.bf16.msra.mxu0 0
        %1821 = vmatprep.subr.bf16.mxu0 0
        %1822 = vmatpush1.bf16.msra.mxu0 0
        %1823 = vmatprep.subr.bf16.mxu0 0
        %1824 = vmatpush1.bf16.msra.mxu0 0
        %1825 = vmatprep.subr.bf16.mxu0 0
        %1826 = vmatpush1.bf16.msra.mxu0 0
        %1827 = vmatprep.subr.bf16.mxu0 0
        %1828 = vmatpush1.bf16.msra.mxu0 0
        %1829 = vmatprep.subr.bf16.mxu0 0
        %1830 = vmatpush1.bf16.msra.mxu0 0
        %1831 = vmatprep.subr.bf16.mxu0 0
        %1832 = vmatpush1.bf16.msra.mxu0 0
        %1833 = vmatprep.subr.bf16.mxu0 0
        %1834 = vmatpush1.bf16.msra.mxu0 0
        %1835 = vmatprep.mubr.bf16.mxu0 0
        %1836 = vmatmul.mubr.bf16.gmra.mrb[0].mxu0 %v1798
        %v1837 = vpop.f32.mrb[0].mxu0
        %v1838 = vadd.f32 0.0, %v1837
        %v1839 = vpop.f32.mrb[0].mxu0
        %v1840 = vpop.f32.mrb[0].mxu0
        %v1841 = vpop.f32.mrb[0].mxu0
        %1842 = vdwg.mxu0
        %v1843 = vadd.f32 %v1683, %v1838
        %1844 = vrot.lane.b32.xlu0 %v1378, 104
        %v1845 = vpop.permute.xlu0 %1844
        %1846 = vrot.lane.b32.xlu0 %v1313, 104
        %v1847 = vpop.permute.xlu0 %1846
        %v1849 = vsel %vm1379, %v1845, 0
        %v1852 = vsel %vm1379, %v1847, 0
        %1854 = vmatprep.subr.bf16.mxu0 0
        %1855 = vmatpush1.bf16.xpose.msra.mxu0 %v1852
        %1856 = vmatprep.subr.bf16.mxu0 0
        %1857 = vmatpush1.bf16.xpose.msra.mxu0 0
        %1858 = vmatprep.subr.bf16.mxu0 0
        %1859 = vmatpush1.bf16.xpose.msra.mxu0 0
        %1860 = vmatprep.subr.bf16.mxu0 0
        %1861 = vmatpush1.bf16.xpose.msra.mxu0 0
        %1862 = vmatprep.subr.bf16.mxu0 0
        %1863 = vmatpush1.bf16.xpose.msra.mxu0 0
        %1864 = vmatprep.subr.bf16.mxu0 0
        %1865 = vmatpush1.bf16.xpose.msra.mxu0 0
        %1866 = vmatprep.subr.bf16.mxu0 0
        %1867 = vmatpush1.bf16.xpose.msra.mxu0 0
        %1868 = vmatprep.subr.bf16.mxu0 0
        %1869 = vmatpush1.bf16.xpose.msra.mxu0 0
        %1870 = vmatprep.subr.bf16.mxu0 0
        %1871 = vmatpush1.bf16.xpose.msra.mxu0 0
        %1872 = vmatprep.subr.bf16.mxu0 0
        %1873 = vmatpush1.bf16.xpose.msra.mxu0 0
        %1874 = vmatprep.subr.bf16.mxu0 0
        %1875 = vmatpush1.bf16.xpose.msra.mxu0 0
        %1876 = vmatprep.subr.bf16.mxu0 0
        %1877 = vmatpush1.bf16.xpose.msra.mxu0 0
        %1878 = vmatprep.subr.bf16.mxu0 0
        %1879 = vmatpush1.bf16.xpose.msra.mxu0 0
        %1880 = vmatprep.subr.bf16.mxu0 0
        %1881 = vmatpush1.bf16.xpose.msra.mxu0 0
        %1882 = vmatprep.subr.bf16.mxu0 0
        %1883 = vmatpush1.bf16.xpose.msra.mxu0 0
        %1884 = vmatprep.subr.bf16.mxu0 0
        %1885 = vmatpush1.bf16.xpose.msra.mxu0 0
        %1886 = vmatprep.mubr.bf16.mxu0 0
        %1887 = vmatmul.mubr.bf16.gmra.mrb[0].mxu0 %v1849
        %v1888 = vpop.f32.mrb[0].mxu0
        %v1889 = vadd.f32 %v1268, %v1888
        %v1890 = vpop.f32.mrb[0].mxu0
        %v1891 = vpop.f32.mrb[0].mxu0
        %v1892 = vpop.f32.mrb[0].mxu0
        %1893 = vdwg.mxu0
        %v1894 = vsel %vm1426, %v1889, -inf
        %1895 = vmax.xlane.f32.xlu0 %v1894
        %v1896 = vpop.xlane.xlu0 %1895
        %v1897 = vsub.f32 %v1889, %v1896
        %v1898 = vmul.f32 %v1897, 1.442695
        %v1899 = vpow.pop %v1898
        %v1900 = vsel %vm1426, %v1899, 0.0
        %1901 = vadd.xlane.f32.xlu0 %v1900
        %v1902 = vpop.xlane.xlu0 %1901
        %v1903 = vrcp.pop %v1902
        %v1904 = vmul.f32 %v1899, %v1903
        %v1905 = vpack.c.bf16 %v1904, %v1904
        %1906 = vrot.lane.b32.xlu0 %v1314, 104
        %v1907 = vpop.permute.xlu0 %1906
        %v1910 = vsel %vm1426, %v1905, 0
        %1912 = vmatprep.subr.bf16.mxu0 0
        %1913 = vmatpush1.bf16.msra.mxu0 %v1907
        %1914 = vmatprep.subr.bf16.mxu0 0
        %1915 = vmatpush1.bf16.msra.mxu0 0
        %1916 = vmatprep.subr.bf16.mxu0 0
        %1917 = vmatpush1.bf16.msra.mxu0 0
        %1918 = vmatprep.subr.bf16.mxu0 0
        %1919 = vmatpush1.bf16.msra.mxu0 0
        %1920 = vmatprep.subr.bf16.mxu0 0
        %1921 = vmatpush1.bf16.msra.mxu0 0
        %1922 = vmatprep.subr.bf16.mxu0 0
        %1923 = vmatpush1.bf16.msra.mxu0 0
        %1924 = vmatprep.subr.bf16.mxu0 0
        %1925 = vmatpush1.bf16.msra.mxu0 0
        %1926 = vmatprep.subr.bf16.mxu0 0
        %1927 = vmatpush1.bf16.msra.mxu0 0
        %1928 = vmatprep.subr.bf16.mxu0 0
        %1929 = vmatpush1.bf16.msra.mxu0 0
        %1930 = vmatprep.subr.bf16.mxu0 0
        %1931 = vmatpush1.bf16.msra.mxu0 0
        %1932 = vmatprep.subr.bf16.mxu0 0
        %1933 = vmatpush1.bf16.msra.mxu0 0
        %1934 = vmatprep.subr.bf16.mxu0 0
        %1935 = vmatpush1.bf16.msra.mxu0 0
        %1936 = vmatprep.subr.bf16.mxu0 0
        %1937 = vmatpush1.bf16.msra.mxu0 0
        %1938 = vmatprep.subr.bf16.mxu0 0
        %1939 = vmatpush1.bf16.msra.mxu0 0
        %1940 = vmatprep.subr.bf16.mxu0 0
        %1941 = vmatpush1.bf16.msra.mxu0 0
        %1942 = vmatprep.subr.bf16.mxu0 0
        %1943 = vmatpush1.bf16.msra.mxu0 0
        %1944 = vmatprep.mubr.bf16.mxu0 0
        %1945 = vmatmul.mubr.bf16.gmra.mrb[0].mxu0 %v1910
        %v1946 = vpop.f32.mrb[0].mxu0
        %v1947 = vadd.f32 0.0, %v1946
        %v1948 = vpop.f32.mrb[0].mxu0
        %v1949 = vpop.f32.mrb[0].mxu0
        %v1950 = vpop.f32.mrb[0].mxu0
        %1951 = vdwg.mxu0
        %v1952 = vpack.c.bf16 %v1947, %v1947
        %v1954 = vsel %vm1379, %v1952, 0
        %v1957 = vsel %vm1598, %v1280, 0
        %1959 = vmatprep.subr.bf16.mxu0 0
        %1960 = vmatpush1.bf16.msra.mxu0 %v1957
        %1961 = vmatprep.subr.bf16.mxu0 0
        %1962 = vmatpush1.bf16.msra.mxu0 0
        %1963 = vmatprep.subr.bf16.mxu0 0
        %1964 = vmatpush1.bf16.msra.mxu0 0
        %1965 = vmatprep.subr.bf16.mxu0 0
        %1966 = vmatpush1.bf16.msra.mxu0 0
        %1967 = vmatprep.subr.bf16.mxu0 0
        %1968 = vmatpush1.bf16.msra.mxu0 0
        %1969 = vmatprep.subr.bf16.mxu0 0
        %1970 = vmatpush1.bf16.msra.mxu0 0
        %1971 = vmatprep.subr.bf16.mxu0 0
        %1972 = vmatpush1.bf16.msra.mxu0 0
        %1973 = vmatprep.subr.bf16.mxu0 0
        %1974 = vmatpush1.bf16.msra.mxu0 0
        %1975 = vmatprep.subr.bf16.mxu0 0
        %1976 = vmatpush1.bf16.msra.mxu0 0
        %1977 = vmatprep.subr.bf16.mxu0 0
        %1978 = vmatpush1.bf16.msra.mxu0 0
        %1979 = vmatprep.subr.bf16.mxu0 0
        %1980 = vmatpush1.bf16.msra.mxu0 0
        %1981 = vmatprep.subr.bf16.mxu0 0
        %1982 = vmatpush1.bf16.msra.mxu0 0
        %1983 = vmatprep.subr.bf16.mxu0 0
        %1984 = vmatpush1.bf16.msra.mxu0 0
        %1985 = vmatprep.subr.bf16.mxu0 0
        %1986 = vmatpush1.bf16.msra.mxu0 0
        %1987 = vmatprep.subr.bf16.mxu0 0
        %1988 = vmatpush1.bf16.msra.mxu0 0
        %1989 = vmatprep.subr.bf16.mxu0 0
        %1990 = vmatpush1.bf16.msra.mxu0 0
        %1991 = vmatprep.mubr.bf16.mxu0 0
        %1992 = vmatmul.mubr.bf16.gmra.mrb[0].mxu0 %v1954
        %v1993 = vpop.f32.mrb[0].mxu0
        %v1994 = vadd.f32 0.0, %v1993
        %v1995 = vpop.f32.mrb[0].mxu0
        %v1996 = vpop.f32.mrb[0].mxu0
        %v1997 = vpop.f32.mrb[0].mxu0
        %1998 = vdwg.mxu0
        %v1999 = vadd.f32 %v1843, %v1994
        %v2001 = vlaneseq
        %v2002 = vshrl.u32 %v2001, 7
        %v2003 = vsub.s32 0, %v2002
        %v2004 = vrot.slane %v1281, %v2003
        %v2006 = vadd.f32 %v1999, %v2004
        %v2007 = vadd.f32 %v1265, %v2006
        %v2008 = vld [vmem:[#allocation18] sm:$0x1]
        %v2009 = vld [vmem:[#allocation20] sm:$0x1]
        %v2010 = vsel %vm1284, %v2007, 0.0
        %2011 = vadd.xlane.f32.xlu0 %v2010
        %v2012 = vpop.xlane.xlu0 %2011
        %v2013 = vmul.f32 %v2012, %v1288
        %v2014 = vsub.f32 %v2007, %v2013
        %v2015 = vmul.f32 %v2014, %v2014
        %v2016 = vsel %vm1284, %v2015, 0.0
        %2017 = vadd.xlane.f32.xlu0 %v2016
        %v2018 = vpop.xlane.xlu0 %2017
        %v2019 = vmul.f32 %v2018, 0.032258064
        %v2020 = vadd.f32 %v2019, 1e-06
        %v2021 = vrsqrt.pop %v2020
        %v2022 = vmul.f32 %v2014, %v2021
        %v2024 = vlaneseq
        %v2025 = vshrl.u32 %v2024, 7
        %v2026 = vsub.s32 0, %v2025
        %v2027 = vrot.slane %v2008, %v2026
        %v2029 = vmul.f32 %v2027, %v2022
        %v2031 = vlaneseq
        %v2032 = vshrl.u32 %v2031, 7
        %v2033 = vsub.s32 0, %v2032
        %v2034 = vrot.slane %v2009, %v2033
        %v2036 = vadd.f32 %v2029, %v2034
        %v2037 = vld [vmem:[#allocation4] sm:$0xf]
        %v2038 = vld [vmem:[#allocation4 + $0x4] sm:$0xf]
        %v2039 = vld [vmem:[#allocation4 + $0x8] sm:$0xf]
        %v2040 = vld [vmem:[#allocation5] sm:$0xf]
        %v2041 = vld [vmem:[#allocation5 + $0x4] sm:$0xf]
        %v2042 = vld [vmem:[#allocation5 + $0x8] sm:$0xf]
        %v2043 = vpack.c.bf16 %v2036, %v2036
        %v2045 = vsel %vm1284, %v2043, 0
        %2047 = vmatprep.subr.bf16.mxu0 0
        %2048 = vmatpush1.bf16.msra.mxu0 %v1330
        %2049 = vmatprep.subr.bf16.mxu0 0
        %2050 = vmatpush1.bf16.msra.mxu0 %v1331
        %2051 = vmatprep.subr.bf16.mxu0 0
        %2052 = vmatpush1.bf16.msra.mxu0 0
        %2053 = vmatprep.subr.bf16.mxu0 0
        %2054 = vmatpush1.bf16.msra.mxu0 0
        %2055 = vmatprep.subr.bf16.mxu0 0
        %2056 = vmatpush1.bf16.msra.mxu0 0
        %2057 = vmatprep.subr.bf16.mxu0 0
        %2058 = vmatpush1.bf16.msra.mxu0 0
        %2059 = vmatprep.subr.bf16.mxu0 0
        %2060 = vmatpush1.bf16.msra.mxu0 0
        %2061 = vmatprep.subr.bf16.mxu0 0
        %2062 = vmatpush1.bf16.msra.mxu0 0
        %2063 = vmatprep.subr.bf16.mxu0 0
        %2064 = vmatpush1.bf16.msra.mxu0 0
        %2065 = vmatprep.subr.bf16.mxu0 0
        %2066 = vmatpush1.bf16.msra.mxu0 0
        %2067 = vmatprep.subr.bf16.mxu0 0
        %2068 = vmatpush1.bf16.msra.mxu0 0
        %2069 = vmatprep.subr.bf16.mxu0 0
        %2070 = vmatpush1.bf16.msra.mxu0 0
        %2071 = vmatprep.subr.bf16.mxu0 0
        %2072 = vmatpush1.bf16.msra.mxu0 0
        %2073 = vmatprep.subr.bf16.mxu0 0
        %2074 = vmatpush1.bf16.msra.mxu0 0
        %2075 = vmatprep.subr.bf16.mxu0 0
        %2076 = vmatpush1.bf16.msra.mxu0 0
        %2077 = vmatprep.subr.bf16.mxu0 0
        %2078 = vmatpush1.bf16.msra.mxu0 0
        %2079 = vmatprep.mubr.bf16.mxu0 0
        %2080 = vmatmul.mubr.bf16.gmra.mrb[0].mxu0 %v2045
        %v2081 = vpop.f32.mrb[0].mxu0
        %v2082 = vadd.f32 %v1320, %v2081
        %v2083 = vpop.f32.mrb[0].mxu0
        %v2084 = vpop.f32.mrb[0].mxu0
        %v2085 = vpop.f32.mrb[0].mxu0
        %2086 = vdwg.mxu0
        %v2087 = vmul.f32 %v2082, 0.35355338
        %v2088 = vpack.c.bf16 %v2087, %v2087
        %v2090 = vlaneseq
        %v2091 = vshrl.u32 %v2090, 7
        %v2092 = vsub.s32 0, %v2091
        %v2093 = vrot.slane %v1271, %v2092
        %v2098 = vunpack.c.l.b16 %v2037
        %v2099 = vunpack.c.l.b16 %v2038
        %v2100 = vunpack.c.l.b16 %v2039
        %v2101 = vpack.c.b16 %v2099, %v2098
        %v2102 = vpack.c.b16 %v2100, %v2100
        %v2104 = vsel %vm1379, %v2088, 0
        %v2107 = vsel %vm1379, %v2101, 0
        %v2110 = vsel %vm1379, %v2102, 0
        %2112 = vmatprep.subr.bf16.mxu0 0
        %2113 = vmatpush1.bf16.xpose.msra.mxu0 %v2107
        %2114 = vmatprep.subr.bf16.mxu0 0
        %2115 = vmatpush1.bf16.xpose.msra.mxu0 %v2110
        %2116 = vmatprep.subr.bf16.mxu0 0
        %2117 = vmatpush1.bf16.xpose.msra.mxu0 0
        %2118 = vmatprep.subr.bf16.mxu0 0
        %2119 = vmatpush1.bf16.xpose.msra.mxu0 0
        %2120 = vmatprep.subr.bf16.mxu0 0
        %2121 = vmatpush1.bf16.xpose.msra.mxu0 0
        %2122 = vmatprep.subr.bf16.mxu0 0
        %2123 = vmatpush1.bf16.xpose.msra.mxu0 0
        %2124 = vmatprep.subr.bf16.mxu0 0
        %2125 = vmatpush1.bf16.xpose.msra.mxu0 0
        %2126 = vmatprep.subr.bf16.mxu0 0
        %2127 = vmatpush1.bf16.xpose.msra.mxu0 0
        %2128 = vmatprep.subr.bf16.mxu0 0
        %2129 = vmatpush1.bf16.xpose.msra.mxu0 0
        %2130 = vmatprep.subr.bf16.mxu0 0
        %2131 = vmatpush1.bf16.xpose.msra.mxu0 0
        %2132 = vmatprep.subr.bf16.mxu0 0
        %2133 = vmatpush1.bf16.xpose.msra.mxu0 0
        %2134 = vmatprep.subr.bf16.mxu0 0
        %2135 = vmatpush1.bf16.xpose.msra.mxu0 0
        %2136 = vmatprep.subr.bf16.mxu0 0
        %2137 = vmatpush1.bf16.xpose.msra.mxu0 0
        %2138 = vmatprep.subr.bf16.mxu0 0
        %2139 = vmatpush1.bf16.xpose.msra.mxu0 0
        %2140 = vmatprep.subr.bf16.mxu0 0
        %2141 = vmatpush1.bf16.xpose.msra.mxu0 0
        %2142 = vmatprep.subr.bf16.mxu0 0
        %2143 = vmatpush1.bf16.xpose.msra.mxu0 0
        %2144 = vmatprep.mubr.bf16.mxu0 0
        %2145 = vmatmul.mubr.bf16.gmra.mrb[0].mxu0 %v2104
        %v2146 = vpop.f32.mrb[0].mxu0
        %v2147 = vadd.f32 %v2093, %v2146
        %v2148 = vpop.f32.mrb[0].mxu0
        %v2149 = vpop.f32.mrb[0].mxu0
        %v2150 = vpop.f32.mrb[0].mxu0
        %2151 = vdwg.mxu0
        %vm2152 = vcmask 195584
        %v2153 = vsel %vm2152, %v2147, -inf
        %2154 = vmax.xlane.f32.xlu0 %v2153
        %v2155 = vpop.xlane.xlu0 %2154
        %v2156 = vsub.f32 %v2147, %v2155
        %v2157 = vmul.f32 %v2156, 1.442695
        %v2158 = vpow.pop %v2157
        %v2159 = vsel %vm2152, %v2158, 0.0
        %2160 = vadd.xlane.f32.xlu0 %v2159
        %v2161 = vpop.xlane.xlu0 %2160
        %v2162 = vrcp.pop %v2161
        %v2163 = vmul.f32 %v2158, %v2162
        %v2164 = vpack.c.bf16 %v2163, %v2163
        %v2168 = vunpack.c.l.b16 %v2040
        %v2169 = vunpack.c.l.b16 %v2041
        %v2170 = vunpack.c.l.b16 %v2042
        %v2171 = vpack.c.b16 %v2169, %v2168
        %v2172 = vpack.c.b16 %v2170, %v2170
        %v2175 = vsel %vm2152, %v2164, 0
        %v2178 = vsel %vm1598, %v2172, 0
        %2180 = vmatprep.subr.bf16.mxu0 0
        %2181 = vmatpush1.bf16.msra.mxu0 %v2171
        %2182 = vmatprep.subr.bf16.mxu0 0
        %2183 = vmatpush1.bf16.msra.mxu0 %v2178
        %2184 = vmatprep.subr.bf16.mxu0 0
        %2185 = vmatpush1.bf16.msra.mxu0 0
        %2186 = vmatprep.subr.bf16.mxu0 0
        %2187 = vmatpush1.bf16.msra.mxu0 0
        %2188 = vmatprep.subr.bf16.mxu0 0
        %2189 = vmatpush1.bf16.msra.mxu0 0
        %2190 = vmatprep.subr.bf16.mxu0 0
        %2191 = vmatpush1.bf16.msra.mxu0 0
        %2192 = vmatprep.subr.bf16.mxu0 0
        %2193 = vmatpush1.bf16.msra.mxu0 0
        %2194 = vmatprep.subr.bf16.mxu0 0
        %2195 = vmatpush1.bf16.msra.mxu0 0
        %2196 = vmatprep.subr.bf16.mxu0 0
        %2197 = vmatpush1.bf16.msra.mxu0 0
        %2198 = vmatprep.subr.bf16.mxu0 0
        %2199 = vmatpush1.bf16.msra.mxu0 0
        %2200 = vmatprep.subr.bf16.mxu0 0
        %2201 = vmatpush1.bf16.msra.mxu0 0
        %2202 = vmatprep.subr.bf16.mxu0 0
        %2203 = vmatpush1.bf16.msra.mxu0 0
        %2204 = vmatprep.subr.bf16.mxu0 0
        %2205 = vmatpush1.bf16.msra.mxu0 0
        %2206 = vmatprep.subr.bf16.mxu0 0
        %2207 = vmatpush1.bf16.msra.mxu0 0
        %2208 = vmatprep.subr.bf16.mxu0 0
        %2209 = vmatpush1.bf16.msra.mxu0 0
        %2210 = vmatprep.subr.bf16.mxu0 0
        %2211 = vmatpush1.bf16.msra.mxu0 0
        %2212 = vmatprep.mubr.bf16.mxu0 0
        %2213 = vmatmul.mubr.bf16.gmra.mrb[0].mxu0 %v2175
        %v2214 = vpop.f32.mrb[0].mxu0
        %v2215 = vadd.f32 0.0, %v2214
        %v2216 = vpop.f32.mrb[0].mxu0
        %v2217 = vpop.f32.mrb[0].mxu0
        %v2218 = vpop.f32.mrb[0].mxu0
        %2219 = vdwg.mxu0
        %v2220 = vpack.c.bf16 %v2215, %v2215
        %2222 = vrot.lane.b32.xlu0 %v2088, 120
        %v2223 = vpop.permute.xlu0 %2222
        %2224 = vrot.lane.b32.xlu0 %v2101, 120
        %v2225 = vpop.permute.xlu0 %2224
        %2226 = vrot.lane.b32.xlu0 %v2102, 120
        %v2227 = vpop.permute.xlu0 %2226
        %v2229 = vsel %vm1379, %v2223, 0
        %v2232 = vsel %vm1379, %v2225, 0
        %v2235 = vsel %vm1379, %v2227, 0
        %2237 = vmatprep.subr.bf16.mxu0 0
        %2238 = vmatpush1.bf16.xpose.msra.mxu0 %v2232
        %2239 = vmatprep.subr.bf16.mxu0 0
        %2240 = vmatpush1.bf16.xpose.msra.mxu0 %v2235
        %2241 = vmatprep.subr.bf16.mxu0 0
        %2242 = vmatpush1.bf16.xpose.msra.mxu0 0
        %2243 = vmatprep.subr.bf16.mxu0 0
        %2244 = vmatpush1.bf16.xpose.msra.mxu0 0
        %2245 = vmatprep.subr.bf16.mxu0 0
        %2246 = vmatpush1.bf16.xpose.msra.mxu0 0
        %2247 = vmatprep.subr.bf16.mxu0 0
        %2248 = vmatpush1.bf16.xpose.msra.mxu0 0
        %2249 = vmatprep.subr.bf16.mxu0 0
        %2250 = vmatpush1.bf16.xpose.msra.mxu0 0
        %2251 = vmatprep.subr.bf16.mxu0 0
        %2252 = vmatpush1.bf16.xpose.msra.mxu0 0
        %2253 = vmatprep.subr.bf16.mxu0 0
        %2254 = vmatpush1.bf16.xpose.msra.mxu0 0
        %2255 = vmatprep.subr.bf16.mxu0 0
        %2256 = vmatpush1.bf16.xpose.msra.mxu0 0
        %2257 = vmatprep.subr.bf16.mxu0 0
        %2258 = vmatpush1.bf16.xpose.msra.mxu0 0
        %2259 = vmatprep.subr.bf16.mxu0 0
        %2260 = vmatpush1.bf16.xpose.msra.mxu0 0
        %2261 = vmatprep.subr.bf16.mxu0 0
        %2262 = vmatpush1.bf16.xpose.msra.mxu0 0
        %2263 = vmatprep.subr.bf16.mxu0 0
        %2264 = vmatpush1.bf16.xpose.msra.mxu0 0
        %2265 = vmatprep.subr.bf16.mxu0 0
        %2266 = vmatpush1.bf16.xpose.msra.mxu0 0
        %2267 = vmatprep.subr.bf16.mxu0 0
        %2268 = vmatpush1.bf16.xpose.msra.mxu0 0
        %2269 = vmatprep.mubr.bf16.mxu0 0
        %2270 = vmatmul.mubr.bf16.gmra.mrb[0].mxu0 %v2229
        %v2271 = vpop.f32.mrb[0].mxu0
        %v2272 = vadd.f32 %v2093, %v2271
        %v2273 = vpop.f32.mrb[0].mxu0
        %v2274 = vpop.f32.mrb[0].mxu0
        %v2275 = vpop.f32.mrb[0].mxu0
        %2276 = vdwg.mxu0
        %v2277 = vsel %vm2152, %v2272, -inf
        %2278 = vmax.xlane.f32.xlu0 %v2277
        %v2279 = vpop.xlane.xlu0 %2278
        %v2280 = vsub.f32 %v2272, %v2279
        %v2281 = vmul.f32 %v2280, 1.442695
        %v2282 = vpow.pop %v2281
        %v2283 = vsel %vm2152, %v2282, 0.0
        %2284 = vadd.xlane.f32.xlu0 %v2283
        %v2285 = vpop.xlane.xlu0 %2284
        %v2286 = vrcp.pop %v2285
        %v2287 = vmul.f32 %v2282, %v2286
        %v2288 = vpack.c.bf16 %v2287, %v2287
        %2289 = vrot.lane.b32.xlu0 %v2171, 120
        %v2290 = vpop.permute.xlu0 %2289
        %2291 = vrot.lane.b32.xlu0 %v2172, 120
        %v2292 = vpop.permute.xlu0 %2291
        %v2295 = vsel %vm2152, %v2288, 0
        %v2298 = vsel %vm1598, %v2292, 0
        %2300 = vmatprep.subr.bf16.mxu0 0
        %2301 = vmatpush1.bf16.msra.mxu0 %v2290
        %2302 = vmatprep.subr.bf16.mxu0 0
        %2303 = vmatpush1.bf16.msra.mxu0 %v2298
        %2304 = vmatprep.subr.bf16.mxu0 0
        %2305 = vmatpush1.bf16.msra.mxu0 0
        %2306 = vmatprep.subr.bf16.mxu0 0
        %2307 = vmatpush1.bf16.msra.mxu0 0
        %2308 = vmatprep.subr.bf16.mxu0 0
        %2309 = vmatpush1.bf16.msra.mxu0 0
        %2310 = vmatprep.subr.bf16.mxu0 0
        %2311 = vmatpush1.bf16.msra.mxu0 0
        %2312 = vmatprep.subr.bf16.mxu0 0
        %2313 = vmatpush1.bf16.msra.mxu0 0
        %2314 = vmatprep.subr.bf16.mxu0 0
        %2315 = vmatpush1.bf16.msra.mxu0 0
        %2316 = vmatprep.subr.bf16.mxu0 0
        %2317 = vmatpush1.bf16.msra.mxu0 0
        %2318 = vmatprep.subr.bf16.mxu0 0
        %2319 = vmatpush1.bf16.msra.mxu0 0
        %2320 = vmatprep.subr.bf16.mxu0 0
        %2321 = vmatpush1.bf16.msra.mxu0 0
        %2322 = vmatprep.subr.bf16.mxu0 0
        %2323 = vmatpush1.bf16.msra.mxu0 0
        %2324 = vmatprep.subr.bf16.mxu0 0
        %2325 = vmatpush1.bf16.msra.mxu0 0
        %2326 = vmatprep.subr.bf16.mxu0 0
        %2327 = vmatpush1.bf16.msra.mxu0 0
        %2328 = vmatprep.subr.bf16.mxu0 0
        %2329 = vmatpush1.bf16.msra.mxu0 0
        %2330 = vmatprep.subr.bf16.mxu0 0
        %2331 = vmatpush1.bf16.msra.mxu0 0
        %2332 = vmatprep.mubr.bf16.mxu0 0
        %2333 = vmatmul.mubr.bf16.gmra.mrb[0].mxu0 %v2295
        %v2334 = vpop.f32.mrb[0].mxu0
        %v2335 = vadd.f32 0.0, %v2334
        %v2336 = vpop.f32.mrb[0].mxu0
        %v2337 = vpop.f32.mrb[0].mxu0
        %v2338 = vpop.f32.mrb[0].mxu0
        %2339 = vdwg.mxu0
        %v2340 = vpack.c.bf16 %v2335, %v2335
        %v2342 = vsel %vm1379, %v2340, 0
        %2344 = vmatprep.subr.bf16.mxu0 0
        %2345 = vmatpush1.bf16.msra.mxu0 %v1600
        %2346 = vmatprep.subr.bf16.mxu0 0
        %2347 = vmatpush1.bf16.msra.mxu0 0
        %2348 = vmatprep.subr.bf16.mxu0 0
        %2349 = vmatpush1.bf16.msra.mxu0 0
        %2350 = vmatprep.subr.bf16.mxu0 0
        %2351 = vmatpush1.bf16.msra.mxu0 0
        %2352 = vmatprep.subr.bf16.mxu0 0
        %2353 = vmatpush1.bf16.msra.mxu0 0
        %2354 = vmatprep.subr.bf16.mxu0 0
        %2355 = vmatpush1.bf16.msra.mxu0 0
        %2356 = vmatprep.subr.bf16.mxu0 0
        %2357 = vmatpush1.bf16.msra.mxu0 0
        %2358 = vmatprep.subr.bf16.mxu0 0
        %2359 = vmatpush1.bf16.msra.mxu0 0
        %2360 = vmatprep.subr.bf16.mxu0 0
        %2361 = vmatpush1.bf16.msra.mxu0 0
        %2362 = vmatprep.subr.bf16.mxu0 0
        %2363 = vmatpush1.bf16.msra.mxu0 0
        %2364 = vmatprep.subr.bf16.mxu0 0
        %2365 = vmatpush1.bf16.msra.mxu0 0
        %2366 = vmatprep.subr.bf16.mxu0 0
        %2367 = vmatpush1.bf16.msra.mxu0 0
        %2368 = vmatprep.subr.bf16.mxu0 0
        %2369 = vmatpush1.bf16.msra.mxu0 0
        %2370 = vmatprep.subr.bf16.mxu0 0
        %2371 = vmatpush1.bf16.msra.mxu0 0
        %2372 = vmatprep.subr.bf16.mxu0 0
        %2373 = vmatpush1.bf16.msra.mxu0 0
        %2374 = vmatprep.subr.bf16.mxu0 0
        %2375 = vmatpush1.bf16.msra.mxu0 0
        %2376 = vmatprep.mubr.bf16.mxu0 0
        %2377 = vmatmul.mubr.bf16.gmra.mrb[0].mxu0 %v2342
        %v2378 = vpop.f32.mrb[0].mxu0
        %v2379 = vadd.f32 0.0, %v2378
        %v2380 = vpop.f32.mrb[0].mxu0
        %v2381 = vpop.f32.mrb[0].mxu0
        %v2382 = vpop.f32.mrb[0].mxu0
        %2383 = vdwg.mxu0
        %v2385 = vsel %vm1379, %v2220, 0
        %2387 = vmatprep.subr.bf16.mxu0 0
        %2388 = vmatpush1.bf16.msra.mxu0 %v1646
        %2389 = vmatprep.subr.bf16.mxu0 0
        %2390 = vmatpush1.bf16.msra.mxu0 0
        %2391 = vmatprep.subr.bf16.mxu0 0
        %2392 = vmatpush1.bf16.msra.mxu0 0
        %2393 = vmatprep.subr.bf16.mxu0 0
        %2394 = vmatpush1.bf16.msra.mxu0 0
        %2395 = vmatprep.subr.bf16.mxu0 0
        %2396 = vmatpush1.bf16.msra.mxu0 0
        %2397 = vmatprep.subr.bf16.mxu0 0
        %2398 = vmatpush1.bf16.msra.mxu0 0
        %2399 = vmatprep.subr.bf16.mxu0 0
        %2400 = vmatpush1.bf16.msra.mxu0 0
        %2401 = vmatprep.subr.bf16.mxu0 0
        %2402 = vmatpush1.bf16.msra.mxu0 0
        %2403 = vmatprep.subr.bf16.mxu0 0
        %2404 = vmatpush1.bf16.msra.mxu0 0
        %2405 = vmatprep.subr.bf16.mxu0 0
        %2406 = vmatpush1.bf16.msra.mxu0 0
        %2407 = vmatprep.subr.bf16.mxu0 0
        %2408 = vmatpush1.bf16.msra.mxu0 0
        %2409 = vmatprep.subr.bf16.mxu0 0
        %2410 = vmatpush1.bf16.msra.mxu0 0
        %2411 = vmatprep.subr.bf16.mxu0 0
        %2412 = vmatpush1.bf16.msra.mxu0 0
        %2413 = vmatprep.subr.bf16.mxu0 0
        %2414 = vmatpush1.bf16.msra.mxu0 0
        %2415 = vmatprep.subr.bf16.mxu0 0
        %2416 = vmatpush1.bf16.msra.mxu0 0
        %2417 = vmatprep.subr.bf16.mxu0 0
        %2418 = vmatpush1.bf16.msra.mxu0 0
        %2419 = vmatprep.mubr.bf16.mxu0 0
        %2420 = vmatmul.mubr.bf16.gmra.mrb[0].mxu0 %v2385
        %v2421 = vpop.f32.mrb[0].mxu0
        %v2422 = vadd.f32 %v2379, %v2421
        %v2423 = vpop.f32.mrb[0].mxu0
        %v2424 = vpop.f32.mrb[0].mxu0
        %v2425 = vpop.f32.mrb[0].mxu0
        %2426 = vdwg.mxu0
        %2427 = vrot.lane.b32.xlu0 %v2088, 112
        %v2428 = vpop.permute.xlu0 %2427
        %2429 = vrot.lane.b32.xlu0 %v2101, 112
        %v2430 = vpop.permute.xlu0 %2429
        %2431 = vrot.lane.b32.xlu0 %v2102, 112
        %v2432 = vpop.permute.xlu0 %2431
        %v2434 = vsel %vm1379, %v2428, 0
        %v2437 = vsel %vm1379, %v2430, 0
        %v2440 = vsel %vm1379, %v2432, 0
        %2442 = vmatprep.subr.bf16.mxu0 0
        %2443 = vmatpush1.bf16.xpose.msra.mxu0 %v2437
        %2444 = vmatprep.subr.bf16.mxu0 0
        %2445 = vmatpush1.bf16.xpose.msra.mxu0 %v2440
        %2446 = vmatprep.subr.bf16.mxu0 0
        %2447 = vmatpush1.bf16.xpose.msra.mxu0 0
        %2448 = vmatprep.subr.bf16.mxu0 0
        %2449 = vmatpush1.bf16.xpose.msra.mxu0 0
        %2450 = vmatprep.subr.bf16.mxu0 0
        %2451 = vmatpush1.bf16.xpose.msra.mxu0 0
        %2452 = vmatprep.subr.bf16.mxu0 0
        %2453 = vmatpush1.bf16.xpose.msra.mxu0 0
        %2454 = vmatprep.subr.bf16.mxu0 0
        %2455 = vmatpush1.bf16.xpose.msra.mxu0 0
        %2456 = vmatprep.subr.bf16.mxu0 0
        %2457 = vmatpush1.bf16.xpose.msra.mxu0 0
        %2458 = vmatprep.subr.bf16.mxu0 0
        %2459 = vmatpush1.bf16.xpose.msra.mxu0 0
        %2460 = vmatprep.subr.bf16.mxu0 0
        %2461 = vmatpush1.bf16.xpose.msra.mxu0 0
        %2462 = vmatprep.subr.bf16.mxu0 0
        %2463 = vmatpush1.bf16.xpose.msra.mxu0 0
        %2464 = vmatprep.subr.bf16.mxu0 0
        %2465 = vmatpush1.bf16.xpose.msra.mxu0 0
        %2466 = vmatprep.subr.bf16.mxu0 0
        %2467 = vmatpush1.bf16.xpose.msra.mxu0 0
        %2468 = vmatprep.subr.bf16.mxu0 0
        %2469 = vmatpush1.bf16.xpose.msra.mxu0 0
        %2470 = vmatprep.subr.bf16.mxu0 0
        %2471 = vmatpush1.bf16.xpose.msra.mxu0 0
        %2472 = vmatprep.subr.bf16.mxu0 0
        %2473 = vmatpush1.bf16.xpose.msra.mxu0 0
        %2474 = vmatprep.mubr.bf16.mxu0 0
        %2475 = vmatmul.mubr.bf16.gmra.mrb[0].mxu0 %v2434
        %v2476 = vpop.f32.mrb[0].mxu0
        %v2477 = vadd.f32 %v2093, %v2476
        %v2478 = vpop.f32.mrb[0].mxu0
        %v2479 = vpop.f32.mrb[0].mxu0
        %v2480 = vpop.f32.mrb[0].mxu0
        %2481 = vdwg.mxu0
        %v2482 = vsel %vm2152, %v2477, -inf
        %2483 = vmax.xlane.f32.xlu0 %v2482
        %v2484 = vpop.xlane.xlu0 %2483
        %v2485 = vsub.f32 %v2477, %v2484
        %v2486 = vmul.f32 %v2485, 1.442695
        %v2487 = vpow.pop %v2486
        %v2488 = vsel %vm2152, %v2487, 0.0
        %2489 = vadd.xlane.f32.xlu0 %v2488
        %v2490 = vpop.xlane.xlu0 %2489
        %v2491 = vrcp.pop %v2490
        %v2492 = vmul.f32 %v2487, %v2491
        %v2493 = vpack.c.bf16 %v2492, %v2492
        %2494 = vrot.lane.b32.xlu0 %v2171, 112
        %v2495 = vpop.permute.xlu0 %2494
        %2496 = vrot.lane.b32.xlu0 %v2172, 112
        %v2497 = vpop.permute.xlu0 %2496
        %v2500 = vsel %vm2152, %v2493, 0
        %v2503 = vsel %vm1598, %v2497, 0
        %2505 = vmatprep.subr.bf16.mxu0 0
        %2506 = vmatpush1.bf16.msra.mxu0 %v2495
        %2507 = vmatprep.subr.bf16.mxu0 0
        %2508 = vmatpush1.bf16.msra.mxu0 %v2503
        %2509 = vmatprep.subr.bf16.mxu0 0
        %2510 = vmatpush1.bf16.msra.mxu0 0
        %2511 = vmatprep.subr.bf16.mxu0 0
        %2512 = vmatpush1.bf16.msra.mxu0 0
        %2513 = vmatprep.subr.bf16.mxu0 0
        %2514 = vmatpush1.bf16.msra.mxu0 0
        %2515 = vmatprep.subr.bf16.mxu0 0
        %2516 = vmatpush1.bf16.msra.mxu0 0
        %2517 = vmatprep.subr.bf16.mxu0 0
        %2518 = vmatpush1.bf16.msra.mxu0 0
        %2519 = vmatprep.subr.bf16.mxu0 0
        %2520 = vmatpush1.bf16.msra.mxu0 0
        %2521 = vmatprep.subr.bf16.mxu0 0
        %2522 = vmatpush1.bf16.msra.mxu0 0
        %2523 = vmatprep.subr.bf16.mxu0 0
        %2524 = vmatpush1.bf16.msra.mxu0 0
        %2525 = vmatprep.subr.bf16.mxu0 0
        %2526 = vmatpush1.bf16.msra.mxu0 0
        %2527 = vmatprep.subr.bf16.mxu0 0
        %2528 = vmatpush1.bf16.msra.mxu0 0
        %2529 = vmatprep.subr.bf16.mxu0 0
        %2530 = vmatpush1.bf16.msra.mxu0 0
        %2531 = vmatprep.subr.bf16.mxu0 0
        %2532 = vmatpush1.bf16.msra.mxu0 0
        %2533 = vmatprep.subr.bf16.mxu0 0
        %2534 = vmatpush1.bf16.msra.mxu0 0
        %2535 = vmatprep.subr.bf16.mxu0 0
        %2536 = vmatpush1.bf16.msra.mxu0 0
        %2537 = vmatprep.mubr.bf16.mxu0 0
        %2538 = vmatmul.mubr.bf16.gmra.mrb[0].mxu0 %v2500
        %v2539 = vpop.f32.mrb[0].mxu0
        %v2540 = vadd.f32 0.0, %v2539
        %v2541 = vpop.f32.mrb[0].mxu0
        %v2542 = vpop.f32.mrb[0].mxu0
        %v2543 = vpop.f32.mrb[0].mxu0
        %2544 = vdwg.mxu0
        %v2545 = vpack.c.bf16 %v2540, %v2540
        %v2547 = vsel %vm1379, %v2545, 0
        %2549 = vmatprep.subr.bf16.mxu0 0
        %2550 = vmatpush1.bf16.msra.mxu0 %v1801
        %2551 = vmatprep.subr.bf16.mxu0 0
        %2552 = vmatpush1.bf16.msra.mxu0 0
        %2553 = vmatprep.subr.bf16.mxu0 0
        %2554 = vmatpush1.bf16.msra.mxu0 0
        %2555 = vmatprep.subr.bf16.mxu0 0
        %2556 = vmatpush1.bf16.msra.mxu0 0
        %2557 = vmatprep.subr.bf16.mxu0 0
        %2558 = vmatpush1.bf16.msra.mxu0 0
        %2559 = vmatprep.subr.bf16.mxu0 0
        %2560 = vmatpush1.bf16.msra.mxu0 0
        %2561 = vmatprep.subr.bf16.mxu0 0
        %2562 = vmatpush1.bf16.msra.mxu0 0
        %2563 = vmatprep.subr.bf16.mxu0 0
        %2564 = vmatpush1.bf16.msra.mxu0 0
        %2565 = vmatprep.subr.bf16.mxu0 0
        %2566 = vmatpush1.bf16.msra.mxu0 0
        %2567 = vmatprep.subr.bf16.mxu0 0
        %2568 = vmatpush1.bf16.msra.mxu0 0
        %2569 = vmatprep.subr.bf16.mxu0 0
        %2570 = vmatpush1.bf16.msra.mxu0 0
        %2571 = vmatprep.subr.bf16.mxu0 0
        %2572 = vmatpush1.bf16.msra.mxu0 0
        %2573 = vmatprep.subr.bf16.mxu0 0
        %2574 = vmatpush1.bf16.msra.mxu0 0
        %2575 = vmatprep.subr.bf16.mxu0 0
        %2576 = vmatpush1.bf16.msra.mxu0 0
        %2577 = vmatprep.subr.bf16.mxu0 0
        %2578 = vmatpush1.bf16.msra.mxu0 0
        %2579 = vmatprep.subr.bf16.mxu0 0
        %2580 = vmatpush1.bf16.msra.mxu0 0
        %2581 = vmatprep.mubr.bf16.mxu0 0
        %2582 = vmatmul.mubr.bf16.gmra.mrb[0].mxu0 %v2547
        %v2583 = vpop.f32.mrb[0].mxu0
        %v2584 = vadd.f32 0.0, %v2583
        %v2585 = vpop.f32.mrb[0].mxu0
        %v2586 = vpop.f32.mrb[0].mxu0
        %v2587 = vpop.f32.mrb[0].mxu0
        %2588 = vdwg.mxu0
        %v2589 = vadd.f32 %v2422, %v2584
        %2590 = vrot.lane.b32.xlu0 %v2088, 104
        %v2591 = vpop.permute.xlu0 %2590
        %2592 = vrot.lane.b32.xlu0 %v2101, 104
        %v2593 = vpop.permute.xlu0 %2592
        %2594 = vrot.lane.b32.xlu0 %v2102, 104
        %v2595 = vpop.permute.xlu0 %2594
        %v2597 = vsel %vm1379, %v2591, 0
        %v2600 = vsel %vm1379, %v2593, 0
        %v2603 = vsel %vm1379, %v2595, 0
        %2605 = vmatprep.subr.bf16.mxu0 0
        %2606 = vmatpush1.bf16.xpose.msra.mxu0 %v2600
        %2607 = vmatprep.subr.bf16.mxu0 0
        %2608 = vmatpush1.bf16.xpose.msra.mxu0 %v2603
        %2609 = vmatprep.subr.bf16.mxu0 0
        %2610 = vmatpush1.bf16.xpose.msra.mxu0 0
        %2611 = vmatprep.subr.bf16.mxu0 0
        %2612 = vmatpush1.bf16.xpose.msra.mxu0 0
        %2613 = vmatprep.subr.bf16.mxu0 0
        %2614 = vmatpush1.bf16.xpose.msra.mxu0 0
        %2615 = vmatprep.subr.bf16.mxu0 0
        %2616 = vmatpush1.bf16.xpose.msra.mxu0 0
        %2617 = vmatprep.subr.bf16.mxu0 0
        %2618 = vmatpush1.bf16.xpose.msra.mxu0 0
        %2619 = vmatprep.subr.bf16.mxu0 0
        %2620 = vmatpush1.bf16.xpose.msra.mxu0 0
        %2621 = vmatprep.subr.bf16.mxu0 0
        %2622 = vmatpush1.bf16.xpose.msra.mxu0 0
        %2623 = vmatprep.subr.bf16.mxu0 0
        %2624 = vmatpush1.bf16.xpose.msra.mxu0 0
        %2625 = vmatprep.subr.bf16.mxu0 0
        %2626 = vmatpush1.bf16.xpose.msra.mxu0 0
        %2627 = vmatprep.subr.bf16.mxu0 0
        %2628 = vmatpush1.bf16.xpose.msra.mxu0 0
        %2629 = vmatprep.subr.bf16.mxu0 0
        %2630 = vmatpush1.bf16.xpose.msra.mxu0 0
        %2631 = vmatprep.subr.bf16.mxu0 0
        %2632 = vmatpush1.bf16.xpose.msra.mxu0 0
        %2633 = vmatprep.subr.bf16.mxu0 0
        %2634 = vmatpush1.bf16.xpose.msra.mxu0 0
        %2635 = vmatprep.subr.bf16.mxu0 0
        %2636 = vmatpush1.bf16.xpose.msra.mxu0 0
        %2637 = vmatprep.mubr.bf16.mxu0 0
        %2638 = vmatmul.mubr.bf16.gmra.mrb[0].mxu0 %v2597
        %v2639 = vpop.f32.mrb[0].mxu0
        %v2640 = vadd.f32 %v2093, %v2639
        %v2641 = vpop.f32.mrb[0].mxu0
        %v2642 = vpop.f32.mrb[0].mxu0
        %v2643 = vpop.f32.mrb[0].mxu0
        %2644 = vdwg.mxu0
        %v2645 = vsel %vm2152, %v2640, -inf
        %2646 = vmax.xlane.f32.xlu0 %v2645
        %v2647 = vpop.xlane.xlu0 %2646
        %v2648 = vsub.f32 %v2640, %v2647
        %v2649 = vmul.f32 %v2648, 1.442695
        %v2650 = vpow.pop %v2649
        %v2651 = vsel %vm2152, %v2650, 0.0
        %2652 = vadd.xlane.f32.xlu0 %v2651
        %v2653 = vpop.xlane.xlu0 %2652
        %v2654 = vrcp.pop %v2653
        %v2655 = vmul.f32 %v2650, %v2654
        %v2656 = vpack.c.bf16 %v2655, %v2655
        %2657 = vrot.lane.b32.xlu0 %v2171, 104
        %v2658 = vpop.permute.xlu0 %2657
        %2659 = vrot.lane.b32.xlu0 %v2172, 104
        %v2660 = vpop.permute.xlu0 %2659
        %v2663 = vsel %vm2152, %v2656, 0
        %v2666 = vsel %vm1598, %v2660, 0
        %2668 = vmatprep.subr.bf16.mxu0 0
        %2669 = vmatpush1.bf16.msra.mxu0 %v2658
        %2670 = vmatprep.subr.bf16.mxu0 0
        %2671 = vmatpush1.bf16.msra.mxu0 %v2666
        %2672 = vmatprep.subr.bf16.mxu0 0
        %2673 = vmatpush1.bf16.msra.mxu0 0
        %2674 = vmatprep.subr.bf16.mxu0 0
        %2675 = vmatpush1.bf16.msra.mxu0 0
        %2676 = vmatprep.subr.bf16.mxu0 0
        %2677 = vmatpush1.bf16.msra.mxu0 0
        %2678 = vmatprep.subr.bf16.mxu0 0
        %2679 = vmatpush1.bf16.msra.mxu0 0
        %2680 = vmatprep.subr.bf16.mxu0 0
        %2681 = vmatpush1.bf16.msra.mxu0 0
        %2682 = vmatprep.subr.bf16.mxu0 0
        %2683 = vmatpush1.bf16.msra.mxu0 0
        %2684 = vmatprep.subr.bf16.mxu0 0
        %2685 = vmatpush1.bf16.msra.mxu0 0
        %2686 = vmatprep.subr.bf16.mxu0 0
        %2687 = vmatpush1.bf16.msra.mxu0 0
        %2688 = vmatprep.subr.bf16.mxu0 0
        %2689 = vmatpush1.bf16.msra.mxu0 0
        %2690 = vmatprep.subr.bf16.mxu0 0
        %2691 = vmatpush1.bf16.msra.mxu0 0
        %2692 = vmatprep.subr.bf16.mxu0 0
        %2693 = vmatpush1.bf16.msra.mxu0 0
        %2694 = vmatprep.subr.bf16.mxu0 0
        %2695 = vmatpush1.bf16.msra.mxu0 0
        %2696 = vmatprep.subr.bf16.mxu0 0
        %2697 = vmatpush1.bf16.msra.mxu0 0
        %2698 = vmatprep.subr.bf16.mxu0 0
        %2699 = vmatpush1.bf16.msra.mxu0 0
        %2700 = vmatprep.mubr.bf16.mxu0 0
        %2701 = vmatmul.mubr.bf16.gmra.mrb[0].mxu0 %v2663
        %v2702 = vpop.f32.mrb[0].mxu0
        %v2703 = vadd.f32 0.0, %v2702
        %v2704 = vpop.f32.mrb[0].mxu0
        %v2705 = vpop.f32.mrb[0].mxu0
        %v2706 = vpop.f32.mrb[0].mxu0
        %2707 = vdwg.mxu0
        %v2708 = vpack.c.bf16 %v2703, %v2703
        %v2710 = vsel %vm1379, %v2708, 0
        %2712 = vmatprep.subr.bf16.mxu0 0
        %2713 = vmatpush1.bf16.msra.mxu0 %v1957
        %2714 = vmatprep.subr.bf16.mxu0 0
        %2715 = vmatpush1.bf16.msra.mxu0 0
        %2716 = vmatprep.subr.bf16.mxu0 0
        %2717 = vmatpush1.bf16.msra.mxu0 0
        %2718 = vmatprep.subr.bf16.mxu0 0
        %2719 = vmatpush1.bf16.msra.mxu0 0
        %2720 = vmatprep.subr.bf16.mxu0 0
        %2721 = vmatpush1.bf16.msra.mxu0 0
        %2722 = vmatprep.subr.bf16.mxu0 0
        %2723 = vmatpush1.bf16.msra.mxu0 0
        %2724 = vmatprep.subr.bf16.mxu0 0
        %2725 = vmatpush1.bf16.msra.mxu0 0
        %2726 = vmatprep.subr.bf16.mxu0 0
        %2727 = vmatpush1.bf16.msra.mxu0 0
        %2728 = vmatprep.subr.bf16.mxu0 0
        %2729 = vmatpush1.bf16.msra.mxu0 0
        %2730 = vmatprep.subr.bf16.mxu0 0
        %2731 = vmatpush1.bf16.msra.mxu0 0
        %2732 = vmatprep.subr.bf16.mxu0 0
        %2733 = vmatpush1.bf16.msra.mxu0 0
        %2734 = vmatprep.subr.bf16.mxu0 0
        %2735 = vmatpush1.bf16.msra.mxu0 0
        %2736 = vmatprep.subr.bf16.mxu0 0
        %2737 = vmatpush1.bf16.msra.mxu0 0
        %2738 = vmatprep.subr.bf16.mxu0 0
        %2739 = vmatpush1.bf16.msra.mxu0 0
        %2740 = vmatprep.subr.bf16.mxu0 0
        %2741 = vmatpush1.bf16.msra.mxu0 0
        %2742 = vmatprep.subr.bf16.mxu0 0
        %2743 = vmatpush1.bf16.msra.mxu0 0
        %2744 = vmatprep.mubr.bf16.mxu0 0
        %2745 = vmatmul.mubr.bf16.gmra.mrb[0].mxu0 %v2710
        %v2746 = vpop.f32.mrb[0].mxu0
        %v2747 = vadd.f32 0.0, %v2746
        %v2748 = vpop.f32.mrb[0].mxu0
        %v2749 = vpop.f32.mrb[0].mxu0
        %v2750 = vpop.f32.mrb[0].mxu0
        %2751 = vdwg.mxu0
        %v2752 = vadd.f32 %v2589, %v2747
        %v2753 = vadd.f32 %v2752, %v2004
        %v2754 = vadd.f32 %v2007, %v2753
        %v2755 = vld [vmem:[#allocation21] sm:$0x1]
        %v2756 = vld [vmem:[#allocation23] sm:$0x1]
        %v2757 = vsel %vm1284, %v2754, 0.0
        %2758 = vadd.xlane.f32.xlu0 %v2757
        %v2759 = vpop.xlane.xlu0 %2758
        %v2760 = vmul.f32 %v2759, %v1288
        %v2761 = vsub.f32 %v2754, %v2760
        %v2762 = vmul.f32 %v2761, %v2761
        %v2763 = vsel %vm1284, %v2762, 0.0
        %2764 = vadd.xlane.f32.xlu0 %v2763
        %v2765 = vpop.xlane.xlu0 %2764
        %v2766 = vmul.f32 %v2765, 0.032258064
        %v2767 = vadd.f32 %v2766, 1e-06
        %v2768 = vrsqrt.pop %v2767
        %v2769 = vmul.f32 %v2761, %v2768
        %v2771 = vlaneseq
        %v2772 = vshrl.u32 %v2771, 7
        %v2773 = vsub.s32 0, %v2772
        %v2774 = vrot.slane %v2755, %v2773
        %v2776 = vmul.f32 %v2774, %v2769
        %v2778 = vlaneseq
        %v2779 = vshrl.u32 %v2778, 7
        %v2780 = vsub.s32 0, %v2779
        %v2781 = vrot.slane %v2756, %v2780
        %v2783 = vadd.f32 %v2776, %v2781
        %v2784 = vpack.c.bf16 %v2783, %v2783
        %v2785 = vld [vmem:[#allocation33] sm:$0xf]
        %v2786 = vld [vmem:[#allocation33 + $0x4] sm:$0xf]
        %v2787 = vld [vmem:[#allocation33 + $0x8] sm:$0xf]
        %v2788 = vld [vmem:[#allocation33 + $0xc] sm:$0xf]
        %v2789 = vld [vmem:[#allocation35] sm:$0x1]
        %v2791 = vlaneseq
        %v2792 = vshrl.u32 %v2791, 7
        %v2793 = vsub.s32 0, %v2792
        %v2794 = vrot.slane %v2789, %v2793
        %v2800 = vunpack.c.l.b16 %v2785
        %v2801 = vunpack.c.l.b16 %v2786
        %v2802 = vunpack.c.l.b16 %v2787
        %v2803 = vunpack.c.l.b16 %v2788
        %v2804 = vpack.c.b16 %v2801, %v2800
        %v2805 = vpack.c.b16 %v2803, %v2802
        %v2809 = vsel %vm1284, %v2784, 0
        %2811 = vmatprep.subr.bf16.mxu0 0
        %2812 = vmatpush1.bf16.msra.mxu0 %v2804
        %2813 = vmatprep.subr.bf16.mxu0 0
        %2814 = vmatpush1.bf16.msra.mxu0 %v2805
        %2815 = vmatprep.subr.bf16.mxu0 0
        %2816 = vmatpush1.bf16.msra.mxu0 0
        %2817 = vmatprep.subr.bf16.mxu0 0
        %2818 = vmatpush1.bf16.msra.mxu0 0
        %2819 = vmatprep.subr.bf16.mxu0 0
        %2820 = vmatpush1.bf16.msra.mxu0 0
        %2821 = vmatprep.subr.bf16.mxu0 0
        %2822 = vmatpush1.bf16.msra.mxu0 0
        %2823 = vmatprep.subr.bf16.mxu0 0
        %2824 = vmatpush1.bf16.msra.mxu0 0
        %2825 = vmatprep.subr.bf16.mxu0 0
        %2826 = vmatpush1.bf16.msra.mxu0 0
        %2827 = vmatprep.subr.bf16.mxu0 0
        %2828 = vmatpush1.bf16.msra.mxu0 0
        %2829 = vmatprep.subr.bf16.mxu0 0
        %2830 = vmatpush1.bf16.msra.mxu0 0
        %2831 = vmatprep.subr.bf16.mxu0 0
        %2832 = vmatpush1.bf16.msra.mxu0 0
        %2833 = vmatprep.subr.bf16.mxu0 0
        %2834 = vmatpush1.bf16.msra.mxu0 0
        %2835 = vmatprep.subr.bf16.mxu0 0
        %2836 = vmatpush1.bf16.msra.mxu0 0
        %2837 = vmatprep.subr.bf16.mxu0 0
        %2838 = vmatpush1.bf16.msra.mxu0 0
        %2839 = vmatprep.subr.bf16.mxu0 0
        %2840 = vmatpush1.bf16.msra.mxu0 0
        %2841 = vmatprep.subr.bf16.mxu0 0
        %2842 = vmatpush1.bf16.msra.mxu0 0
        %2843 = vmatprep.mubr.bf16.mxu0 0
        %2844 = vmatmul.mubr.bf16.gmra.mrb[0].mxu0 %v2809
        %v2845 = vpop.f32.mrb[0].mxu0
        %v2846 = vadd.f32 %v2794, %v2845
        %v2847 = vpop.f32.mrb[0].mxu0
        %v2848 = vpop.f32.mrb[0].mxu0
        %v2849 = vpop.f32.mrb[0].mxu0
        %2850 = vdwg.mxu0
        %v2851 = vmax.f32 %v2846, 0.0
        %v2852 = vpack.c.bf16 %v2851, %v2851
        %v2853 = vld [vmem:[#allocation36] sm:$0xf]
        %v2854 = vld [vmem:[#allocation36 + $0x4] sm:$0xf]
        %v2855 = vld [vmem:[#allocation36 + $0x8] sm:$0xf]
        %v2856 = vld [vmem:[#allocation36 + $0xc] sm:$0xf]
        %v2857 = vld [vmem:[#allocation36 + $0x10] sm:$0xf]
        %v2858 = vld [vmem:[#allocation36 + $0x14] sm:$0xf]
        %v2859 = vld [vmem:[#allocation36 + $0x18] sm:$0xf]
        %v2860 = vld [vmem:[#allocation36 + $0x1c] sm:$0xf]
        %v2861 = vld [vmem:[#allocation38] sm:$0x1]
        %v2863 = vlaneseq
        %v2864 = vshrl.u32 %v2863, 7
        %v2865 = vsub.s32 0, %v2864
        %v2866 = vrot.slane %v2861, %v2865
        %v2876 = vunpack.c.l.b16 %v2853
        %v2877 = vunpack.c.l.b16 %v2854
        %v2878 = vunpack.c.l.b16 %v2855
        %v2879 = vunpack.c.l.b16 %v2856
        %v2880 = vunpack.c.l.b16 %v2857
        %v2881 = vunpack.c.l.b16 %v2858
        %v2882 = vunpack.c.l.b16 %v2859
        %v2883 = vunpack.c.l.b16 %v2860
        %v2884 = vpack.c.b16 %v2877, %v2876
        %v2885 = vpack.c.b16 %v2879, %v2878
        %v2886 = vpack.c.b16 %v2881, %v2880
        %v2887 = vpack.c.b16 %v2883, %v2882
        %vm2892 = vcmask 523264
        %v2894 = vsel %vm2892, %v2852, 0
        %2896 = vmatprep.subr.bf16.mxu0 0
        %2897 = vmatpush1.bf16.msra.mxu0 %v2884
        %2898 = vmatprep.subr.bf16.mxu0 0
        %2899 = vmatpush1.bf16.msra.mxu0 %v2885
        %2900 = vmatprep.subr.bf16.mxu0 0
        %2901 = vmatpush1.bf16.msra.mxu0 %v2886
        %2902 = vmatprep.subr.bf16.mxu0 0
        %2903 = vmatpush1.bf16.msra.mxu0 %v2887
        %2904 = vmatprep.subr.bf16.mxu0 0
        %2905 = vmatpush1.bf16.msra.mxu0 0
        %2906 = vmatprep.subr.bf16.mxu0 0
        %2907 = vmatpush1.bf16.msra.mxu0 0
        %2908 = vmatprep.subr.bf16.mxu0 0
        %2909 = vmatpush1.bf16.msra.mxu0 0
        %2910 = vmatprep.subr.bf16.mxu0 0
        %2911 = vmatpush1.bf16.msra.mxu0 0
        %2912 = vmatprep.subr.bf16.mxu0 0
        %2913 = vmatpush1.bf16.msra.mxu0 0
        %2914 = vmatprep.subr.bf16.mxu0 0
        %2915 = vmatpush1.bf16.msra.mxu0 0
        %2916 = vmatprep.subr.bf16.mxu0 0
        %2917 = vmatpush1.bf16.msra.mxu0 0
        %2918 = vmatprep.subr.bf16.mxu0 0
        %2919 = vmatpush1.bf16.msra.mxu0 0
        %2920 = vmatprep.subr.bf16.mxu0 0
        %2921 = vmatpush1.bf16.msra.mxu0 0
        %2922 = vmatprep.subr.bf16.mxu0 0
        %2923 = vmatpush1.bf16.msra.mxu0 0
        %2924 = vmatprep.subr.bf16.mxu0 0
        %2925 = vmatpush1.bf16.msra.mxu0 0
        %2926 = vmatprep.subr.bf16.mxu0 0
        %2927 = vmatpush1.bf16.msra.mxu0 0
        %2928 = vmatprep.mubr.bf16.mxu0 0
        %2929 = vmatmul.mubr.bf16.gmra.mrb[0].mxu0 %v2894
        %v2930 = vpop.f32.mrb[0].mxu0
        %v2931 = vadd.f32 %v2866, %v2930
        %v2932 = vpop.f32.mrb[0].mxu0
        %v2933 = vpop.f32.mrb[0].mxu0
        %v2934 = vpop.f32.mrb[0].mxu0
        %2935 = vdwg.mxu0
        %v2936 = vadd.f32 %v2754, %v2931
        %2937 = vst.msk [vmem:[%s1048] sm:$0xff] %vm1284, %v2936
        %s2938 = sand.u32 %s544, 1
        %s2939 = scalar_lea.sflag [#allocation8], %s2938
        %s2940 = sand.u32 %s544, 1
        %s2941 = smul.addr %s2940, 8
        %s2942 = scalar_lea.vmem [#allocation39], %s2941
        // Predicated region
        $region193: #{tpu_custom_call.1} parent=103 // pred_check
          %p2943 = pneg %p554
        $region194: #{tpu_custom_call.1} parent=103 // pred_check_branch
          %2945 = sbr.rel (%p2943) target = $region196
        $region195: #{tpu_custom_call.1} parent=103 // pred_region
          %s2947 = ssub.s32 128, 128
          %2948 = vsyncadd %s2939, %s2947
          %s2949 = smul.addr %s56, 2
          %s2950 = sadd.s32 %s57, %s2949
          %s2951 = smul.addr %s2950, 128
          %s2952 = scalar_lea.hbm %s21, %s2951
          %s2954 = sshll.u32 %s2942, 4
          %s2955 = int_to_ptr.vmem [resolvable:$true] %s2954
          %2957 = dma.vmem_to_hbm [thread:$0]  %s2955, 128, %s2952, %s2939
        $region196: #{tpu_custom_call.1} parent=103 // pred_fallthru
          _
      $region104: #{tpu_custom_call.1} parent=5 // pred_fallthru
        _
      %p2958 = scmp.le.s32.totalorder 2, %s47
      // Predicated region
      $region197: #{tpu_custom_call.1} parent=5 // pred_check
        %p2959 = pneg %p2958
      $region198: #{tpu_custom_call.1} parent=5 // pred_check_branch
        %2961 = sbr.rel (%p2959) target = $region200
      $region199: #{tpu_custom_call.1} parent=5 // pred_region
        %s2962 = ssub.s32 %s47, 2
        // Predicated region
        $region201: #{tpu_custom_call.1} parent=199 // pred_check
          %p2963 = pneg %p560
        $region202: #{tpu_custom_call.1} parent=199 // pred_check_branch
          %2965 = sbr.rel (%p2963) target = $region204
        $region203: #{tpu_custom_call.1} parent=199 // pred_region
          %s2966 = sand.u32 %s545, 1
          %s2967 = scalar_lea.sflag [#allocation8], %s2966
          %s2968 = sand.u32 %s545, 1
          %s2969 = smul.addr %s2968, 8
          %s2970 = scalar_lea.vmem [#allocation39], %s2969
          %2971 = dma.done %s2967, 128
        $region204: #{tpu_custom_call.1} parent=199 // pred_fallthru
          _
      $region200: #{tpu_custom_call.1} parent=5 // pred_fallthru
        _
    $region6: #{tpu_custom_call.1} parent=1 // loop_footer
      %s51 = sadd.s32 1, %s47
    $region7: #{tpu_custom_call.1} parent=1 // loop_footer_branch
      %46 = sbr.rel target = $region3
    $region8: #{tpu_custom_call.1} parent=1 // loop_exit
      _
    %2972 = vsyncpa [#allocation7], 1
    %s2973 = scalar_lea.sflag [#allocation7], 1
    %2974 = vsyncpa %s2973, 1
    %2975 = vsyncpa [#allocation10], 1
    %s2976 = scalar_lea.sflag [#allocation10], 1
    %2977 = vsyncpa %s2976, 1
    %2978 = vsyncpa [#allocation13], 1
    %s2979 = scalar_lea.sflag [#allocation13], 1
    %2980 = vsyncpa %s2979, 1
    %2981 = vsyncpa [#allocation16], 1
    %2982 = vsyncpa [#allocation19], 1
    %2983 = vsyncpa [#allocation22], 1
    %2984 = vsyncpa [#allocation25], 1
    %2985 = vsyncpa [#allocation28], 1
    %2986 = vsyncpa [#allocation31], 1
    %2987 = vsyncpa [#allocation34], 1
    %2988 = vsyncpa [#allocation37], 1
    %2989 = vsyncpa [#allocation8], 1
    %s2990 = scalar_lea.sflag [#allocation8], 1
    %2991 = vsyncpa %s2990, 1

</llo_original>
